<compile_context>
chip_gen: v6e
topology: v6e:2x2x1
jax: 0.10.0
libtpu: 0.0.40
codegen_flags: <defaults>
</compile_context>

<pallas_src>
import functools

import jax
import jax.numpy as jnp
from jax import lax
from jax.experimental import pallas as pl
from jax.experimental.pallas import tpu as pltpu
import numpy as np

INPUT_SIZE = 3
SUBLANE = 8
LANE = 128


def _round_up(x, m):
  return (x + m - 1) // m * m


def lstm_graves_kernel(x_ref, h0_ref, c0_ref, wihx_ref, whh_ref, wprev_ref,
                       b_ref, wfc_ref, bfc_ref,
                       yhat_ref, hout_ref, cout_ref,
                       xproj_ref, cat_ref):
  """Fused 3-layer Graves LSTM forward.

  x_ref    : (T*Bp, 3)            time-major flattened input
  h0_ref   : (Bp, L*H)            initial hidden, layer l at lanes [l*H:(l+1)*H]
  c0_ref   : (Bp, L*H)            initial cell,   same layout
  wihx_ref : (3, L*4H)            x -> gates weights for all layers (stacked cols)
  whh_ref  : (L*H, L*4H)          block-diagonal recurrent weights
  wprev_ref: (L-1, H, 4H)         out_{l-1} -> gates_l weights (layers 1..L-1)
  b_ref    : (1, L*4H)            b_ih + b_hh, all layers
  wfc_ref  : (L*H, OUT_PAD)       fc_out weight (zero-padded to 128 lanes)
  bfc_ref  : (1, OUT_PAD)
  yhat_ref : (T*Bp, OUT_PAD)      output (lane-dense)
  hout_ref : (Bp, L*H)            final hidden
  cout_ref : (Bp, L*H)            final cell
  xproj_ref: (T*Bp, L*4H)         VMEM scratch: hoisted x projections
  cat_ref  : (T*Bp, L*H)          VMEM scratch: per-step cat(h_0..h_{L-1})
  """
  TB = x_ref.shape[0]
  Bp, LH = h0_ref.shape
  L = wprev_ref.shape[0] + 1
  H = LH // L
  G4 = 4 * H
  T = TB // Bp

  # ---- Hoisted input projection: one MXU matmul for every timestep & layer. ----
  xproj_ref[...] = (jnp.dot(x_ref[...], wihx_ref[...],
                            preferred_element_type=jnp.float32) + b_ref[...])

  def step(t, carry):
    h_cat, cs = carry                              # (Bp, L*H), tuple of (Bp, H)
    row = pl.multiple_of(t * Bp, Bp)               # Bp is a multiple of 8 -> aligned

    # One fused recurrent matmul for all L layers (block-diagonal W_hh).
    base = xproj_ref[pl.ds(row, Bp), :] + jnp.dot(
        h_cat, whh_ref[...], preferred_element_type=jnp.float32)   # (Bp, L*4H)

    new_h = []
    new_c = []
    prev_h = None
    for l in range(L):
      g = base[:, l * G4:(l + 1) * G4]             # (Bp, 4H): lane-tile aligned slice
      if l > 0:
        # within-timestep skip connection: out_{l-1} -> gates of layer l
        g = g + jnp.dot(prev_h, wprev_ref[l - 1],
                        preferred_element_type=jnp.float32)
      sig = jax.nn.sigmoid(g)                      # whole-vreg EUP activation
      tnh = jnp.tanh(g)                            # whole-vreg EUP activation
      i_g = sig[:, 0:H]
      f_g = sig[:, H:2 * H]
      g_g = tnh[:, 2 * H:3 * H]
      o_g = sig[:, 3 * H:4 * H]
      c_new = f_g * cs[l] + i_g * g_g
      h_new = o_g * jnp.tanh(c_new)
      new_h.append(h_new)
      new_c.append(c_new)
      prev_h = h_new

    h_cat_new = jnp.concatenate(new_h, axis=1)     # (Bp, L*H) -- also next-step carry
    cat_ref[pl.ds(row, Bp), :] = h_cat_new         # stash for deferred fc_out
    return h_cat_new, tuple(new_c)

  c_init = tuple(c0_ref[:, l * H:(l + 1) * H] for l in range(L))
  h_fin, c_fin = lax.fori_loop(0, T, step, (h0_ref[...], c_init), unroll=True)

  hout_ref[...] = h_fin
  cout_ref[...] = jnp.concatenate(c_fin, axis=1)

  # ---- Deferred fc_out: one big matmul, lane-dense (128-wide) store. ----
  yhat_ref[...] = (jnp.dot(cat_ref[...], wfc_ref[...],
                           preferred_element_type=jnp.float32) + bfc_ref[...])


def make_params(key, hidden_size=32, n_mdn=20, num_layers=3):
  """Deterministic parameter init matching the PyTorch module's shapes.

  Returns torch-style per-layer params (for the reference) and the packed
  tensors fed to the kernel (split x/out_prev weight slabs, block-diag W_hh,
  folded biases, 128-padded fc_out).
  """
  assert num_layers >= 2
  H = hidden_size
  L = num_layers
  out_size = n_mdn * 6 + 1
  out_pad = _round_up(out_size, LANE)
  k_lstm = 1.0 / np.sqrt(H)

  per_layer = []
  keys = jax.random.split(key, 4 * L + 2)
  for l in range(L):
    in_l = INPUT_SIZE if l == 0 else INPUT_SIZE + H
    k0, k1, k2, k3 = keys[4 * l:4 * l + 4]
    w_ih = jax.random.uniform(k0, (4 * H, in_l), jnp.float32, -k_lstm, k_lstm)
    w_hh = jax.random.uniform(k1, (4 * H, H), jnp.float32, -k_lstm, k_lstm)
    b_ih = jax.random.uniform(k2, (4 * H,), jnp.float32, -k_lstm, k_lstm)
    b_hh = jax.random.uniform(k3, (4 * H,), jnp.float32, -k_lstm, k_lstm)
    per_layer.append((w_ih, w_hh, b_ih, b_hh))

  k_fc = 1.0 / np.sqrt(L * H)
  w_fc = jax.random.uniform(keys[-2], (out_size, L * H), jnp.float32, -k_fc, k_fc)
  b_fc = jax.random.uniform(keys[-1], (out_size,), jnp.float32, -k_fc, k_fc)

  # ---- pack for the kernel ----
  # x -> gates, all layers, stacked along columns: (3, L*4H)
  wihx = jnp.concatenate([w_ih[:, :INPUT_SIZE].T for (w_ih, _, _, _) in per_layer],
                         axis=1)
  # out_{l-1} -> gates_l, layers 1..L-1: (L-1, H, 4H)
  wprev = jnp.stack([per_layer[l][0][:, INPUT_SIZE:].T for l in range(1, L)], axis=0)
  # block-diagonal recurrent weights: (L*H, L*4H)
  whh_bd = np.zeros((L * H, L * 4 * H), np.float32)
  for l in range(L):
    whh_bd[l * H:(l + 1) * H, l * 4 * H:(l + 1) * 4 * H] = np.asarray(per_layer[l][1]).T
  whh_bd = jnp.asarray(whh_bd)
  # folded biases: (1, L*4H)
  b_all = jnp.concatenate([(b_ih + b_hh) for (_, _, b_ih, b_hh) in per_layer])[None, :]
  # fc_out, lane-padded to 128 output columns
  wfc = jnp.zeros((L * H, out_pad), jnp.float32).at[:, :out_size].set(w_fc.T)
  bfc = jnp.zeros((1, out_pad), jnp.float32).at[0, :out_size].set(b_fc)

  kernel_params = dict(wihx=wihx, whh=whh_bd, wprev=wprev, b=b_all, wfc=wfc, bfc=bfc)
  return per_layer, (w_fc, b_fc), kernel_params


@functools.partial(jax.jit, static_argnames=("out_size",))
def lstm_graves_forward(x, h0, c0, wihx, whh, wprev, b, wfc, bfc, *, out_size):
  """x: (B, T, 3) batch_first, h0/c0: (L, B, H). Returns (yhat (B,T,OUT), (h, c))."""
  B, T, _ = x.shape
  L, _, H = h0.shape
  out_pad = wfc.shape[1]

  # Pad batch to a sublane multiple so all per-step accesses are 8-row aligned.
  Bp = _round_up(max(B, SUBLANE), SUBLANE)
  pad_b = Bp - B
  x_p = jnp.pad(x, ((0, pad_b), (0, 0), (0, 0)))
  h0_p = jnp.pad(h0, ((0, 0), (0, pad_b), (0, 0)))
  c0_p = jnp.pad(c0, ((0, 0), (0, pad_b), (0, 0)))

  # time-major flattening: row t*Bp + b holds x[b, t]
  x_tm = jnp.transpose(x_p, (1, 0, 2)).reshape(T * Bp, INPUT_SIZE)
  # hidden/cell packed as (Bp, L*H), layer l at lanes [l*H:(l+1)*H]
  h0_cat = jnp.transpose(h0_p, (1, 0, 2)).reshape(Bp, L * H)
  c0_cat = jnp.transpose(c0_p, (1, 0, 2)).reshape(Bp, L * H)

  yhat_flat, hout_cat, cout_cat = pl.pallas_call(
      lstm_graves_kernel,
      out_shape=(
          jax.ShapeDtypeStruct((T * Bp, out_pad), jnp.float32),
          jax.ShapeDtypeStruct((Bp, L * H), jnp.float32),
          jax.ShapeDtypeStruct((Bp, L * H), jnp.float32),
      ),
      in_specs=[pl.BlockSpec(memory_space=pltpu.MemorySpace.VMEM)] * 9,
      out_specs=(
          pl.BlockSpec(memory_space=pltpu.MemorySpace.VMEM),
          pl.BlockSpec(memory_space=pltpu.MemorySpace.VMEM),
          pl.BlockSpec(memory_space=pltpu.MemorySpace.VMEM),
      ),
      scratch_shapes=[
          pltpu.VMEM((T * Bp, whh.shape[1]), jnp.float32),  # hoisted x projections
          pltpu.VMEM((T * Bp, L * H), jnp.float32),         # per-step cat(h)
      ],
      compiler_params=pltpu.CompilerParams(vmem_limit_bytes=32 * 1024 * 1024),
  )(x_tm, h0_cat, c0_cat, wihx, whh, wprev, b, wfc, bfc)

  yhat = jnp.transpose(yhat_flat.reshape(T, Bp, out_pad), (1, 0, 2))[:B, :, :out_size]
  h_out = jnp.transpose(hout_cat.reshape(Bp, L, H), (1, 0, 2))[:, :B, :]
  c_out = jnp.transpose(cout_cat.reshape(Bp, L, H), (1, 0, 2))[:, :B, :]
  return yhat, (h_out, c_out)


def reference_forward(x, h0, c0, per_layer, fc):
  """Pure-JAX replica of the PyTorch forward (per-layer, un-packed weights)."""
  L = len(per_layer)
  H = h0.shape[2]
  w_fc, b_fc = fc

  def run_layer(layer_in, h_init, c_init, params):
    w_ih, w_hh, b_ih, b_hh = params

    def step(carry, x_t):
      h, c = carry
      gates = x_t @ w_ih.T + b_ih + h @ w_hh.T + b_hh
      i_g = jax.nn.sigmoid(gates[:, 0:H])
      f_g = jax.nn.sigmoid(gates[:, H:2 * H])
      g_g = jnp.tanh(gates[:, 2 * H:3 * H])
      o_g = jax.nn.sigmoid(gates[:, 3 * H:4 * H])
      c_new = f_g * c + i_g * g_g
      h_new = o_g * jnp.tanh(c_new)
      return (h_new, c_new), h_new

    (h_f, c_f), outs = lax.scan(step, (h_init, c_init),
                                jnp.transpose(layer_in, (1, 0, 2)))
    return jnp.transpose(outs, (1, 0, 2)), h_f, c_f

  out, h_f, c_f = run_layer(x, h0[0], c0[0], per_layer[0])
  hidden_out = [out]
  hs, cs = [h_f], [c_f]
  for i in range(1, L):
    inpt = jnp.concatenate([x, out], axis=2)
    out, h_f, c_f = run_layer(inpt, h0[i], c0[i], per_layer[i])
    hidden_out.append(out)
    hs.append(h_f)
    cs.append(c_f)
  cat = jnp.concatenate(hidden_out, axis=2)
  yhat = cat @ w_fc.T + b_fc
  return yhat, (jnp.stack(hs, axis=0), jnp.stack(cs, axis=0))


if __name__ == "__main__":
  B, T = 2, 8
  HIDDEN, N_MDN, NUM_LAYERS = 32, 20, 3
  OUT = N_MDN * 6 + 1

  key = jax.random.PRNGKey(0)
  k_param, k_x = jax.random.split(key)
  per_layer, fc, kp = make_params(k_param, HIDDEN, N_MDN, NUM_LAYERS)

  x = jax.random.normal(k_x, (B, T, INPUT_SIZE), jnp.float32)
  h0 = jnp.zeros((NUM_LAYERS, B, HIDDEN), jnp.float32)   # init_hidden()
  c0 = jnp.zeros((NUM_LAYERS, B, HIDDEN), jnp.float32)

  yhat, (h_out, c_out) = lstm_graves_forward(
      x, h0, c0, kp["wihx"], kp["whh"], kp["wprev"], kp["b"], kp["wfc"], kp["bfc"],
      out_size=OUT)
  jax.block_until_ready((yhat, h_out, c_out))

  # sanity check against a pure-JAX reference of the PyTorch forward
  yhat_ref, (h_ref, c_ref) = reference_forward(x, h0, c0, per_layer, fc)
  np.testing.assert_allclose(np.asarray(yhat), np.asarray(yhat_ref),
                             rtol=5e-3, atol=5e-3)
  np.testing.assert_allclose(np.asarray(h_out), np.asarray(h_ref),
                             rtol=5e-3, atol=5e-3)
  np.testing.assert_allclose(np.asarray(c_out), np.asarray(c_ref),
                             rtol=5e-3, atol=5e-3)

  assert yhat.shape == (B, T, OUT)
  assert h_out.shape == (NUM_LAYERS, B, HIDDEN)
  assert c_out.shape == (NUM_LAYERS, B, HIDDEN)
  print("KERNEL_OK")
</pallas_src>

<mosaic_0001>
module attributes {stable_mosaic.version = 11 : i64} {
  func.func @lstm_graves_kernel(%arg0: memref<64x3xf32, #tpu.memory_space<vmem>>, %arg1: memref<8x96xf32, #tpu.memory_space<vmem>>, %arg2: memref<8x96xf32, #tpu.memory_space<vmem>>, %arg3: memref<3x384xf32, #tpu.memory_space<vmem>>, %arg4: memref<96x384xf32, #tpu.memory_space<vmem>>, %arg5: memref<2x32x128xf32, #tpu.memory_space<vmem>>, %arg6: memref<1x384xf32, #tpu.memory_space<vmem>>, %arg7: memref<96x128xf32, #tpu.memory_space<vmem>>, %arg8: memref<1x128xf32, #tpu.memory_space<vmem>>, %arg9: memref<64x128xf32, #tpu.memory_space<vmem>>, %arg10: memref<8x96xf32, #tpu.memory_space<vmem>>, %arg11: memref<8x96xf32, #tpu.memory_space<vmem>>, %arg12: memref<64x384xf32, #tpu.memory_space<vmem>>, %arg13: memref<64x96xf32, #tpu.memory_space<vmem>>) attributes {dimension_semantics = [], scalar_prefetch = 0 : i64, scratch_operands = 2 : i64, tpu.core_type = #tpu.core_type<tc>} {
    %c0 = arith.constant 0 : index
    %c0_0 = arith.constant 0 : index
    %0 = vector.load %arg0[%c0, %c0_0] : memref<64x3xf32, #tpu.memory_space<vmem>>, vector<64x3xf32>
    %c0_1 = arith.constant 0 : index
    %c0_2 = arith.constant 0 : index
    %1 = vector.load %arg3[%c0_1, %c0_2] : memref<3x384xf32, #tpu.memory_space<vmem>>, vector<3x384xf32>
    %cst = arith.constant dense<0.000000e+00> : vector<64x384xf32>
    %2 = tpu.matmul %0, %1, %cst {dimension_numbers = #tpu.dot_dimension_numbers<[1], [0], [0], [1], [0, 0, 1, 1], [], []>} : vector<64x3xf32>, vector<3x384xf32>, vector<64x384xf32> -> vector<64x384xf32>
    %c0_3 = arith.constant 0 : index
    %c0_4 = arith.constant 0 : index
    %3 = vector.load %arg6[%c0_3, %c0_4] : memref<1x384xf32, #tpu.memory_space<vmem>>, vector<1x384xf32>
    %4 = vector.broadcast %3 : vector<1x384xf32> to vector<64x384xf32>
    %5 = arith.addf %2, %4 : vector<64x384xf32>
    %c0_5 = arith.constant 0 : index
    %c0_6 = arith.constant 0 : index
    %6 = vector.load %arg12[%c0_5, %c0_6] : memref<64x384xf32, #tpu.memory_space<vmem>>, vector<64x384xf32>
    tpu.vector_store %arg12[%c0_5, %c0_6], %5 {strides = array<i32>} : memref<64x384xf32, #tpu.memory_space<vmem>>, vector<64x384xf32>,
    %c0_7 = arith.constant 0 : index
    %c0_8 = arith.constant 0 : index
    %7 = vector.load %arg2[%c0_7, %c0_8] : memref<8x96xf32, #tpu.memory_space<vmem>>, vector<8x32xf32>
    %c0_9 = arith.constant 0 : index
    %c32 = arith.constant 32 : index
    %8 = vector.load %arg2[%c0_9, %c32] : memref<8x96xf32, #tpu.memory_space<vmem>>, vector<8x32xf32>
    %c0_10 = arith.constant 0 : index
    %c64 = arith.constant 64 : index
    %9 = vector.load %arg2[%c0_10, %c64] : memref<8x96xf32, #tpu.memory_space<vmem>>, vector<8x32xf32>
    %c0_11 = arith.constant 0 : index
    %c0_12 = arith.constant 0 : index
    %10 = vector.load %arg1[%c0_11, %c0_12] : memref<8x96xf32, #tpu.memory_space<vmem>>, vector<8x96xf32>
    %c0_i32 = arith.constant 0 : i32
    %c8_i32 = arith.constant 8 : i32
    %11 = arith.muli %c0_i32, %c8_i32 : i32
    %12 = tpu.assume_multiple %11, 8 : i32
    %13 = arith.index_cast %12 : i32 to index
    %c0_13 = arith.constant 0 : index
    %14 = vector.load %arg12[%13, %c0_13] : memref<64x384xf32, #tpu.memory_space<vmem>>, vector<8x384xf32>
    %c0_14 = arith.constant 0 : index
    %c0_15 = arith.constant 0 : index
    %15 = vector.load %arg4[%c0_14, %c0_15] : memref<96x384xf32, #tpu.memory_space<vmem>>, vector<96x384xf32>
    %cst_16 = arith.constant dense<0.000000e+00> : vector<8x384xf32>
    %16 = tpu.matmul %10, %15, %cst_16 {dimension_numbers = #tpu.dot_dimension_numbers<[1], [0], [0], [1], [0, 0, 1, 1], [], []>} : vector<8x96xf32>, vector<96x384xf32>, vector<8x384xf32> -> vector<8x384xf32>
    %17 = arith.addf %14, %16 : vector<8x384xf32>
    %18 = vector.extract_strided_slice %17 {offsets = [0, 0], sizes = [8, 128], strides = [1, 1]} : vector<8x384xf32> to vector<8x128xf32>
    %19 = arith.negf %18 : vector<8x128xf32>
    %20 = math.exp %19 : vector<8x128xf32>
    %cst_17 = arith.constant 1.000000e+00 : f32
    %21 = vector.broadcast %cst_17 : f32 to vector<8x128xf32>
    %22 = arith.addf %21, %20 : vector<8x128xf32>
    %23 = arith.divf %21, %22 : vector<8x128xf32>
    %24 = math.tanh %18 : vector<8x128xf32>
    %25 = vector.extract_strided_slice %23 {offsets = [0, 0], sizes = [8, 32], strides = [1, 1]} : vector<8x128xf32> to vector<8x32xf32>
    %26 = vector.extract_strided_slice %23 {offsets = [0, 32], sizes = [8, 32], strides = [1, 1]} : vector<8x128xf32> to vector<8x32xf32>
    %27 = vector.extract_strided_slice %24 {offsets = [0, 64], sizes = [8, 32], strides = [1, 1]} : vector<8x128xf32> to vector<8x32xf32>
    %28 = vector.extract_strided_slice %23 {offsets = [0, 96], sizes = [8, 32], strides = [1, 1]} : vector<8x128xf32> to vector<8x32xf32>
    %29 = arith.mulf %26, %7 : vector<8x32xf32>
    %30 = arith.mulf %25, %27 : vector<8x32xf32>
    %31 = arith.addf %29, %30 : vector<8x32xf32>
    %32 = math.tanh %31 : vector<8x32xf32>
    %33 = arith.mulf %28, %32 : vector<8x32xf32>
    %34 = vector.extract_strided_slice %17 {offsets = [0, 128], sizes = [8, 128], strides = [1, 1]} : vector<8x384xf32> to vector<8x128xf32>
    %c0_18 = arith.constant 0 : index
    %c0_19 = arith.constant 0 : index
    %c0_20 = arith.constant 0 : index
    %35 = vector.load %arg5[%c0_18, %c0_19, %c0_20] : memref<2x32x128xf32, #tpu.memory_space<vmem>>, vector<1x32x128xf32>
    %36 = vector.shape_cast %35 : vector<1x32x128xf32> to vector<32x128xf32>
    %cst_21 = arith.constant dense<0.000000e+00> : vector<8x128xf32>
    %37 = tpu.matmul %33, %36, %cst_21 {dimension_numbers = #tpu.dot_dimension_numbers<[1], [0], [0], [1], [0, 0, 1, 1], [], []>} : vector<8x32xf32>, vector<32x128xf32>, vector<8x128xf32> -> vector<8x128xf32>
    %38 = arith.addf %34, %37 : vector<8x128xf32>
    %39 = arith.negf %38 : vector<8x128xf32>
    %40 = math.exp %39 : vector<8x128xf32>
    %cst_22 = arith.constant 1.000000e+00 : f32
    %41 = vector.broadcast %cst_22 : f32 to vector<8x128xf32>
    %42 = arith.addf %41, %40 : vector<8x128xf32>
    %43 = arith.divf %41, %42 : vector<8x128xf32>
    %44 = math.tanh %38 : vector<8x128xf32>
    %45 = vector.extract_strided_slice %43 {offsets = [0, 0], sizes = [8, 32], strides = [1, 1]} : vector<8x128xf32> to vector<8x32xf32>
    %46 = vector.extract_strided_slice %43 {offsets = [0, 32], sizes = [8, 32], strides = [1, 1]} : vector<8x128xf32> to vector<8x32xf32>
    %47 = vector.extract_strided_slice %44 {offsets = [0, 64], sizes = [8, 32], strides = [1, 1]} : vector<8x128xf32> to vector<8x32xf32>
    %48 = vector.extract_strided_slice %43 {offsets = [0, 96], sizes = [8, 32], strides = [1, 1]} : vector<8x128xf32> to vector<8x32xf32>
    %49 = arith.mulf %46, %8 : vector<8x32xf32>
    %50 = arith.mulf %45, %47 : vector<8x32xf32>
    %51 = arith.addf %49, %50 : vector<8x32xf32>
    %52 = math.tanh %51 : vector<8x32xf32>
    %53 = arith.mulf %48, %52 : vector<8x32xf32>
    %54 = vector.extract_strided_slice %17 {offsets = [0, 256], sizes = [8, 128], strides = [1, 1]} : vector<8x384xf32> to vector<8x128xf32>
    %c1 = arith.constant 1 : index
    %c0_23 = arith.constant 0 : index
    %c0_24 = arith.constant 0 : index
    %55 = vector.load %arg5[%c1, %c0_23, %c0_24] : memref<2x32x128xf32, #tpu.memory_space<vmem>>, vector<1x32x128xf32>
    %56 = vector.shape_cast %55 : vector<1x32x128xf32> to vector<32x128xf32>
    %cst_25 = arith.constant dense<0.000000e+00> : vector<8x128xf32>
    %57 = tpu.matmul %53, %56, %cst_25 {dimension_numbers = #tpu.dot_dimension_numbers<[1], [0], [0], [1], [0, 0, 1, 1], [], []>} : vector<8x32xf32>, vector<32x128xf32>, vector<8x128xf32> -> vector<8x128xf32>
    %58 = arith.addf %54, %57 : vector<8x128xf32>
    %59 = arith.negf %58 : vector<8x128xf32>
    %60 = math.exp %59 : vector<8x128xf32>
    %cst_26 = arith.constant 1.000000e+00 : f32
    %61 = vector.broadcast %cst_26 : f32 to vector<8x128xf32>
    %62 = arith.addf %61, %60 : vector<8x128xf32>
    %63 = arith.divf %61, %62 : vector<8x128xf32>
    %64 = math.tanh %58 : vector<8x128xf32>
    %65 = vector.extract_strided_slice %63 {offsets = [0, 0], sizes = [8, 32], strides = [1, 1]} : vector<8x128xf32> to vector<8x32xf32>
    %66 = vector.extract_strided_slice %63 {offsets = [0, 32], sizes = [8, 32], strides = [1, 1]} : vector<8x128xf32> to vector<8x32xf32>
    %67 = vector.extract_strided_slice %64 {offsets = [0, 64], sizes = [8, 32], strides = [1, 1]} : vector<8x128xf32> to vector<8x32xf32>
    %68 = vector.extract_strided_slice %63 {offsets = [0, 96], sizes = [8, 32], strides = [1, 1]} : vector<8x128xf32> to vector<8x32xf32>
    %69 = arith.mulf %66, %9 : vector<8x32xf32>
    %70 = arith.mulf %65, %67 : vector<8x32xf32>
    %71 = arith.addf %69, %70 : vector<8x32xf32>
    %72 = math.tanh %71 : vector<8x32xf32>
    %73 = arith.mulf %68, %72 : vector<8x32xf32>
    %74 = tpu.concatenate %33, %53, %73 in 1 : vector<8x32xf32>, vector<8x32xf32>, vector<8x32xf32> -> vector<8x96xf32>
    %75 = arith.index_cast %12 : i32 to index
    %c0_27 = arith.constant 0 : index
    %76 = vector.load %arg13[%75, %c0_27] : memref<64x96xf32, #tpu.memory_space<vmem>>, vector<8x96xf32>
    tpu.vector_store %arg13[%75, %c0_27], %74 {strides = array<i32>} : memref<64x96xf32, #tpu.memory_space<vmem>>, vector<8x96xf32>,
    %c1_i32 = arith.constant 1 : i32
    %c8_i32_28 = arith.constant 8 : i32
    %77 = arith.muli %c1_i32, %c8_i32_28 : i32
    %78 = tpu.assume_multiple %77, 8 : i32
    %79 = arith.index_cast %78 : i32 to index
    %c0_29 = arith.constant 0 : index
    %80 = vector.load %arg12[%79, %c0_29] : memref<64x384xf32, #tpu.memory_space<vmem>>, vector<8x384xf32>
    %c0_30 = arith.constant 0 : index
    %c0_31 = arith.constant 0 : index
    %81 = vector.load %arg4[%c0_30, %c0_31] : memref<96x384xf32, #tpu.memory_space<vmem>>, vector<96x384xf32>
    %cst_32 = arith.constant dense<0.000000e+00> : vector<8x384xf32>
    %82 = tpu.matmul %74, %81, %cst_32 {dimension_numbers = #tpu.dot_dimension_numbers<[1], [0], [0], [1], [0, 0, 1, 1], [], []>} : vector<8x96xf32>, vector<96x384xf32>, vector<8x384xf32> -> vector<8x384xf32>
    %83 = arith.addf %80, %82 : vector<8x384xf32>
    %84 = vector.extract_strided_slice %83 {offsets = [0, 0], sizes = [8, 128], strides = [1, 1]} : vector<8x384xf32> to vector<8x128xf32>
    %85 = arith.negf %84 : vector<8x128xf32>
    %86 = math.exp %85 : vector<8x128xf32>
    %cst_33 = arith.constant 1.000000e+00 : f32
    %87 = vector.broadcast %cst_33 : f32 to vector<8x128xf32>
    %88 = arith.addf %87, %86 : vector<8x128xf32>
    %89 = arith.divf %87, %88 : vector<8x128xf32>
    %90 = math.tanh %84 : vector<8x128xf32>
    %91 = vector.extract_strided_slice %89 {offsets = [0, 0], sizes = [8, 32], strides = [1, 1]} : vector<8x128xf32> to vector<8x32xf32>
    %92 = vector.extract_strided_slice %89 {offsets = [0, 32], sizes = [8, 32], strides = [1, 1]} : vector<8x128xf32> to vector<8x32xf32>
    %93 = vector.extract_strided_slice %90 {offsets = [0, 64], sizes = [8, 32], strides = [1, 1]} : vector<8x128xf32> to vector<8x32xf32>
    %94 = vector.extract_strided_slice %89 {offsets = [0, 96], sizes = [8, 32], strides = [1, 1]} : vector<8x128xf32> to vector<8x32xf32>
    %95 = arith.mulf %92, %31 : vector<8x32xf32>
    %96 = arith.mulf %91, %93 : vector<8x32xf32>
    %97 = arith.addf %95, %96 : vector<8x32xf32>
    %98 = math.tanh %97 : vector<8x32xf32>
    %99 = arith.mulf %94, %98 : vector<8x32xf32>
    %100 = vector.extract_strided_slice %83 {offsets = [0, 128], sizes = [8, 128], strides = [1, 1]} : vector<8x384xf32> to vector<8x128xf32>
    %c0_34 = arith.constant 0 : index
    %c0_35 = arith.constant 0 : index
    %c0_36 = arith.constant 0 : index
    %101 = vector.load %arg5[%c0_34, %c0_35, %c0_36] : memref<2x32x128xf32, #tpu.memory_space<vmem>>, vector<1x32x128xf32>
    %102 = vector.shape_cast %101 : vector<1x32x128xf32> to vector<32x128xf32>
    %cst_37 = arith.constant dense<0.000000e+00> : vector<8x128xf32>
    %103 = tpu.matmul %99, %102, %cst_37 {dimension_numbers = #tpu.dot_dimension_numbers<[1], [0], [0], [1], [0, 0, 1, 1], [], []>} : vector<8x32xf32>, vector<32x128xf32>, vector<8x128xf32> -> vector<8x128xf32>
    %104 = arith.addf %100, %103 : vector<8x128xf32>
    %105 = arith.negf %104 : vector<8x128xf32>
    %106 = math.exp %105 : vector<8x128xf32>
    %cst_38 = arith.constant 1.000000e+00 : f32
    %107 = vector.broadcast %cst_38 : f32 to vector<8x128xf32>
    %108 = arith.addf %107, %106 : vector<8x128xf32>
    %109 = arith.divf %107, %108 : vector<8x128xf32>
    %110 = math.tanh %104 : vector<8x128xf32>
    %111 = vector.extract_strided_slice %109 {offsets = [0, 0], sizes = [8, 32], strides = [1, 1]} : vector<8x128xf32> to vector<8x32xf32>
    %112 = vector.extract_strided_slice %109 {offsets = [0, 32], sizes = [8, 32], strides = [1, 1]} : vector<8x128xf32> to vector<8x32xf32>
    %113 = vector.extract_strided_slice %110 {offsets = [0, 64], sizes = [8, 32], strides = [1, 1]} : vector<8x128xf32> to vector<8x32xf32>
    %114 = vector.extract_strided_slice %109 {offsets = [0, 96], sizes = [8, 32], strides = [1, 1]} : vector<8x128xf32> to vector<8x32xf32>
    %115 = arith.mulf %112, %51 : vector<8x32xf32>
    %116 = arith.mulf %111, %113 : vector<8x32xf32>
    %117 = arith.addf %115, %116 : vector<8x32xf32>
    %118 = math.tanh %117 : vector<8x32xf32>
    %119 = arith.mulf %114, %118 : vector<8x32xf32>
    %120 = vector.extract_strided_slice %83 {offsets = [0, 256], sizes = [8, 128], strides = [1, 1]} : vector<8x384xf32> to vector<8x128xf32>
    %c1_39 = arith.constant 1 : index
    %c0_40 = arith.constant 0 : index
    %c0_41 = arith.constant 0 : index
    %121 = vector.load %arg5[%c1_39, %c0_40, %c0_41] : memref<2x32x128xf32, #tpu.memory_space<vmem>>, vector<1x32x128xf32>
    %122 = vector.shape_cast %121 : vector<1x32x128xf32> to vector<32x128xf32>
    %cst_42 = arith.constant dense<0.000000e+00> : vector<8x128xf32>
    %123 = tpu.matmul %119, %122, %cst_42 {dimension_numbers = #tpu.dot_dimension_numbers<[1], [0], [0], [1], [0, 0, 1, 1], [], []>} : vector<8x32xf32>, vector<32x128xf32>, vector<8x128xf32> -> vector<8x128xf32>
    %124 = arith.addf %120, %123 : vector<8x128xf32>
    %125 = arith.negf %124 : vector<8x128xf32>
    %126 = math.exp %125 : vector<8x128xf32>
    %cst_43 = arith.constant 1.000000e+00 : f32
    %127 = vector.broadcast %cst_43 : f32 to vector<8x128xf32>
    %128 = arith.addf %127, %126 : vector<8x128xf32>
    %129 = arith.divf %127, %128 : vector<8x128xf32>
    %130 = math.tanh %124 : vector<8x128xf32>
    %131 = vector.extract_strided_slice %129 {offsets = [0, 0], sizes = [8, 32], strides = [1, 1]} : vector<8x128xf32> to vector<8x32xf32>
    %132 = vector.extract_strided_slice %129 {offsets = [0, 32], sizes = [8, 32], strides = [1, 1]} : vector<8x128xf32> to vector<8x32xf32>
    %133 = vector.extract_strided_slice %130 {offsets = [0, 64], sizes = [8, 32], strides = [1, 1]} : vector<8x128xf32> to vector<8x32xf32>
    %134 = vector.extract_strided_slice %129 {offsets = [0, 96], sizes = [8, 32], strides = [1, 1]} : vector<8x128xf32> to vector<8x32xf32>
    %135 = arith.mulf %132, %71 : vector<8x32xf32>
    %136 = arith.mulf %131, %133 : vector<8x32xf32>
    %137 = arith.addf %135, %136 : vector<8x32xf32>
    %138 = math.tanh %137 : vector<8x32xf32>
    %139 = arith.mulf %134, %138 : vector<8x32xf32>
    %140 = tpu.concatenate %99, %119, %139 in 1 : vector<8x32xf32>, vector<8x32xf32>, vector<8x32xf32> -> vector<8x96xf32>
    %141 = arith.index_cast %78 : i32 to index
    %c0_44 = arith.constant 0 : index
    %142 = vector.load %arg13[%141, %c0_44] : memref<64x96xf32, #tpu.memory_space<vmem>>, vector<8x96xf32>
    tpu.vector_store %arg13[%141, %c0_44], %140 {strides = array<i32>} : memref<64x96xf32, #tpu.memory_space<vmem>>, vector<8x96xf32>,
    %c2_i32 = arith.constant 2 : i32
    %c8_i32_45 = arith.constant 8 : i32
    %143 = arith.muli %c2_i32, %c8_i32_45 : i32
    %144 = tpu.assume_multiple %143, 8 : i32
    %145 = arith.index_cast %144 : i32 to index
    %c0_46 = arith.constant 0 : index
    %146 = vector.load %arg12[%145, %c0_46] : memref<64x384xf32, #tpu.memory_space<vmem>>, vector<8x384xf32>
    %c0_47 = arith.constant 0 : index
    %c0_48 = arith.constant 0 : index
    %147 = vector.load %arg4[%c0_47, %c0_48] : memref<96x384xf32, #tpu.memory_space<vmem>>, vector<96x384xf32>
    %cst_49 = arith.constant dense<0.000000e+00> : vector<8x384xf32>
    %148 = tpu.matmul %140, %147, %cst_49 {dimension_numbers = #tpu.dot_dimension_numbers<[1], [0], [0], [1], [0, 0, 1, 1], [], []>} : vector<8x96xf32>, vector<96x384xf32>, vector<8x384xf32> -> vector<8x384xf32>
    %149 = arith.addf %146, %148 : vector<8x384xf32>
    %150 = vector.extract_strided_slice %149 {offsets = [0, 0], sizes = [8, 128], strides = [1, 1]} : vector<8x384xf32> to vector<8x128xf32>
    %151 = arith.negf %150 : vector<8x128xf32>
    %152 = math.exp %151 : vector<8x128xf32>
    %cst_50 = arith.constant 1.000000e+00 : f32
    %153 = vector.broadcast %cst_50 : f32 to vector<8x128xf32>
    %154 = arith.addf %153, %152 : vector<8x128xf32>
    %155 = arith.divf %153, %154 : vector<8x128xf32>
    %156 = math.tanh %150 : vector<8x128xf32>
    %157 = vector.extract_strided_slice %155 {offsets = [0, 0], sizes = [8, 32], strides = [1, 1]} : vector<8x128xf32> to vector<8x32xf32>
    %158 = vector.extract_strided_slice %155 {offsets = [0, 32], sizes = [8, 32], strides = [1, 1]} : vector<8x128xf32> to vector<8x32xf32>
    %159 = vector.extract_strided_slice %156 {offsets = [0, 64], sizes = [8, 32], strides = [1, 1]} : vector<8x128xf32> to vector<8x32xf32>
    %160 = vector.extract_strided_slice %155 {offsets = [0, 96], sizes = [8, 32], strides = [1, 1]} : vector<8x128xf32> to vector<8x32xf32>
    %161 = arith.mulf %158, %97 : vector<8x32xf32>
    %162 = arith.mulf %157, %159 : vector<8x32xf32>
    %163 = arith.addf %161, %162 : vector<8x32xf32>
    %164 = math.tanh %163 : vector<8x32xf32>
    %165 = arith.mulf %160, %164 : vector<8x32xf32>
    %166 = vector.extract_strided_slice %149 {offsets = [0, 128], sizes = [8, 128], strides = [1, 1]} : vector<8x384xf32> to vector<8x128xf32>
    %c0_51 = arith.constant 0 : index
    %c0_52 = arith.constant 0 : index
    %c0_53 = arith.constant 0 : index
    %167 = vector.load %arg5[%c0_51, %c0_52, %c0_53] : memref<2x32x128xf32, #tpu.memory_space<vmem>>, vector<1x32x128xf32>
    %168 = vector.shape_cast %167 : vector<1x32x128xf32> to vector<32x128xf32>
    %cst_54 = arith.constant dense<0.000000e+00> : vector<8x128xf32>
    %169 = tpu.matmul %165, %168, %cst_54 {dimension_numbers = #tpu.dot_dimension_numbers<[1], [0], [0], [1], [0, 0, 1, 1], [], []>} : vector<8x32xf32>, vector<32x128xf32>, vector<8x128xf32> -> vector<8x128xf32>
    %170 = arith.addf %166, %169 : vector<8x128xf32>
    %171 = arith.negf %170 : vector<8x128xf32>
    %172 = math.exp %171 : vector<8x128xf32>
    %cst_55 = arith.constant 1.000000e+00 : f32
    %173 = vector.broadcast %cst_55 : f32 to vector<8x128xf32>
    %174 = arith.addf %173, %172 : vector<8x128xf32>
    %175 = arith.divf %173, %174 : vector<8x128xf32>
    %176 = math.tanh %170 : vector<8x128xf32>
    %177 = vector.extract_strided_slice %175 {offsets = [0, 0], sizes = [8, 32], strides = [1, 1]} : vector<8x128xf32> to vector<8x32xf32>
    %178 = vector.extract_strided_slice %175 {offsets = [0, 32], sizes = [8, 32], strides = [1, 1]} : vector<8x128xf32> to vector<8x32xf32>
    %179 = vector.extract_strided_slice %176 {offsets = [0, 64], sizes = [8, 32], strides = [1, 1]} : vector<8x128xf32> to vector<8x32xf32>
    %180 = vector.extract_strided_slice %175 {offsets = [0, 96], sizes = [8, 32], strides = [1, 1]} : vector<8x128xf32> to vector<8x32xf32>
    %181 = arith.mulf %178, %117 : vector<8x32xf32>
    %182 = arith.mulf %177, %179 : vector<8x32xf32>
    %183 = arith.addf %181, %182 : vector<8x32xf32>
    %184 = math.tanh %183 : vector<8x32xf32>
    %185 = arith.mulf %180, %184 : vector<8x32xf32>
    %186 = vector.extract_strided_slice %149 {offsets = [0, 256], sizes = [8, 128], strides = [1, 1]} : vector<8x384xf32> to vector<8x128xf32>
    %c1_56 = arith.constant 1 : index
    %c0_57 = arith.constant 0 : index
    %c0_58 = arith.constant 0 : index
    %187 = vector.load %arg5[%c1_56, %c0_57, %c0_58] : memref<2x32x128xf32, #tpu.memory_space<vmem>>, vector<1x32x128xf32>
    %188 = vector.shape_cast %187 : vector<1x32x128xf32> to vector<32x128xf32>
    %cst_59 = arith.constant dense<0.000000e+00> : vector<8x128xf32>
    %189 = tpu.matmul %185, %188, %cst_59 {dimension_numbers = #tpu.dot_dimension_numbers<[1], [0], [0], [1], [0, 0, 1, 1], [], []>} : vector<8x32xf32>, vector<32x128xf32>, vector<8x128xf32> -> vector<8x128xf32>
    %190 = arith.addf %186, %189 : vector<8x128xf32>
    %191 = arith.negf %190 : vector<8x128xf32>
    %192 = math.exp %191 : vector<8x128xf32>
    %cst_60 = arith.constant 1.000000e+00 : f32
    %193 = vector.broadcast %cst_60 : f32 to vector<8x128xf32>
    %194 = arith.addf %193, %192 : vector<8x128xf32>
    %195 = arith.divf %193, %194 : vector<8x128xf32>
    %196 = math.tanh %190 : vector<8x128xf32>
    %197 = vector.extract_strided_slice %195 {offsets = [0, 0], sizes = [8, 32], strides = [1, 1]} : vector<8x128xf32> to vector<8x32xf32>
    %198 = vector.extract_strided_slice %195 {offsets = [0, 32], sizes = [8, 32], strides = [1, 1]} : vector<8x128xf32> to vector<8x32xf32>
    %199 = vector.extract_strided_slice %196 {offsets = [0, 64], sizes = [8, 32], strides = [1, 1]} : vector<8x128xf32> to vector<8x32xf32>
    %200 = vector.extract_strided_slice %195 {offsets = [0, 96], sizes = [8, 32], strides = [1, 1]} : vector<8x128xf32> to vector<8x32xf32>
    %201 = arith.mulf %198, %137 : vector<8x32xf32>
    %202 = arith.mulf %197, %199 : vector<8x32xf32>
    %203 = arith.addf %201, %202 : vector<8x32xf32>
    %204 = math.tanh %203 : vector<8x32xf32>
    %205 = arith.mulf %200, %204 : vector<8x32xf32>
    %206 = tpu.concatenate %165, %185, %205 in 1 : vector<8x32xf32>, vector<8x32xf32>, vector<8x32xf32> -> vector<8x96xf32>
    %207 = arith.index_cast %144 : i32 to index
    %c0_61 = arith.constant 0 : index
    %208 = vector.load %arg13[%207, %c0_61] : memref<64x96xf32, #tpu.memory_space<vmem>>, vector<8x96xf32>
    tpu.vector_store %arg13[%207, %c0_61], %206 {strides = array<i32>} : memref<64x96xf32, #tpu.memory_space<vmem>>, vector<8x96xf32>,
    %c3_i32 = arith.constant 3 : i32
    %c8_i32_62 = arith.constant 8 : i32
    %209 = arith.muli %c3_i32, %c8_i32_62 : i32
    %210 = tpu.assume_multiple %209, 8 : i32
    %211 = arith.index_cast %210 : i32 to index
    %c0_63 = arith.constant 0 : index
    %212 = vector.load %arg12[%211, %c0_63] : memref<64x384xf32, #tpu.memory_space<vmem>>, vector<8x384xf32>
    %c0_64 = arith.constant 0 : index
    %c0_65 = arith.constant 0 : index
    %213 = vector.load %arg4[%c0_64, %c0_65] : memref<96x384xf32, #tpu.memory_space<vmem>>, vector<96x384xf32>
    %cst_66 = arith.constant dense<0.000000e+00> : vector<8x384xf32>
    %214 = tpu.matmul %206, %213, %cst_66 {dimension_numbers = #tpu.dot_dimension_numbers<[1], [0], [0], [1], [0, 0, 1, 1], [], []>} : vector<8x96xf32>, vector<96x384xf32>, vector<8x384xf32> -> vector<8x384xf32>
    %215 = arith.addf %212, %214 : vector<8x384xf32>
    %216 = vector.extract_strided_slice %215 {offsets = [0, 0], sizes = [8, 128], strides = [1, 1]} : vector<8x384xf32> to vector<8x128xf32>
    %217 = arith.negf %216 : vector<8x128xf32>
    %218 = math.exp %217 : vector<8x128xf32>
    %cst_67 = arith.constant 1.000000e+00 : f32
    %219 = vector.broadcast %cst_67 : f32 to vector<8x128xf32>
    %220 = arith.addf %219, %218 : vector<8x128xf32>
    %221 = arith.divf %219, %220 : vector<8x128xf32>
    %222 = math.tanh %216 : vector<8x128xf32>
    %223 = vector.extract_strided_slice %221 {offsets = [0, 0], sizes = [8, 32], strides = [1, 1]} : vector<8x128xf32> to vector<8x32xf32>
    %224 = vector.extract_strided_slice %221 {offsets = [0, 32], sizes = [8, 32], strides = [1, 1]} : vector<8x128xf32> to vector<8x32xf32>
    %225 = vector.extract_strided_slice %222 {offsets = [0, 64], sizes = [8, 32], strides = [1, 1]} : vector<8x128xf32> to vector<8x32xf32>
    %226 = vector.extract_strided_slice %221 {offsets = [0, 96], sizes = [8, 32], strides = [1, 1]} : vector<8x128xf32> to vector<8x32xf32>
    %227 = arith.mulf %224, %163 : vector<8x32xf32>
    %228 = arith.mulf %223, %225 : vector<8x32xf32>
    %229 = arith.addf %227, %228 : vector<8x32xf32>
    %230 = math.tanh %229 : vector<8x32xf32>
    %231 = arith.mulf %226, %230 : vector<8x32xf32>
    %232 = vector.extract_strided_slice %215 {offsets = [0, 128], sizes = [8, 128], strides = [1, 1]} : vector<8x384xf32> to vector<8x128xf32>
    %c0_68 = arith.constant 0 : index
    %c0_69 = arith.constant 0 : index
    %c0_70 = arith.constant 0 : index
    %233 = vector.load %arg5[%c0_68, %c0_69, %c0_70] : memref<2x32x128xf32, #tpu.memory_space<vmem>>, vector<1x32x128xf32>
    %234 = vector.shape_cast %233 : vector<1x32x128xf32> to vector<32x128xf32>
    %cst_71 = arith.constant dense<0.000000e+00> : vector<8x128xf32>
    %235 = tpu.matmul %231, %234, %cst_71 {dimension_numbers = #tpu.dot_dimension_numbers<[1], [0], [0], [1], [0, 0, 1, 1], [], []>} : vector<8x32xf32>, vector<32x128xf32>, vector<8x128xf32> -> vector<8x128xf32>
    %236 = arith.addf %232, %235 : vector<8x128xf32>
    %237 = arith.negf %236 : vector<8x128xf32>
    %238 = math.exp %237 : vector<8x128xf32>
    %cst_72 = arith.constant 1.000000e+00 : f32
    %239 = vector.broadcast %cst_72 : f32 to vector<8x128xf32>
    %240 = arith.addf %239, %238 : vector<8x128xf32>
    %241 = arith.divf %239, %240 : vector<8x128xf32>
    %242 = math.tanh %236 : vector<8x128xf32>
    %243 = vector.extract_strided_slice %241 {offsets = [0, 0], sizes = [8, 32], strides = [1, 1]} : vector<8x128xf32> to vector<8x32xf32>
    %244 = vector.extract_strided_slice %241 {offsets = [0, 32], sizes = [8, 32], strides = [1, 1]} : vector<8x128xf32> to vector<8x32xf32>
    %245 = vector.extract_strided_slice %242 {offsets = [0, 64], sizes = [8, 32], strides = [1, 1]} : vector<8x128xf32> to vector<8x32xf32>
    %246 = vector.extract_strided_slice %241 {offsets = [0, 96], sizes = [8, 32], strides = [1, 1]} : vector<8x128xf32> to vector<8x32xf32>
    %247 = arith.mulf %244, %183 : vector<8x32xf32>
    %248 = arith.mulf %243, %245 : vector<8x32xf32>
    %249 = arith.addf %247, %248 : vector<8x32xf32>
    %250 = math.tanh %249 : vector<8x32xf32>
    %251 = arith.mulf %246, %250 : vector<8x32xf32>
    %252 = vector.extract_strided_slice %215 {offsets = [0, 256], sizes = [8, 128], strides = [1, 1]} : vector<8x384xf32> to vector<8x128xf32>
    %c1_73 = arith.constant 1 : index
    %c0_74 = arith.constant 0 : index
    %c0_75 = arith.constant 0 : index
    %253 = vector.load %arg5[%c1_73, %c0_74, %c0_75] : memref<2x32x128xf32, #tpu.memory_space<vmem>>, vector<1x32x128xf32>
    %254 = vector.shape_cast %253 : vector<1x32x128xf32> to vector<32x128xf32>
    %cst_76 = arith.constant dense<0.000000e+00> : vector<8x128xf32>
    %255 = tpu.matmul %251, %254, %cst_76 {dimension_numbers = #tpu.dot_dimension_numbers<[1], [0], [0], [1], [0, 0, 1, 1], [], []>} : vector<8x32xf32>, vector<32x128xf32>, vector<8x128xf32> -> vector<8x128xf32>
    %256 = arith.addf %252, %255 : vector<8x128xf32>
    %257 = arith.negf %256 : vector<8x128xf32>
    %258 = math.exp %257 : vector<8x128xf32>
    %cst_77 = arith.constant 1.000000e+00 : f32
    %259 = vector.broadcast %cst_77 : f32 to vector<8x128xf32>
    %260 = arith.addf %259, %258 : vector<8x128xf32>
    %261 = arith.divf %259, %260 : vector<8x128xf32>
    %262 = math.tanh %256 : vector<8x128xf32>
    %263 = vector.extract_strided_slice %261 {offsets = [0, 0], sizes = [8, 32], strides = [1, 1]} : vector<8x128xf32> to vector<8x32xf32>
    %264 = vector.extract_strided_slice %261 {offsets = [0, 32], sizes = [8, 32], strides = [1, 1]} : vector<8x128xf32> to vector<8x32xf32>
    %265 = vector.extract_strided_slice %262 {offsets = [0, 64], sizes = [8, 32], strides = [1, 1]} : vector<8x128xf32> to vector<8x32xf32>
    %266 = vector.extract_strided_slice %261 {offsets = [0, 96], sizes = [8, 32], strides = [1, 1]} : vector<8x128xf32> to vector<8x32xf32>
    %267 = arith.mulf %264, %203 : vector<8x32xf32>
    %268 = arith.mulf %263, %265 : vector<8x32xf32>
    %269 = arith.addf %267, %268 : vector<8x32xf32>
    %270 = math.tanh %269 : vector<8x32xf32>
    %271 = arith.mulf %266, %270 : vector<8x32xf32>
    %272 = tpu.concatenate %231, %251, %271 in 1 : vector<8x32xf32>, vector<8x32xf32>, vector<8x32xf32> -> vector<8x96xf32>
    %273 = arith.index_cast %210 : i32 to index
    %c0_78 = arith.constant 0 : index
    %274 = vector.load %arg13[%273, %c0_78] : memref<64x96xf32, #tpu.memory_space<vmem>>, vector<8x96xf32>
    tpu.vector_store %arg13[%273, %c0_78], %272 {strides = array<i32>} : memref<64x96xf32, #tpu.memory_space<vmem>>, vector<8x96xf32>,
    %c4_i32 = arith.constant 4 : i32
    %c8_i32_79 = arith.constant 8 : i32
    %275 = arith.muli %c4_i32, %c8_i32_79 : i32
    %276 = tpu.assume_multiple %275, 8 : i32
    %277 = arith.index_cast %276 : i32 to index
    %c0_80 = arith.constant 0 : index
    %278 = vector.load %arg12[%277, %c0_80] : memref<64x384xf32, #tpu.memory_space<vmem>>, vector<8x384xf32>
    %c0_81 = arith.constant 0 : index
    %c0_82 = arith.constant 0 : index
    %279 = vector.load %arg4[%c0_81, %c0_82] : memref<96x384xf32, #tpu.memory_space<vmem>>, vector<96x384xf32>
    %cst_83 = arith.constant dense<0.000000e+00> : vector<8x384xf32>
    %280 = tpu.matmul %272, %279, %cst_83 {dimension_numbers = #tpu.dot_dimension_numbers<[1], [0], [0], [1], [0, 0, 1, 1], [], []>} : vector<8x96xf32>, vector<96x384xf32>, vector<8x384xf32> -> vector<8x384xf32>
    %281 = arith.addf %278, %280 : vector<8x384xf32>
    %282 = vector.extract_strided_slice %281 {offsets = [0, 0], sizes = [8, 128], strides = [1, 1]} : vector<8x384xf32> to vector<8x128xf32>
    %283 = arith.negf %282 : vector<8x128xf32>
    %284 = math.exp %283 : vector<8x128xf32>
    %cst_84 = arith.constant 1.000000e+00 : f32
    %285 = vector.broadcast %cst_84 : f32 to vector<8x128xf32>
    %286 = arith.addf %285, %284 : vector<8x128xf32>
    %287 = arith.divf %285, %286 : vector<8x128xf32>
    %288 = math.tanh %282 : vector<8x128xf32>
    %289 = vector.extract_strided_slice %287 {offsets = [0, 0], sizes = [8, 32], strides = [1, 1]} : vector<8x128xf32> to vector<8x32xf32>
    %290 = vector.extract_strided_slice %287 {offsets = [0, 32], sizes = [8, 32], strides = [1, 1]} : vector<8x128xf32> to vector<8x32xf32>
    %291 = vector.extract_strided_slice %288 {offsets = [0, 64], sizes = [8, 32], strides = [1, 1]} : vector<8x128xf32> to vector<8x32xf32>
    %292 = vector.extract_strided_slice %287 {offsets = [0, 96], sizes = [8, 32], strides = [1, 1]} : vector<8x128xf32> to vector<8x32xf32>
    %293 = arith.mulf %290, %229 : vector<8x32xf32>
    %294 = arith.mulf %289, %291 : vector<8x32xf32>
    %295 = arith.addf %293, %294 : vector<8x32xf32>
    %296 = math.tanh %295 : vector<8x32xf32>
    %297 = arith.mulf %292, %296 : vector<8x32xf32>
    %298 = vector.extract_strided_slice %281 {offsets = [0, 128], sizes = [8, 128], strides = [1, 1]} : vector<8x384xf32> to vector<8x128xf32>
    %c0_85 = arith.constant 0 : index
    %c0_86 = arith.constant 0 : index
    %c0_87 = arith.constant 0 : index
    %299 = vector.load %arg5[%c0_85, %c0_86, %c0_87] : memref<2x32x128xf32, #tpu.memory_space<vmem>>, vector<1x32x128xf32>
    %300 = vector.shape_cast %299 : vector<1x32x128xf32> to vector<32x128xf32>
    %cst_88 = arith.constant dense<0.000000e+00> : vector<8x128xf32>
    %301 = tpu.matmul %297, %300, %cst_88 {dimension_numbers = #tpu.dot_dimension_numbers<[1], [0], [0], [1], [0, 0, 1, 1], [], []>} : vector<8x32xf32>, vector<32x128xf32>, vector<8x128xf32> -> vector<8x128xf32>
    %302 = arith.addf %298, %301 : vector<8x128xf32>
    %303 = arith.negf %302 : vector<8x128xf32>
    %304 = math.exp %303 : vector<8x128xf32>
    %cst_89 = arith.constant 1.000000e+00 : f32
    %305 = vector.broadcast %cst_89 : f32 to vector<8x128xf32>
    %306 = arith.addf %305, %304 : vector<8x128xf32>
    %307 = arith.divf %305, %306 : vector<8x128xf32>
    %308 = math.tanh %302 : vector<8x128xf32>
    %309 = vector.extract_strided_slice %307 {offsets = [0, 0], sizes = [8, 32], strides = [1, 1]} : vector<8x128xf32> to vector<8x32xf32>
    %310 = vector.extract_strided_slice %307 {offsets = [0, 32], sizes = [8, 32], strides = [1, 1]} : vector<8x128xf32> to vector<8x32xf32>
    %311 = vector.extract_strided_slice %308 {offsets = [0, 64], sizes = [8, 32], strides = [1, 1]} : vector<8x128xf32> to vector<8x32xf32>
    %312 = vector.extract_strided_slice %307 {offsets = [0, 96], sizes = [8, 32], strides = [1, 1]} : vector<8x128xf32> to vector<8x32xf32>
    %313 = arith.mulf %310, %249 : vector<8x32xf32>
    %314 = arith.mulf %309, %311 : vector<8x32xf32>
    %315 = arith.addf %313, %314 : vector<8x32xf32>
    %316 = math.tanh %315 : vector<8x32xf32>
    %317 = arith.mulf %312, %316 : vector<8x32xf32>
    %318 = vector.extract_strided_slice %281 {offsets = [0, 256], sizes = [8, 128], strides = [1, 1]} : vector<8x384xf32> to vector<8x128xf32>
    %c1_90 = arith.constant 1 : index
    %c0_91 = arith.constant 0 : index
    %c0_92 = arith.constant 0 : index
    %319 = vector.load %arg5[%c1_90, %c0_91, %c0_92] : memref<2x32x128xf32, #tpu.memory_space<vmem>>, vector<1x32x128xf32>
    %320 = vector.shape_cast %319 : vector<1x32x128xf32> to vector<32x128xf32>
    %cst_93 = arith.constant dense<0.000000e+00> : vector<8x128xf32>
    %321 = tpu.matmul %317, %320, %cst_93 {dimension_numbers = #tpu.dot_dimension_numbers<[1], [0], [0], [1], [0, 0, 1, 1], [], []>} : vector<8x32xf32>, vector<32x128xf32>, vector<8x128xf32> -> vector<8x128xf32>
    %322 = arith.addf %318, %321 : vector<8x128xf32>
    %323 = arith.negf %322 : vector<8x128xf32>
    %324 = math.exp %323 : vector<8x128xf32>
    %cst_94 = arith.constant 1.000000e+00 : f32
    %325 = vector.broadcast %cst_94 : f32 to vector<8x128xf32>
    %326 = arith.addf %325, %324 : vector<8x128xf32>
    %327 = arith.divf %325, %326 : vector<8x128xf32>
    %328 = math.tanh %322 : vector<8x128xf32>
    %329 = vector.extract_strided_slice %327 {offsets = [0, 0], sizes = [8, 32], strides = [1, 1]} : vector<8x128xf32> to vector<8x32xf32>
    %330 = vector.extract_strided_slice %327 {offsets = [0, 32], sizes = [8, 32], strides = [1, 1]} : vector<8x128xf32> to vector<8x32xf32>
    %331 = vector.extract_strided_slice %328 {offsets = [0, 64], sizes = [8, 32], strides = [1, 1]} : vector<8x128xf32> to vector<8x32xf32>
    %332 = vector.extract_strided_slice %327 {offsets = [0, 96], sizes = [8, 32], strides = [1, 1]} : vector<8x128xf32> to vector<8x32xf32>
    %333 = arith.mulf %330, %269 : vector<8x32xf32>
    %334 = arith.mulf %329, %331 : vector<8x32xf32>
    %335 = arith.addf %333, %334 : vector<8x32xf32>
    %336 = math.tanh %335 : vector<8x32xf32>
    %337 = arith.mulf %332, %336 : vector<8x32xf32>
    %338 = tpu.concatenate %297, %317, %337 in 1 : vector<8x32xf32>, vector<8x32xf32>, vector<8x32xf32> -> vector<8x96xf32>
    %339 = arith.index_cast %276 : i32 to index
    %c0_95 = arith.constant 0 : index
    %340 = vector.load %arg13[%339, %c0_95] : memref<64x96xf32, #tpu.memory_space<vmem>>, vector<8x96xf32>
    tpu.vector_store %arg13[%339, %c0_95], %338 {strides = array<i32>} : memref<64x96xf32, #tpu.memory_space<vmem>>, vector<8x96xf32>,
    %c5_i32 = arith.constant 5 : i32
    %c8_i32_96 = arith.constant 8 : i32
    %341 = arith.muli %c5_i32, %c8_i32_96 : i32
    %342 = tpu.assume_multiple %341, 8 : i32
    %343 = arith.index_cast %342 : i32 to index
    %c0_97 = arith.constant 0 : index
    %344 = vector.load %arg12[%343, %c0_97] : memref<64x384xf32, #tpu.memory_space<vmem>>, vector<8x384xf32>
    %c0_98 = arith.constant 0 : index
    %c0_99 = arith.constant 0 : index
    %345 = vector.load %arg4[%c0_98, %c0_99] : memref<96x384xf32, #tpu.memory_space<vmem>>, vector<96x384xf32>
    %cst_100 = arith.constant dense<0.000000e+00> : vector<8x384xf32>
    %346 = tpu.matmul %338, %345, %cst_100 {dimension_numbers = #tpu.dot_dimension_numbers<[1], [0], [0], [1], [0, 0, 1, 1], [], []>} : vector<8x96xf32>, vector<96x384xf32>, vector<8x384xf32> -> vector<8x384xf32>
    %347 = arith.addf %344, %346 : vector<8x384xf32>
    %348 = vector.extract_strided_slice %347 {offsets = [0, 0], sizes = [8, 128], strides = [1, 1]} : vector<8x384xf32> to vector<8x128xf32>
    %349 = arith.negf %348 : vector<8x128xf32>
    %350 = math.exp %349 : vector<8x128xf32>
    %cst_101 = arith.constant 1.000000e+00 : f32
    %351 = vector.broadcast %cst_101 : f32 to vector<8x128xf32>
    %352 = arith.addf %351, %350 : vector<8x128xf32>
    %353 = arith.divf %351, %352 : vector<8x128xf32>
    %354 = math.tanh %348 : vector<8x128xf32>
    %355 = vector.extract_strided_slice %353 {offsets = [0, 0], sizes = [8, 32], strides = [1, 1]} : vector<8x128xf32> to vector<8x32xf32>
    %356 = vector.extract_strided_slice %353 {offsets = [0, 32], sizes = [8, 32], strides = [1, 1]} : vector<8x128xf32> to vector<8x32xf32>
    %357 = vector.extract_strided_slice %354 {offsets = [0, 64], sizes = [8, 32], strides = [1, 1]} : vector<8x128xf32> to vector<8x32xf32>
    %358 = vector.extract_strided_slice %353 {offsets = [0, 96], sizes = [8, 32], strides = [1, 1]} : vector<8x128xf32> to vector<8x32xf32>
    %359 = arith.mulf %356, %295 : vector<8x32xf32>
    %360 = arith.mulf %355, %357 : vector<8x32xf32>
    %361 = arith.addf %359, %360 : vector<8x32xf32>
    %362 = math.tanh %361 : vector<8x32xf32>
    %363 = arith.mulf %358, %362 : vector<8x32xf32>
    %364 = vector.extract_strided_slice %347 {offsets = [0, 128], sizes = [8, 128], strides = [1, 1]} : vector<8x384xf32> to vector<8x128xf32>
    %c0_102 = arith.constant 0 : index
    %c0_103 = arith.constant 0 : index
    %c0_104 = arith.constant 0 : index
    %365 = vector.load %arg5[%c0_102, %c0_103, %c0_104] : memref<2x32x128xf32, #tpu.memory_space<vmem>>, vector<1x32x128xf32>
    %366 = vector.shape_cast %365 : vector<1x32x128xf32> to vector<32x128xf32>
    %cst_105 = arith.constant dense<0.000000e+00> : vector<8x128xf32>
    %367 = tpu.matmul %363, %366, %cst_105 {dimension_numbers = #tpu.dot_dimension_numbers<[1], [0], [0], [1], [0, 0, 1, 1], [], []>} : vector<8x32xf32>, vector<32x128xf32>, vector<8x128xf32> -> vector<8x128xf32>
    %368 = arith.addf %364, %367 : vector<8x128xf32>
    %369 = arith.negf %368 : vector<8x128xf32>
    %370 = math.exp %369 : vector<8x128xf32>
    %cst_106 = arith.constant 1.000000e+00 : f32
    %371 = vector.broadcast %cst_106 : f32 to vector<8x128xf32>
    %372 = arith.addf %371, %370 : vector<8x128xf32>
    %373 = arith.divf %371, %372 : vector<8x128xf32>
    %374 = math.tanh %368 : vector<8x128xf32>
    %375 = vector.extract_strided_slice %373 {offsets = [0, 0], sizes = [8, 32], strides = [1, 1]} : vector<8x128xf32> to vector<8x32xf32>
    %376 = vector.extract_strided_slice %373 {offsets = [0, 32], sizes = [8, 32], strides = [1, 1]} : vector<8x128xf32> to vector<8x32xf32>
    %377 = vector.extract_strided_slice %374 {offsets = [0, 64], sizes = [8, 32], strides = [1, 1]} : vector<8x128xf32> to vector<8x32xf32>
    %378 = vector.extract_strided_slice %373 {offsets = [0, 96], sizes = [8, 32], strides = [1, 1]} : vector<8x128xf32> to vector<8x32xf32>
    %379 = arith.mulf %376, %315 : vector<8x32xf32>
    %380 = arith.mulf %375, %377 : vector<8x32xf32>
    %381 = arith.addf %379, %380 : vector<8x32xf32>
    %382 = math.tanh %381 : vector<8x32xf32>
    %383 = arith.mulf %378, %382 : vector<8x32xf32>
    %384 = vector.extract_strided_slice %347 {offsets = [0, 256], sizes = [8, 128], strides = [1, 1]} : vector<8x384xf32> to vector<8x128xf32>
    %c1_107 = arith.constant 1 : index
    %c0_108 = arith.constant 0 : index
    %c0_109 = arith.constant 0 : index
    %385 = vector.load %arg5[%c1_107, %c0_108, %c0_109] : memref<2x32x128xf32, #tpu.memory_space<vmem>>, vector<1x32x128xf32>
    %386 = vector.shape_cast %385 : vector<1x32x128xf32> to vector<32x128xf32>
    %cst_110 = arith.constant dense<0.000000e+00> : vector<8x128xf32>
    %387 = tpu.matmul %383, %386, %cst_110 {dimension_numbers = #tpu.dot_dimension_numbers<[1], [0], [0], [1], [0, 0, 1, 1], [], []>} : vector<8x32xf32>, vector<32x128xf32>, vector<8x128xf32> -> vector<8x128xf32>
    %388 = arith.addf %384, %387 : vector<8x128xf32>
    %389 = arith.negf %388 : vector<8x128xf32>
    %390 = math.exp %389 : vector<8x128xf32>
    %cst_111 = arith.constant 1.000000e+00 : f32
    %391 = vector.broadcast %cst_111 : f32 to vector<8x128xf32>
    %392 = arith.addf %391, %390 : vector<8x128xf32>
    %393 = arith.divf %391, %392 : vector<8x128xf32>
    %394 = math.tanh %388 : vector<8x128xf32>
    %395 = vector.extract_strided_slice %393 {offsets = [0, 0], sizes = [8, 32], strides = [1, 1]} : vector<8x128xf32> to vector<8x32xf32>
    %396 = vector.extract_strided_slice %393 {offsets = [0, 32], sizes = [8, 32], strides = [1, 1]} : vector<8x128xf32> to vector<8x32xf32>
    %397 = vector.extract_strided_slice %394 {offsets = [0, 64], sizes = [8, 32], strides = [1, 1]} : vector<8x128xf32> to vector<8x32xf32>
    %398 = vector.extract_strided_slice %393 {offsets = [0, 96], sizes = [8, 32], strides = [1, 1]} : vector<8x128xf32> to vector<8x32xf32>
    %399 = arith.mulf %396, %335 : vector<8x32xf32>
    %400 = arith.mulf %395, %397 : vector<8x32xf32>
    %401 = arith.addf %399, %400 : vector<8x32xf32>
    %402 = math.tanh %401 : vector<8x32xf32>
    %403 = arith.mulf %398, %402 : vector<8x32xf32>
    %404 = tpu.concatenate %363, %383, %403 in 1 : vector<8x32xf32>, vector<8x32xf32>, vector<8x32xf32> -> vector<8x96xf32>
    %405 = arith.index_cast %342 : i32 to index
    %c0_112 = arith.constant 0 : index
    %406 = vector.load %arg13[%405, %c0_112] : memref<64x96xf32, #tpu.memory_space<vmem>>, vector<8x96xf32>
    tpu.vector_store %arg13[%405, %c0_112], %404 {strides = array<i32>} : memref<64x96xf32, #tpu.memory_space<vmem>>, vector<8x96xf32>,
    %c6_i32 = arith.constant 6 : i32
    %c8_i32_113 = arith.constant 8 : i32
    %407 = arith.muli %c6_i32, %c8_i32_113 : i32
    %408 = tpu.assume_multiple %407, 8 : i32
    %409 = arith.index_cast %408 : i32 to index
    %c0_114 = arith.constant 0 : index
    %410 = vector.load %arg12[%409, %c0_114] : memref<64x384xf32, #tpu.memory_space<vmem>>, vector<8x384xf32>
    %c0_115 = arith.constant 0 : index
    %c0_116 = arith.constant 0 : index
    %411 = vector.load %arg4[%c0_115, %c0_116] : memref<96x384xf32, #tpu.memory_space<vmem>>, vector<96x384xf32>
    %cst_117 = arith.constant dense<0.000000e+00> : vector<8x384xf32>
    %412 = tpu.matmul %404, %411, %cst_117 {dimension_numbers = #tpu.dot_dimension_numbers<[1], [0], [0], [1], [0, 0, 1, 1], [], []>} : vector<8x96xf32>, vector<96x384xf32>, vector<8x384xf32> -> vector<8x384xf32>
    %413 = arith.addf %410, %412 : vector<8x384xf32>
    %414 = vector.extract_strided_slice %413 {offsets = [0, 0], sizes = [8, 128], strides = [1, 1]} : vector<8x384xf32> to vector<8x128xf32>
    %415 = arith.negf %414 : vector<8x128xf32>
    %416 = math.exp %415 : vector<8x128xf32>
    %cst_118 = arith.constant 1.000000e+00 : f32
    %417 = vector.broadcast %cst_118 : f32 to vector<8x128xf32>
    %418 = arith.addf %417, %416 : vector<8x128xf32>
    %419 = arith.divf %417, %418 : vector<8x128xf32>
    %420 = math.tanh %414 : vector<8x128xf32>
    %421 = vector.extract_strided_slice %419 {offsets = [0, 0], sizes = [8, 32], strides = [1, 1]} : vector<8x128xf32> to vector<8x32xf32>
    %422 = vector.extract_strided_slice %419 {offsets = [0, 32], sizes = [8, 32], strides = [1, 1]} : vector<8x128xf32> to vector<8x32xf32>
    %423 = vector.extract_strided_slice %420 {offsets = [0, 64], sizes = [8, 32], strides = [1, 1]} : vector<8x128xf32> to vector<8x32xf32>
    %424 = vector.extract_strided_slice %419 {offsets = [0, 96], sizes = [8, 32], strides = [1, 1]} : vector<8x128xf32> to vector<8x32xf32>
    %425 = arith.mulf %422, %361 : vector<8x32xf32>
    %426 = arith.mulf %421, %423 : vector<8x32xf32>
    %427 = arith.addf %425, %426 : vector<8x32xf32>
    %428 = math.tanh %427 : vector<8x32xf32>
    %429 = arith.mulf %424, %428 : vector<8x32xf32>
    %430 = vector.extract_strided_slice %413 {offsets = [0, 128], sizes = [8, 128], strides = [1, 1]} : vector<8x384xf32> to vector<8x128xf32>
    %c0_119 = arith.constant 0 : index
    %c0_120 = arith.constant 0 : index
    %c0_121 = arith.constant 0 : index
    %431 = vector.load %arg5[%c0_119, %c0_120, %c0_121] : memref<2x32x128xf32, #tpu.memory_space<vmem>>, vector<1x32x128xf32>
    %432 = vector.shape_cast %431 : vector<1x32x128xf32> to vector<32x128xf32>
    %cst_122 = arith.constant dense<0.000000e+00> : vector<8x128xf32>
    %433 = tpu.matmul %429, %432, %cst_122 {dimension_numbers = #tpu.dot_dimension_numbers<[1], [0], [0], [1], [0, 0, 1, 1], [], []>} : vector<8x32xf32>, vector<32x128xf32>, vector<8x128xf32> -> vector<8x128xf32>
    %434 = arith.addf %430, %433 : vector<8x128xf32>
    %435 = arith.negf %434 : vector<8x128xf32>
    %436 = math.exp %435 : vector<8x128xf32>
    %cst_123 = arith.constant 1.000000e+00 : f32
    %437 = vector.broadcast %cst_123 : f32 to vector<8x128xf32>
    %438 = arith.addf %437, %436 : vector<8x128xf32>
    %439 = arith.divf %437, %438 : vector<8x128xf32>
    %440 = math.tanh %434 : vector<8x128xf32>
    %441 = vector.extract_strided_slice %439 {offsets = [0, 0], sizes = [8, 32], strides = [1, 1]} : vector<8x128xf32> to vector<8x32xf32>
    %442 = vector.extract_strided_slice %439 {offsets = [0, 32], sizes = [8, 32], strides = [1, 1]} : vector<8x128xf32> to vector<8x32xf32>
    %443 = vector.extract_strided_slice %440 {offsets = [0, 64], sizes = [8, 32], strides = [1, 1]} : vector<8x128xf32> to vector<8x32xf32>
    %444 = vector.extract_strided_slice %439 {offsets = [0, 96], sizes = [8, 32], strides = [1, 1]} : vector<8x128xf32> to vector<8x32xf32>
    %445 = arith.mulf %442, %381 : vector<8x32xf32>
    %446 = arith.mulf %441, %443 : vector<8x32xf32>
    %447 = arith.addf %445, %446 : vector<8x32xf32>
    %448 = math.tanh %447 : vector<8x32xf32>
    %449 = arith.mulf %444, %448 : vector<8x32xf32>
    %450 = vector.extract_strided_slice %413 {offsets = [0, 256], sizes = [8, 128], strides = [1, 1]} : vector<8x384xf32> to vector<8x128xf32>
    %c1_124 = arith.constant 1 : index
    %c0_125 = arith.constant 0 : index
    %c0_126 = arith.constant 0 : index
    %451 = vector.load %arg5[%c1_124, %c0_125, %c0_126] : memref<2x32x128xf32, #tpu.memory_space<vmem>>, vector<1x32x128xf32>
    %452 = vector.shape_cast %451 : vector<1x32x128xf32> to vector<32x128xf32>
    %cst_127 = arith.constant dense<0.000000e+00> : vector<8x128xf32>
    %453 = tpu.matmul %449, %452, %cst_127 {dimension_numbers = #tpu.dot_dimension_numbers<[1], [0], [0], [1], [0, 0, 1, 1], [], []>} : vector<8x32xf32>, vector<32x128xf32>, vector<8x128xf32> -> vector<8x128xf32>
    %454 = arith.addf %450, %453 : vector<8x128xf32>
    %455 = arith.negf %454 : vector<8x128xf32>
    %456 = math.exp %455 : vector<8x128xf32>
    %cst_128 = arith.constant 1.000000e+00 : f32
    %457 = vector.broadcast %cst_128 : f32 to vector<8x128xf32>
    %458 = arith.addf %457, %456 : vector<8x128xf32>
    %459 = arith.divf %457, %458 : vector<8x128xf32>
    %460 = math.tanh %454 : vector<8x128xf32>
    %461 = vector.extract_strided_slice %459 {offsets = [0, 0], sizes = [8, 32], strides = [1, 1]} : vector<8x128xf32> to vector<8x32xf32>
    %462 = vector.extract_strided_slice %459 {offsets = [0, 32], sizes = [8, 32], strides = [1, 1]} : vector<8x128xf32> to vector<8x32xf32>
    %463 = vector.extract_strided_slice %460 {offsets = [0, 64], sizes = [8, 32], strides = [1, 1]} : vector<8x128xf32> to vector<8x32xf32>
    %464 = vector.extract_strided_slice %459 {offsets = [0, 96], sizes = [8, 32], strides = [1, 1]} : vector<8x128xf32> to vector<8x32xf32>
    %465 = arith.mulf %462, %401 : vector<8x32xf32>
    %466 = arith.mulf %461, %463 : vector<8x32xf32>
    %467 = arith.addf %465, %466 : vector<8x32xf32>
    %468 = math.tanh %467 : vector<8x32xf32>
    %469 = arith.mulf %464, %468 : vector<8x32xf32>
    %470 = tpu.concatenate %429, %449, %469 in 1 : vector<8x32xf32>, vector<8x32xf32>, vector<8x32xf32> -> vector<8x96xf32>
    %471 = arith.index_cast %408 : i32 to index
    %c0_129 = arith.constant 0 : index
    %472 = vector.load %arg13[%471, %c0_129] : memref<64x96xf32, #tpu.memory_space<vmem>>, vector<8x96xf32>
    tpu.vector_store %arg13[%471, %c0_129], %470 {strides = array<i32>} : memref<64x96xf32, #tpu.memory_space<vmem>>, vector<8x96xf32>,
    %c7_i32 = arith.constant 7 : i32
    %c8_i32_130 = arith.constant 8 : i32
    %473 = arith.muli %c7_i32, %c8_i32_130 : i32
    %474 = tpu.assume_multiple %473, 8 : i32
    %475 = arith.index_cast %474 : i32 to index
    %c0_131 = arith.constant 0 : index
    %476 = vector.load %arg12[%475, %c0_131] : memref<64x384xf32, #tpu.memory_space<vmem>>, vector<8x384xf32>
    %c0_132 = arith.constant 0 : index
    %c0_133 = arith.constant 0 : index
    %477 = vector.load %arg4[%c0_132, %c0_133] : memref<96x384xf32, #tpu.memory_space<vmem>>, vector<96x384xf32>
    %cst_134 = arith.constant dense<0.000000e+00> : vector<8x384xf32>
    %478 = tpu.matmul %470, %477, %cst_134 {dimension_numbers = #tpu.dot_dimension_numbers<[1], [0], [0], [1], [0, 0, 1, 1], [], []>} : vector<8x96xf32>, vector<96x384xf32>, vector<8x384xf32> -> vector<8x384xf32>
    %479 = arith.addf %476, %478 : vector<8x384xf32>
    %480 = vector.extract_strided_slice %479 {offsets = [0, 0], sizes = [8, 128], strides = [1, 1]} : vector<8x384xf32> to vector<8x128xf32>
    %481 = arith.negf %480 : vector<8x128xf32>
    %482 = math.exp %481 : vector<8x128xf32>
    %cst_135 = arith.constant 1.000000e+00 : f32
    %483 = vector.broadcast %cst_135 : f32 to vector<8x128xf32>
    %484 = arith.addf %483, %482 : vector<8x128xf32>
    %485 = arith.divf %483, %484 : vector<8x128xf32>
    %486 = math.tanh %480 : vector<8x128xf32>
    %487 = vector.extract_strided_slice %485 {offsets = [0, 0], sizes = [8, 32], strides = [1, 1]} : vector<8x128xf32> to vector<8x32xf32>
    %488 = vector.extract_strided_slice %485 {offsets = [0, 32], sizes = [8, 32], strides = [1, 1]} : vector<8x128xf32> to vector<8x32xf32>
    %489 = vector.extract_strided_slice %486 {offsets = [0, 64], sizes = [8, 32], strides = [1, 1]} : vector<8x128xf32> to vector<8x32xf32>
    %490 = vector.extract_strided_slice %485 {offsets = [0, 96], sizes = [8, 32], strides = [1, 1]} : vector<8x128xf32> to vector<8x32xf32>
    %491 = arith.mulf %488, %427 : vector<8x32xf32>
    %492 = arith.mulf %487, %489 : vector<8x32xf32>
    %493 = arith.addf %491, %492 : vector<8x32xf32>
    %494 = math.tanh %493 : vector<8x32xf32>
    %495 = arith.mulf %490, %494 : vector<8x32xf32>
    %496 = vector.extract_strided_slice %479 {offsets = [0, 128], sizes = [8, 128], strides = [1, 1]} : vector<8x384xf32> to vector<8x128xf32>
    %c0_136 = arith.constant 0 : index
    %c0_137 = arith.constant 0 : index
    %c0_138 = arith.constant 0 : index
    %497 = vector.load %arg5[%c0_136, %c0_137, %c0_138] : memref<2x32x128xf32, #tpu.memory_space<vmem>>, vector<1x32x128xf32>
    %498 = vector.shape_cast %497 : vector<1x32x128xf32> to vector<32x128xf32>
    %cst_139 = arith.constant dense<0.000000e+00> : vector<8x128xf32>
    %499 = tpu.matmul %495, %498, %cst_139 {dimension_numbers = #tpu.dot_dimension_numbers<[1], [0], [0], [1], [0, 0, 1, 1], [], []>} : vector<8x32xf32>, vector<32x128xf32>, vector<8x128xf32> -> vector<8x128xf32>
    %500 = arith.addf %496, %499 : vector<8x128xf32>
    %501 = arith.negf %500 : vector<8x128xf32>
    %502 = math.exp %501 : vector<8x128xf32>
    %cst_140 = arith.constant 1.000000e+00 : f32
    %503 = vector.broadcast %cst_140 : f32 to vector<8x128xf32>
    %504 = arith.addf %503, %502 : vector<8x128xf32>
    %505 = arith.divf %503, %504 : vector<8x128xf32>
    %506 = math.tanh %500 : vector<8x128xf32>
    %507 = vector.extract_strided_slice %505 {offsets = [0, 0], sizes = [8, 32], strides = [1, 1]} : vector<8x128xf32> to vector<8x32xf32>
    %508 = vector.extract_strided_slice %505 {offsets = [0, 32], sizes = [8, 32], strides = [1, 1]} : vector<8x128xf32> to vector<8x32xf32>
    %509 = vector.extract_strided_slice %506 {offsets = [0, 64], sizes = [8, 32], strides = [1, 1]} : vector<8x128xf32> to vector<8x32xf32>
    %510 = vector.extract_strided_slice %505 {offsets = [0, 96], sizes = [8, 32], strides = [1, 1]} : vector<8x128xf32> to vector<8x32xf32>
    %511 = arith.mulf %508, %447 : vector<8x32xf32>
    %512 = arith.mulf %507, %509 : vector<8x32xf32>
    %513 = arith.addf %511, %512 : vector<8x32xf32>
    %514 = math.tanh %513 : vector<8x32xf32>
    %515 = arith.mulf %510, %514 : vector<8x32xf32>
    %516 = vector.extract_strided_slice %479 {offsets = [0, 256], sizes = [8, 128], strides = [1, 1]} : vector<8x384xf32> to vector<8x128xf32>
    %c1_141 = arith.constant 1 : index
    %c0_142 = arith.constant 0 : index
    %c0_143 = arith.constant 0 : index
    %517 = vector.load %arg5[%c1_141, %c0_142, %c0_143] : memref<2x32x128xf32, #tpu.memory_space<vmem>>, vector<1x32x128xf32>
    %518 = vector.shape_cast %517 : vector<1x32x128xf32> to vector<32x128xf32>
    %cst_144 = arith.constant dense<0.000000e+00> : vector<8x128xf32>
    %519 = tpu.matmul %515, %518, %cst_144 {dimension_numbers = #tpu.dot_dimension_numbers<[1], [0], [0], [1], [0, 0, 1, 1], [], []>} : vector<8x32xf32>, vector<32x128xf32>, vector<8x128xf32> -> vector<8x128xf32>
    %520 = arith.addf %516, %519 : vector<8x128xf32>
    %521 = arith.negf %520 : vector<8x128xf32>
    %522 = math.exp %521 : vector<8x128xf32>
    %cst_145 = arith.constant 1.000000e+00 : f32
    %523 = vector.broadcast %cst_145 : f32 to vector<8x128xf32>
    %524 = arith.addf %523, %522 : vector<8x128xf32>
    %525 = arith.divf %523, %524 : vector<8x128xf32>
    %526 = math.tanh %520 : vector<8x128xf32>
    %527 = vector.extract_strided_slice %525 {offsets = [0, 0], sizes = [8, 32], strides = [1, 1]} : vector<8x128xf32> to vector<8x32xf32>
    %528 = vector.extract_strided_slice %525 {offsets = [0, 32], sizes = [8, 32], strides = [1, 1]} : vector<8x128xf32> to vector<8x32xf32>
    %529 = vector.extract_strided_slice %526 {offsets = [0, 64], sizes = [8, 32], strides = [1, 1]} : vector<8x128xf32> to vector<8x32xf32>
    %530 = vector.extract_strided_slice %525 {offsets = [0, 96], sizes = [8, 32], strides = [1, 1]} : vector<8x128xf32> to vector<8x32xf32>
    %531 = arith.mulf %528, %467 : vector<8x32xf32>
    %532 = arith.mulf %527, %529 : vector<8x32xf32>
    %533 = arith.addf %531, %532 : vector<8x32xf32>
    %534 = math.tanh %533 : vector<8x32xf32>
    %535 = arith.mulf %530, %534 : vector<8x32xf32>
    %536 = tpu.concatenate %495, %515, %535 in 1 : vector<8x32xf32>, vector<8x32xf32>, vector<8x32xf32> -> vector<8x96xf32>
    %537 = arith.index_cast %474 : i32 to index
    %c0_146 = arith.constant 0 : index
    %538 = vector.load %arg13[%537, %c0_146] : memref<64x96xf32, #tpu.memory_space<vmem>>, vector<8x96xf32>
    tpu.vector_store %arg13[%537, %c0_146], %536 {strides = array<i32>} : memref<64x96xf32, #tpu.memory_space<vmem>>, vector<8x96xf32>,
    %c8_i32_147 = arith.constant 8 : i32
    %c0_148 = arith.constant 0 : index
    %c0_149 = arith.constant 0 : index
    %539 = vector.load %arg10[%c0_148, %c0_149] : memref<8x96xf32, #tpu.memory_space<vmem>>, vector<8x96xf32>
    tpu.vector_store %arg10[%c0_148, %c0_149], %536 {strides = array<i32>} : memref<8x96xf32, #tpu.memory_space<vmem>>, vector<8x96xf32>,
    %540 = tpu.concatenate %493, %513, %533 in 1 : vector<8x32xf32>, vector<8x32xf32>, vector<8x32xf32> -> vector<8x96xf32>
    %c0_150 = arith.constant 0 : index
    %c0_151 = arith.constant 0 : index
    %541 = vector.load %arg11[%c0_150, %c0_151] : memref<8x96xf32, #tpu.memory_space<vmem>>, vector<8x96xf32>
    tpu.vector_store %arg11[%c0_150, %c0_151], %540 {strides = array<i32>} : memref<8x96xf32, #tpu.memory_space<vmem>>, vector<8x96xf32>,
    %c0_152 = arith.constant 0 : index
    %c0_153 = arith.constant 0 : index
    %542 = vector.load %arg13[%c0_152, %c0_153] : memref<64x96xf32, #tpu.memory_space<vmem>>, vector<64x96xf32>
    %c0_154 = arith.constant 0 : index
    %c0_155 = arith.constant 0 : index
    %543 = vector.load %arg7[%c0_154, %c0_155] : memref<96x128xf32, #tpu.memory_space<vmem>>, vector<96x128xf32>
    %cst_156 = arith.constant dense<0.000000e+00> : vector<64x128xf32>
    %544 = tpu.matmul %542, %543, %cst_156 {dimension_numbers = #tpu.dot_dimension_numbers<[1], [0], [0], [1], [0, 0, 1, 1], [], []>} : vector<64x96xf32>, vector<96x128xf32>, vector<64x128xf32> -> vector<64x128xf32>
    %c0_157 = arith.constant 0 : index
    %c0_158 = arith.constant 0 : index
    %545 = vector.load %arg8[%c0_157, %c0_158] : memref<1x128xf32, #tpu.memory_space<vmem>>, vector<1x128xf32>
    %546 = vector.broadcast %545 : vector<1x128xf32> to vector<64x128xf32>
    %547 = arith.addf %544, %546 : vector<64x128xf32>
    %c0_159 = arith.constant 0 : index
    %c0_160 = arith.constant 0 : index
    %548 = vector.load %arg9[%c0_159, %c0_160] : memref<64x128xf32, #tpu.memory_space<vmem>>, vector<64x128xf32>
    tpu.vector_store %arg9[%c0_159, %c0_160], %547 {strides = array<i32>} : memref<64x128xf32, #tpu.memory_space<vmem>>, vector<64x128xf32>,
    return
  }
}

</mosaic_0001>

<llo_original>
// kernel: lstm_graves_forward.1
$region0: #{lstm_graves_forward.1}
  #allocation0 [shape = 'u32[]', space=smem, size = 0x4, offset = 0x4, fixed_abs, tag = 'smem constant byte address 0x4 - core index']
  #allocation1 [shape = 'u32[144,128]{1,0:T(1,128)}', space=vmem, size = 0x12000, scoped, tag = 'internal scratch']
  #allocation2 [shape = 'f32[64,384]{1,0:T(8,128)}', space=vmem, size = 0x18000, scoped, tag = 'scratch operand']
  #allocation3 [shape = 'f32[64,96]{1,0:T(8,128)}', space=vmem, size = 0x8000, scoped, tag = 'scratch operand']
  %s0 = inlined_call_operand.vmem [shape: f32[64,3], index: 0, kind: input, shape index: {}]
  %s1 = inlined_call_operand.vmem [shape: f32[8,96], index: 1, kind: input, shape index: {}]
  %s2 = inlined_call_operand.vmem [shape: f32[8,96], index: 2, kind: input, shape index: {}]
  %s3 = inlined_call_operand.vmem [shape: f32[3,384], index: 3, kind: input, shape index: {}]
  %s4 = inlined_call_operand.vmem [shape: f32[96,384], index: 4, kind: input, shape index: {}]
  %s5 = inlined_call_operand.vmem [shape: f32[2,32,128], index: 5, kind: input, shape index: {}]
  %s6 = inlined_call_operand.vmem [shape: f32[1,384], index: 6, kind: input, shape index: {}]
  %s7 = inlined_call_operand.hbm [shape: f32[96,128], index: 7, kind: input, shape index: {}]
  %s8 = inlined_call_operand.vmem [shape: f32[1,128], index: 8, kind: input, shape index: {}]
  %s9 = inlined_call_operand.vmem [shape: f32[64,128], index: 9, kind: output, shape index: {0}]
  %s10 = inlined_call_operand.vmem [shape: f32[8,96], index: 10, kind: output, shape index: {1}]
  %s11 = inlined_call_operand.vmem [shape: f32[8,96], index: 11, kind: output, shape index: {2}]
  %12 = xla_tuple %s9, %s10, %s11
  %s13 = sld [smem:[#allocation0]]
  $region66: #{lstm_graves_forward.1} parent=0
    _
  %s15 = ssub.s32 1, %s13
  %s16 = scalar_select 0, %s15, %s13
  $region1: #{lstm_graves_forward.1} parent=0
    #allocation4 [shape = 'u8[49152]{0}', space=vmem, size = 0xc000, scoped, tag = 'input window, operand 7, single buffered']
    #allocation5 [shape = 's32[1]{0}', space=sflag, size = 0x4, scoped, tag = 'scoped memory for lstm_graves_forward.1']
    %17 = vsyncpa [#allocation5], 0
    // Predicated region
    $region2: #{lstm_graves_forward.1} parent=1 // pred_check
      _
    $region3: #{lstm_graves_forward.1} parent=1 // pred_check_branch
      %19 = sbr.rel (0) target = $region5
    $region4: #{lstm_graves_forward.1} parent=1 // pred_region
      _
    $region5: #{lstm_graves_forward.1} parent=1 // pred_fallthru
      _
    // Predicated region
    $region6: #{lstm_graves_forward.1} parent=1 // pred_check
      _
    $region7: #{lstm_graves_forward.1} parent=1 // pred_check_branch
      %21 = sbr.rel (0) target = $region9
    $region8: #{lstm_graves_forward.1} parent=1 // pred_region
      _
    $region9: #{lstm_graves_forward.1} parent=1 // pred_fallthru
      _
    // Predicated region
    $region10: #{lstm_graves_forward.1} parent=1 // pred_check
      _
    $region11: #{lstm_graves_forward.1} parent=1 // pred_check_branch
      %23 = sbr.rel (0) target = $region13
    $region12: #{lstm_graves_forward.1} parent=1 // pred_region
      _
    $region13: #{lstm_graves_forward.1} parent=1 // pred_fallthru
      _
    // Predicated region
    $region14: #{lstm_graves_forward.1} parent=1 // pred_check
      _
    $region15: #{lstm_graves_forward.1} parent=1 // pred_check_branch
      %25 = sbr.rel (0) target = $region17
    $region16: #{lstm_graves_forward.1} parent=1 // pred_region
      _
    $region17: #{lstm_graves_forward.1} parent=1 // pred_fallthru
      _
    // Predicated region
    $region18: #{lstm_graves_forward.1} parent=1 // pred_check
      _
    $region19: #{lstm_graves_forward.1} parent=1 // pred_check_branch
      %27 = sbr.rel (0) target = $region21
    $region20: #{lstm_graves_forward.1} parent=1 // pred_region
      _
    $region21: #{lstm_graves_forward.1} parent=1 // pred_fallthru
      _
    // Predicated region
    $region22: #{lstm_graves_forward.1} parent=1 // pred_check
      _
    $region23: #{lstm_graves_forward.1} parent=1 // pred_check_branch
      %29 = sbr.rel (0) target = $region25
    $region24: #{lstm_graves_forward.1} parent=1 // pred_region
      _
    $region25: #{lstm_graves_forward.1} parent=1 // pred_fallthru
      _
    // Predicated region
    $region26: #{lstm_graves_forward.1} parent=1 // pred_check
      _
    $region27: #{lstm_graves_forward.1} parent=1 // pred_check_branch
      %31 = sbr.rel (0) target = $region29
    $region28: #{lstm_graves_forward.1} parent=1 // pred_region
      _
    $region29: #{lstm_graves_forward.1} parent=1 // pred_fallthru
      _
    // Predicated region
    $region30: #{lstm_graves_forward.1} parent=1 // pred_check
      _
    $region31: #{lstm_graves_forward.1} parent=1 // pred_check_branch
      %33 = sbr.rel (0) target = $region33
    $region32: #{lstm_graves_forward.1} parent=1 // pred_region
      %s35 = ssub.s32 1536, 1536
      %36 = vsyncadd [#allocation5], %s35
      %s37 = sshll.u32 [#allocation4], 4
      %s38 = int_to_ptr.vmem [resolvable:$true] %s37
      %43 = dma.hbm_to_vmem [thread:$0]  %s7, 1536, %s38, [#allocation5], 128, 128, 8
    $region33: #{lstm_graves_forward.1} parent=1 // pred_fallthru
      _
    // Predicated region
    $region34: #{lstm_graves_forward.1} parent=1 // pred_check
      _
    $region35: #{lstm_graves_forward.1} parent=1 // pred_check_branch
      %45 = sbr.rel (0) target = $region37
    $region36: #{lstm_graves_forward.1} parent=1 // pred_region
      _
    $region37: #{lstm_graves_forward.1} parent=1 // pred_fallthru
      _
    // Predicated region
    $region38: #{lstm_graves_forward.1} parent=1 // pred_check
      _
    $region39: #{lstm_graves_forward.1} parent=1 // pred_check_branch
      %47 = sbr.rel (0) target = $region41
    $region40: #{lstm_graves_forward.1} parent=1 // pred_region
      %48 = dma.done [#allocation5], 1536
    $region41: #{lstm_graves_forward.1} parent=1 // pred_fallthru
      _
    %v49 = vld [vmem:[%s0] sm:$0xff]
    %v50 = vld [vmem:[%s0 + $0x8] sm:$0xff]
    %v51 = vld [vmem:[%s0 + $0x10] sm:$0xff]
    %v52 = vld [vmem:[%s0 + $0x18] sm:$0xff]
    %v53 = vld [vmem:[%s0 + $0x20] sm:$0xff]
    %v54 = vld [vmem:[%s0 + $0x28] sm:$0xff]
    %v55 = vld [vmem:[%s0 + $0x30] sm:$0xff]
    %v56 = vld [vmem:[%s0 + $0x38] sm:$0xff]
    %v57 = vld [vmem:[%s3] sm:$0x77]
    %v58 = vld [vmem:[%s3 + $0x8] sm:$0x7]
    %v59 = vld [vmem:[%s6] sm:$0x7]
    %v61 = vlaneseq
    %v62 = vshrl.u32 %v61, 7
    %v63 = vsub.s32 0, %v62
    %v64 = vrot.slane %v59, %v63
    %v65 = vlaneseq
    %v66 = vshrl.u32 %v65, 7
    %v67 = vsub.s32 1, %v66
    %v68 = vrot.slane %v59, %v67
    %v69 = vlaneseq
    %v70 = vshrl.u32 %v69, 7
    %v71 = vsub.s32 2, %v70
    %v72 = vrot.slane %v59, %v71
    %v78 = vcombine.high %v57, %v57
    %vm79 = vcmask 23552
    %v81 = vsel %vm79, %v49, 0
    %v84 = vsel %vm79, %v50, 0
    %v87 = vsel %vm79, %v51, 0
    %v90 = vsel %vm79, %v52, 0
    %v93 = vsel %vm79, %v53, 0
    %v96 = vsel %vm79, %v54, 0
    %v99 = vsel %vm79, %v55, 0
    %v102 = vsel %vm79, %v56, 0
    %vm104 = vcmask 1042432
    %v105 = vsel %vm104, %v57, 0
    %v107 = vsel %vm104, %v78, 0
    %v109 = vsel %vm104, %v58, 0
    %111 = vmatprep.subr.mxu0 0.0
    %112 = vmatpush1.msra.mxu0 0.0
    %113 = vmatprep.subr.mxu0 0.0
    %114 = vmatpush1.msra.mxu0 0.0
    %115 = vmatprep.subr.mxu0 0.0
    %116 = vmatpush1.msra.mxu0 0.0
    %117 = vmatprep.subr.mxu0 0.0
    %118 = vmatpush1.msra.mxu0 0.0
    %119 = vmatprep.subr.mxu0 0.0
    %120 = vmatpush1.msra.mxu0 0.0
    %121 = vmatprep.subr.mxu0 0.0
    %122 = vmatpush1.msra.mxu0 0.0
    %123 = vmatprep.subr.mxu0 0.0
    %124 = vmatpush1.msra.mxu0 0.0
    %125 = vmatprep.subr.mxu0 0.0
    %126 = vmatpush1.msra.mxu0 0.0
    %127 = vmatprep.subr.mxu0 0.0
    %128 = vmatpush1.msra.mxu0 0.0
    %129 = vmatprep.subr.mxu0 0.0
    %130 = vmatpush1.msra.mxu0 0.0
    %131 = vmatprep.subr.mxu0 0.0
    %132 = vmatpush1.msra.mxu0 0.0
    %133 = vmatprep.subr.mxu0 0.0
    %134 = vmatpush1.msra.mxu0 0.0
    %135 = vmatprep.subr.mxu0 0.0
    %136 = vmatpush1.msra.mxu0 0.0
    %137 = vmatprep.subr.mxu0 0.0
    %138 = vmatpush1.msra.mxu0 0.0
    %139 = vmatprep.subr.mxu0 0.0
    %140 = vmatpush1.msra.mxu0 0.0
    %141 = vmatprep.subr.mxu0 %v107
    %142 = vmatpush1.msra.mxu0 %v105
    %143 = vmatprep.subr.mxu0 0.0
    %144 = vmatpush2.msra.mxu0 0.0
    %145 = vmatprep.subr.mxu0 0.0
    %146 = vmatpush2.msra.mxu0 0.0
    %147 = vmatprep.subr.mxu0 0.0
    %148 = vmatpush2.msra.mxu0 0.0
    %149 = vmatprep.subr.mxu0 0.0
    %150 = vmatpush2.msra.mxu0 0.0
    %151 = vmatprep.subr.mxu0 0.0
    %152 = vmatpush2.msra.mxu0 0.0
    %153 = vmatprep.subr.mxu0 0.0
    %154 = vmatpush2.msra.mxu0 0.0
    %155 = vmatprep.subr.mxu0 0.0
    %156 = vmatpush2.msra.mxu0 0.0
    %157 = vmatprep.subr.mxu0 0.0
    %158 = vmatpush2.msra.mxu0 0.0
    %159 = vmatprep.subr.mxu0 0.0
    %160 = vmatpush2.msra.mxu0 0.0
    %161 = vmatprep.subr.mxu0 0.0
    %162 = vmatpush2.msra.mxu0 0.0
    %163 = vmatprep.subr.mxu0 0.0
    %164 = vmatpush2.msra.mxu0 0.0
    %165 = vmatprep.subr.mxu0 0.0
    %166 = vmatpush2.msra.mxu0 0.0
    %167 = vmatprep.subr.mxu0 0.0
    %168 = vmatpush2.msra.mxu0 0.0
    %169 = vmatprep.subr.mxu0 0.0
    %170 = vmatpush2.msra.mxu0 0.0
    %171 = vmatprep.subr.mxu0 0.0
    %172 = vmatpush2.msra.mxu0 0.0
    %173 = vmatprep.subr.mxu0 0.0
    %174 = vmatpush2.msra.mxu0 0.0
    %175 = vmatprep.mubr.f32.mxu0 0.0
    %176 = vmatmul.mubr.f32.gmra.mxu0 %v81
    %v177 = vpop.f32.mrf.mxu0
    %v178 = vadd.f32 %v64, %v177
    %v179 = vpop.f32.mrf.mxu0
    %v180 = vadd.f32 %v68, %v179
    %181 = vmatprep.mubr.f32.mxu0 0.0
    %182 = vmatmul.mubr.f32.gmra.mxu0 %v84
    %v183 = vpop.f32.mrf.mxu0
    %v184 = vadd.f32 %v64, %v183
    %v185 = vpop.f32.mrf.mxu0
    %v186 = vadd.f32 %v68, %v185
    %187 = vmatprep.mubr.f32.mxu0 0.0
    %188 = vmatmul.mubr.f32.gmra.mxu0 %v87
    %v189 = vpop.f32.mrf.mxu0
    %v190 = vadd.f32 %v64, %v189
    %v191 = vpop.f32.mrf.mxu0
    %v192 = vadd.f32 %v68, %v191
    %193 = vmatprep.mubr.f32.mxu0 0.0
    %194 = vmatmul.mubr.f32.gmra.mxu0 %v90
    %v195 = vpop.f32.mrf.mxu0
    %v196 = vadd.f32 %v64, %v195
    %v197 = vpop.f32.mrf.mxu0
    %v198 = vadd.f32 %v68, %v197
    %199 = vmatprep.mubr.f32.mxu0 0.0
    %200 = vmatmul.mubr.f32.gmra.mxu0 %v93
    %v201 = vpop.f32.mrf.mxu0
    %v202 = vadd.f32 %v64, %v201
    %v203 = vpop.f32.mrf.mxu0
    %v204 = vadd.f32 %v68, %v203
    %205 = vmatprep.mubr.f32.mxu0 0.0
    %206 = vmatmul.mubr.f32.gmra.mxu0 %v96
    %v207 = vpop.f32.mrf.mxu0
    %v208 = vadd.f32 %v64, %v207
    %v209 = vpop.f32.mrf.mxu0
    %v210 = vadd.f32 %v68, %v209
    %211 = vmatprep.mubr.f32.mxu0 0.0
    %212 = vmatmul.mubr.f32.gmra.mxu0 %v99
    %v213 = vpop.f32.mrf.mxu0
    %v214 = vadd.f32 %v64, %v213
    %v215 = vpop.f32.mrf.mxu0
    %v216 = vadd.f32 %v68, %v215
    %217 = vmatprep.mubr.f32.mxu0 0.0
    %218 = vmatmul.mubr.f32.gmra.mxu0 %v102
    %v219 = vpop.f32.mrf.mxu0
    %v220 = vadd.f32 %v64, %v219
    %v221 = vpop.f32.mrf.mxu0
    %v222 = vadd.f32 %v68, %v221
    %223 = vdwg.mxu0
    %224 = vmatprep.subr.mxu0 0.0
    %225 = vmatpush1.msra.mxu0 0.0
    %226 = vmatprep.subr.mxu0 0.0
    %227 = vmatpush1.msra.mxu0 0.0
    %228 = vmatprep.subr.mxu0 0.0
    %229 = vmatpush1.msra.mxu0 0.0
    %230 = vmatprep.subr.mxu0 0.0
    %231 = vmatpush1.msra.mxu0 0.0
    %232 = vmatprep.subr.mxu0 0.0
    %233 = vmatpush1.msra.mxu0 0.0
    %234 = vmatprep.subr.mxu0 0.0
    %235 = vmatpush1.msra.mxu0 0.0
    %236 = vmatprep.subr.mxu0 0.0
    %237 = vmatpush1.msra.mxu0 0.0
    %238 = vmatprep.subr.mxu0 0.0
    %239 = vmatpush1.msra.mxu0 0.0
    %240 = vmatprep.subr.mxu0 0.0
    %241 = vmatpush1.msra.mxu0 0.0
    %242 = vmatprep.subr.mxu0 0.0
    %243 = vmatpush1.msra.mxu0 0.0
    %244 = vmatprep.subr.mxu0 0.0
    %245 = vmatpush1.msra.mxu0 0.0
    %246 = vmatprep.subr.mxu0 0.0
    %247 = vmatpush1.msra.mxu0 0.0
    %248 = vmatprep.subr.mxu0 0.0
    %249 = vmatpush1.msra.mxu0 0.0
    %250 = vmatprep.subr.mxu0 0.0
    %251 = vmatpush1.msra.mxu0 0.0
    %252 = vmatprep.subr.mxu0 0.0
    %253 = vmatpush1.msra.mxu0 0.0
    %254 = vmatprep.subr.mxu0 0.0
    %255 = vmatpush1.msra.mxu0 %v109
    %256 = vmatprep.subr.mxu0 0.0
    %257 = vmatpush2.msra.mxu0 0.0
    %258 = vmatprep.subr.mxu0 0.0
    %259 = vmatpush2.msra.mxu0 0.0
    %260 = vmatprep.subr.mxu0 0.0
    %261 = vmatpush2.msra.mxu0 0.0
    %262 = vmatprep.subr.mxu0 0.0
    %263 = vmatpush2.msra.mxu0 0.0
    %264 = vmatprep.subr.mxu0 0.0
    %265 = vmatpush2.msra.mxu0 0.0
    %266 = vmatprep.subr.mxu0 0.0
    %267 = vmatpush2.msra.mxu0 0.0
    %268 = vmatprep.subr.mxu0 0.0
    %269 = vmatpush2.msra.mxu0 0.0
    %270 = vmatprep.subr.mxu0 0.0
    %271 = vmatpush2.msra.mxu0 0.0
    %272 = vmatprep.subr.mxu0 0.0
    %273 = vmatpush2.msra.mxu0 0.0
    %274 = vmatprep.subr.mxu0 0.0
    %275 = vmatpush2.msra.mxu0 0.0
    %276 = vmatprep.subr.mxu0 0.0
    %277 = vmatpush2.msra.mxu0 0.0
    %278 = vmatprep.subr.mxu0 0.0
    %279 = vmatpush2.msra.mxu0 0.0
    %280 = vmatprep.subr.mxu0 0.0
    %281 = vmatpush2.msra.mxu0 0.0
    %282 = vmatprep.subr.mxu0 0.0
    %283 = vmatpush2.msra.mxu0 0.0
    %284 = vmatprep.subr.mxu0 0.0
    %285 = vmatpush2.msra.mxu0 0.0
    %286 = vmatprep.subr.mxu0 0.0
    %287 = vmatpush2.msra.mxu0 0.0
    %288 = vmatprep.mubr.f32.mxu0 0.0
    %289 = vmatmul.mubr.f32.gmra.mxu0 %v81
    %v290 = vpop.f32.mrf.mxu0
    %v291 = vadd.f32 %v72, %v290
    %v292 = vpop.f32.mrf.mxu0
    %293 = vmatprep.mubr.f32.mxu0 0.0
    %294 = vmatmul.mubr.f32.gmra.mxu0 %v84
    %v295 = vpop.f32.mrf.mxu0
    %v296 = vadd.f32 %v72, %v295
    %v297 = vpop.f32.mrf.mxu0
    %298 = vmatprep.mubr.f32.mxu0 0.0
    %299 = vmatmul.mubr.f32.gmra.mxu0 %v87
    %v300 = vpop.f32.mrf.mxu0
    %v301 = vadd.f32 %v72, %v300
    %v302 = vpop.f32.mrf.mxu0
    %303 = vmatprep.mubr.f32.mxu0 0.0
    %304 = vmatmul.mubr.f32.gmra.mxu0 %v90
    %v305 = vpop.f32.mrf.mxu0
    %v306 = vadd.f32 %v72, %v305
    %v307 = vpop.f32.mrf.mxu0
    %308 = vmatprep.mubr.f32.mxu0 0.0
    %309 = vmatmul.mubr.f32.gmra.mxu0 %v93
    %v310 = vpop.f32.mrf.mxu0
    %v311 = vadd.f32 %v72, %v310
    %v312 = vpop.f32.mrf.mxu0
    %313 = vmatprep.mubr.f32.mxu0 0.0
    %314 = vmatmul.mubr.f32.gmra.mxu0 %v96
    %v315 = vpop.f32.mrf.mxu0
    %v316 = vadd.f32 %v72, %v315
    %v317 = vpop.f32.mrf.mxu0
    %318 = vmatprep.mubr.f32.mxu0 0.0
    %319 = vmatmul.mubr.f32.gmra.mxu0 %v99
    %v320 = vpop.f32.mrf.mxu0
    %v321 = vadd.f32 %v72, %v320
    %v322 = vpop.f32.mrf.mxu0
    %323 = vmatprep.mubr.f32.mxu0 0.0
    %324 = vmatmul.mubr.f32.gmra.mxu0 %v102
    %v325 = vpop.f32.mrf.mxu0
    %v326 = vadd.f32 %v72, %v325
    %v327 = vpop.f32.mrf.mxu0
    %328 = vdwg.mxu0
    %329 = vst [vmem:[#allocation2] sm:$0xff] %v178
    %330 = vst [vmem:[#allocation2 + $0x8] sm:$0xff] %v180
    %331 = vst [vmem:[#allocation2 + $0x10] sm:$0xff] %v291
    %332 = vst [vmem:[#allocation2 + $0x18] sm:$0xff] %v184
    %333 = vst [vmem:[#allocation2 + $0x20] sm:$0xff] %v186
    %334 = vst [vmem:[#allocation2 + $0x28] sm:$0xff] %v296
    %335 = vst [vmem:[#allocation2 + $0x30] sm:$0xff] %v190
    %336 = vst [vmem:[#allocation2 + $0x38] sm:$0xff] %v192
    %337 = vst [vmem:[#allocation2 + $0x40] sm:$0xff] %v301
    %338 = vst [vmem:[#allocation2 + $0x48] sm:$0xff] %v196
    %339 = vst [vmem:[#allocation2 + $0x50] sm:$0xff] %v198
    %340 = vst [vmem:[#allocation2 + $0x58] sm:$0xff] %v306
    %341 = vst [vmem:[#allocation2 + $0x60] sm:$0xff] %v202
    %342 = vst [vmem:[#allocation2 + $0x68] sm:$0xff] %v204
    %343 = vst [vmem:[#allocation2 + $0x70] sm:$0xff] %v311
    %344 = vst [vmem:[#allocation2 + $0x78] sm:$0xff] %v208
    %345 = vst [vmem:[#allocation2 + $0x80] sm:$0xff] %v210
    %346 = vst [vmem:[#allocation2 + $0x88] sm:$0xff] %v316
    %347 = vst [vmem:[#allocation2 + $0x90] sm:$0xff] %v214
    %348 = vst [vmem:[#allocation2 + $0x98] sm:$0xff] %v216
    %349 = vst [vmem:[#allocation2 + $0xa0] sm:$0xff] %v321
    %350 = vst [vmem:[#allocation2 + $0xa8] sm:$0xff] %v220
    %351 = vst [vmem:[#allocation2 + $0xb0] sm:$0xff] %v222
    %352 = vst [vmem:[#allocation2 + $0xb8] sm:$0xff] %v326
    %v353 = vld [vmem:[%s2] sm:$0xff]
    %v354 = vld [vmem:[%s1] sm:$0xff]
    %s355 = smul.u32 0, 3
    %s356 = smul.addr %s355, 8
    %s357 = scalar_lea.vmem [#allocation2], %s356
    %v358 = vld [vmem:[%s357] sm:$0xff]
    %v359 = vld [vmem:[%s357 + $0x8] sm:$0xff]
    %v360 = vld [vmem:[%s357 + $0x10] sm:$0xff]
    %v361 = vld [vmem:[%s4] sm:$0xff]
    %v362 = vld [vmem:[%s4 + $0x8] sm:$0xff]
    %v363 = vld [vmem:[%s4 + $0x10] sm:$0xff]
    %v364 = vld [vmem:[%s4 + $0x18] sm:$0xff]
    %v365 = vld [vmem:[%s4 + $0x20] sm:$0xff]
    %v366 = vld [vmem:[%s4 + $0x28] sm:$0xff]
    %v367 = vld [vmem:[%s4 + $0x30] sm:$0xff]
    %v368 = vld [vmem:[%s4 + $0x38] sm:$0xff]
    %v369 = vld [vmem:[%s4 + $0x40] sm:$0xff]
    %v370 = vld [vmem:[%s4 + $0x48] sm:$0xff]
    %v371 = vld [vmem:[%s4 + $0x50] sm:$0xff]
    %v372 = vld [vmem:[%s4 + $0x58] sm:$0xff]
    %v373 = vld [vmem:[%s4 + $0x60] sm:$0xff]
    %v374 = vld [vmem:[%s4 + $0x68] sm:$0xff]
    %v375 = vld [vmem:[%s4 + $0x70] sm:$0xff]
    %v376 = vld [vmem:[%s4 + $0x78] sm:$0xff]
    %v377 = vld [vmem:[%s4 + $0x80] sm:$0xff]
    %v378 = vld [vmem:[%s4 + $0x88] sm:$0xff]
    %v379 = vld [vmem:[%s4 + $0x90] sm:$0xff]
    %v380 = vld [vmem:[%s4 + $0x98] sm:$0xff]
    %v381 = vld [vmem:[%s4 + $0xa0] sm:$0xff]
    %v382 = vld [vmem:[%s4 + $0xa8] sm:$0xff]
    %v383 = vld [vmem:[%s4 + $0xb0] sm:$0xff]
    %v384 = vld [vmem:[%s4 + $0xb8] sm:$0xff]
    %v385 = vld [vmem:[%s4 + $0xc0] sm:$0xff]
    %v386 = vld [vmem:[%s4 + $0xc8] sm:$0xff]
    %v387 = vld [vmem:[%s4 + $0xd0] sm:$0xff]
    %v388 = vld [vmem:[%s4 + $0xd8] sm:$0xff]
    %v389 = vld [vmem:[%s4 + $0xe0] sm:$0xff]
    %v390 = vld [vmem:[%s4 + $0xe8] sm:$0xff]
    %v391 = vld [vmem:[%s4 + $0xf0] sm:$0xff]
    %v392 = vld [vmem:[%s4 + $0xf8] sm:$0xff]
    %v393 = vld [vmem:[%s4 + $0x100] sm:$0xff]
    %v394 = vld [vmem:[%s4 + $0x108] sm:$0xff]
    %v395 = vld [vmem:[%s4 + $0x110] sm:$0xff]
    %v396 = vld [vmem:[%s4 + $0x118] sm:$0xff]
    %vm397 = vcmask 785408
    %v399 = vsel %vm397, %v354, 0
    %401 = vmatprep.subr.mxu0 0.0
    %402 = vmatpush1.msra.mxu0 0.0
    %403 = vmatprep.subr.mxu0 0.0
    %404 = vmatpush1.msra.mxu0 0.0
    %405 = vmatprep.subr.mxu0 0.0
    %406 = vmatpush1.msra.mxu0 0.0
    %407 = vmatprep.subr.mxu0 0.0
    %408 = vmatpush1.msra.mxu0 0.0
    %409 = vmatprep.subr.mxu0 %v395
    %410 = vmatpush1.msra.mxu0 %v394
    %411 = vmatprep.subr.mxu0 %v392
    %412 = vmatpush1.msra.mxu0 %v391
    %413 = vmatprep.subr.mxu0 %v389
    %414 = vmatpush1.msra.mxu0 %v388
    %415 = vmatprep.subr.mxu0 %v386
    %416 = vmatpush1.msra.mxu0 %v385
    %417 = vmatprep.subr.mxu0 %v383
    %418 = vmatpush1.msra.mxu0 %v382
    %419 = vmatprep.subr.mxu0 %v380
    %420 = vmatpush1.msra.mxu0 %v379
    %421 = vmatprep.subr.mxu0 %v377
    %422 = vmatpush1.msra.mxu0 %v376
    %423 = vmatprep.subr.mxu0 %v374
    %424 = vmatpush1.msra.mxu0 %v373
    %425 = vmatprep.subr.mxu0 %v371
    %426 = vmatpush1.msra.mxu0 %v370
    %427 = vmatprep.subr.mxu0 %v368
    %428 = vmatpush1.msra.mxu0 %v367
    %429 = vmatprep.subr.mxu0 %v365
    %430 = vmatpush1.msra.mxu0 %v364
    %431 = vmatprep.subr.mxu0 %v362
    %432 = vmatpush1.msra.mxu0 %v361
    %433 = vmatprep.subr.mxu0 0.0
    %434 = vmatpush2.msra.mxu0 0.0
    %435 = vmatprep.subr.mxu0 0.0
    %436 = vmatpush2.msra.mxu0 0.0
    %437 = vmatprep.subr.mxu0 0.0
    %438 = vmatpush2.msra.mxu0 0.0
    %439 = vmatprep.subr.mxu0 0.0
    %440 = vmatpush2.msra.mxu0 0.0
    %441 = vmatprep.subr.mxu0 0.0
    %442 = vmatpush2.msra.mxu0 0.0
    %443 = vmatprep.subr.mxu0 0.0
    %444 = vmatpush2.msra.mxu0 0.0
    %445 = vmatprep.subr.mxu0 0.0
    %446 = vmatpush2.msra.mxu0 0.0
    %447 = vmatprep.subr.mxu0 0.0
    %448 = vmatpush2.msra.mxu0 0.0
    %449 = vmatprep.subr.mxu0 0.0
    %450 = vmatpush2.msra.mxu0 0.0
    %451 = vmatprep.subr.mxu0 0.0
    %452 = vmatpush2.msra.mxu0 0.0
    %453 = vmatprep.subr.mxu0 0.0
    %454 = vmatpush2.msra.mxu0 0.0
    %455 = vmatprep.subr.mxu0 0.0
    %456 = vmatpush2.msra.mxu0 0.0
    %457 = vmatprep.subr.mxu0 0.0
    %458 = vmatpush2.msra.mxu0 0.0
    %459 = vmatprep.subr.mxu0 0.0
    %460 = vmatpush2.msra.mxu0 0.0
    %461 = vmatprep.subr.mxu0 0.0
    %462 = vmatpush2.msra.mxu0 0.0
    %463 = vmatprep.subr.mxu0 0.0
    %464 = vmatpush2.msra.mxu0 0.0
    %465 = vmatprep.mubr.f32.mxu0 0.0
    %466 = vmatmul.mubr.f32.gmra.mxu0 %v399
    %v467 = vpop.f32.mrf.mxu0
    %v468 = vadd.f32 0.0, %v467
    %v469 = vpop.f32.mrf.mxu0
    %v470 = vadd.f32 0.0, %v469
    %471 = vdwg.mxu0
    %472 = vmatprep.subr.mxu0 0.0
    %473 = vmatpush1.msra.mxu0 0.0
    %474 = vmatprep.subr.mxu0 0.0
    %475 = vmatpush1.msra.mxu0 0.0
    %476 = vmatprep.subr.mxu0 0.0
    %477 = vmatpush1.msra.mxu0 0.0
    %478 = vmatprep.subr.mxu0 0.0
    %479 = vmatpush1.msra.mxu0 0.0
    %480 = vmatprep.subr.mxu0 0.0
    %481 = vmatpush1.msra.mxu0 %v396
    %482 = vmatprep.subr.mxu0 0.0
    %483 = vmatpush1.msra.mxu0 %v393
    %484 = vmatprep.subr.mxu0 0.0
    %485 = vmatpush1.msra.mxu0 %v390
    %486 = vmatprep.subr.mxu0 0.0
    %487 = vmatpush1.msra.mxu0 %v387
    %488 = vmatprep.subr.mxu0 0.0
    %489 = vmatpush1.msra.mxu0 %v384
    %490 = vmatprep.subr.mxu0 0.0
    %491 = vmatpush1.msra.mxu0 %v381
    %492 = vmatprep.subr.mxu0 0.0
    %493 = vmatpush1.msra.mxu0 %v378
    %494 = vmatprep.subr.mxu0 0.0
    %495 = vmatpush1.msra.mxu0 %v375
    %496 = vmatprep.subr.mxu0 0.0
    %497 = vmatpush1.msra.mxu0 %v372
    %498 = vmatprep.subr.mxu0 0.0
    %499 = vmatpush1.msra.mxu0 %v369
    %500 = vmatprep.subr.mxu0 0.0
    %501 = vmatpush1.msra.mxu0 %v366
    %502 = vmatprep.subr.mxu0 0.0
    %503 = vmatpush1.msra.mxu0 %v363
    %504 = vmatprep.subr.mxu0 0.0
    %505 = vmatpush2.msra.mxu0 0.0
    %506 = vmatprep.subr.mxu0 0.0
    %507 = vmatpush2.msra.mxu0 0.0
    %508 = vmatprep.subr.mxu0 0.0
    %509 = vmatpush2.msra.mxu0 0.0
    %510 = vmatprep.subr.mxu0 0.0
    %511 = vmatpush2.msra.mxu0 0.0
    %512 = vmatprep.subr.mxu0 0.0
    %513 = vmatpush2.msra.mxu0 0.0
    %514 = vmatprep.subr.mxu0 0.0
    %515 = vmatpush2.msra.mxu0 0.0
    %516 = vmatprep.subr.mxu0 0.0
    %517 = vmatpush2.msra.mxu0 0.0
    %518 = vmatprep.subr.mxu0 0.0
    %519 = vmatpush2.msra.mxu0 0.0
    %520 = vmatprep.subr.mxu0 0.0
    %521 = vmatpush2.msra.mxu0 0.0
    %522 = vmatprep.subr.mxu0 0.0
    %523 = vmatpush2.msra.mxu0 0.0
    %524 = vmatprep.subr.mxu0 0.0
    %525 = vmatpush2.msra.mxu0 0.0
    %526 = vmatprep.subr.mxu0 0.0
    %527 = vmatpush2.msra.mxu0 0.0
    %528 = vmatprep.subr.mxu0 0.0
    %529 = vmatpush2.msra.mxu0 0.0
    %530 = vmatprep.subr.mxu0 0.0
    %531 = vmatpush2.msra.mxu0 0.0
    %532 = vmatprep.subr.mxu0 0.0
    %533 = vmatpush2.msra.mxu0 0.0
    %534 = vmatprep.subr.mxu0 0.0
    %535 = vmatpush2.msra.mxu0 0.0
    %536 = vmatprep.mubr.f32.mxu0 0.0
    %537 = vmatmul.mubr.f32.gmra.mxu0 %v399
    %v538 = vpop.f32.mrf.mxu0
    %v539 = vadd.f32 0.0, %v538
    %v540 = vpop.f32.mrf.mxu0
    %541 = vdwg.mxu0
    %v542 = vadd.f32 %v358, %v468
    %v543 = vadd.f32 %v359, %v470
    %v544 = vadd.f32 %v360, %v539
    %v545 = vxor.u32 %v542, 2147483648
    %v546 = vmul.f32 %v545, 1.442695
    %v547 = vpow.pop %v546
    %v548 = vadd.f32 %v547, 1.0
    %v549 = vrcp.pop %v548
    %v550 = vmul.f32 1.0, %v549
    %v551 = vtanh.pop %v542
    %553 = vrot.lane.b32.xlu0 %v353, 32
    %v554 = vpop.permute.xlu0 %553
    %v556 = vmul.f32 %v550, %v554
    %558 = vrot.lane.b32.xlu0 %v551, 64
    %v559 = vpop.permute.xlu0 %558
    %v561 = vmul.f32 %v550, %v559
    %563 = vrot.lane.b32.xlu0 %v561, 32
    %v564 = vpop.permute.xlu0 %563
    %v566 = vadd.f32 %v556, %v564
    %v567 = vtanh.pop %v566
    %569 = vrot.lane.b32.xlu0 %v567, 64
    %v570 = vpop.permute.xlu0 %569
    %v572 = vmul.f32 %v550, %v570
    %v573 = vld [vmem:[%s5] sm:$0xff]
    %v574 = vld [vmem:[%s5 + $0x8] sm:$0xff]
    %v575 = vld [vmem:[%s5 + $0x10] sm:$0xff]
    %v576 = vld [vmem:[%s5 + $0x18] sm:$0xff]
    %578 = vrot.lane.b32.xlu0 %v572, 32
    %v579 = vpop.permute.xlu0 %578
    %vm580 = vcmask 261120
    %v581 = vsel %vm580, %v579, 0
    %583 = vmatprep.subr.mxu0 0.0
    %584 = vmatpush1.msra.mxu0 0.0
    %585 = vmatprep.subr.mxu0 0.0
    %586 = vmatpush1.msra.mxu0 0.0
    %587 = vmatprep.subr.mxu0 0.0
    %588 = vmatpush1.msra.mxu0 0.0
    %589 = vmatprep.subr.mxu0 0.0
    %590 = vmatpush1.msra.mxu0 0.0
    %591 = vmatprep.subr.mxu0 0.0
    %592 = vmatpush1.msra.mxu0 0.0
    %593 = vmatprep.subr.mxu0 0.0
    %594 = vmatpush1.msra.mxu0 0.0
    %595 = vmatprep.subr.mxu0 0.0
    %596 = vmatpush1.msra.mxu0 0.0
    %597 = vmatprep.subr.mxu0 0.0
    %598 = vmatpush1.msra.mxu0 0.0
    %599 = vmatprep.subr.mxu0 0.0
    %600 = vmatpush1.msra.mxu0 0.0
    %601 = vmatprep.subr.mxu0 0.0
    %602 = vmatpush1.msra.mxu0 0.0
    %603 = vmatprep.subr.mxu0 0.0
    %604 = vmatpush1.msra.mxu0 0.0
    %605 = vmatprep.subr.mxu0 0.0
    %606 = vmatpush1.msra.mxu0 0.0
    %607 = vmatprep.subr.mxu0 0.0
    %608 = vmatpush1.msra.mxu0 %v576
    %609 = vmatprep.subr.mxu0 0.0
    %610 = vmatpush1.msra.mxu0 %v575
    %611 = vmatprep.subr.mxu0 0.0
    %612 = vmatpush1.msra.mxu0 %v574
    %613 = vmatprep.subr.mxu0 0.0
    %614 = vmatpush1.msra.mxu0 %v573
    %615 = vmatprep.subr.mxu0 0.0
    %616 = vmatpush2.msra.mxu0 0.0
    %617 = vmatprep.subr.mxu0 0.0
    %618 = vmatpush2.msra.mxu0 0.0
    %619 = vmatprep.subr.mxu0 0.0
    %620 = vmatpush2.msra.mxu0 0.0
    %621 = vmatprep.subr.mxu0 0.0
    %622 = vmatpush2.msra.mxu0 0.0
    %623 = vmatprep.subr.mxu0 0.0
    %624 = vmatpush2.msra.mxu0 0.0
    %625 = vmatprep.subr.mxu0 0.0
    %626 = vmatpush2.msra.mxu0 0.0
    %627 = vmatprep.subr.mxu0 0.0
    %628 = vmatpush2.msra.mxu0 0.0
    %629 = vmatprep.subr.mxu0 0.0
    %630 = vmatpush2.msra.mxu0 0.0
    %631 = vmatprep.subr.mxu0 0.0
    %632 = vmatpush2.msra.mxu0 0.0
    %633 = vmatprep.subr.mxu0 0.0
    %634 = vmatpush2.msra.mxu0 0.0
    %635 = vmatprep.subr.mxu0 0.0
    %636 = vmatpush2.msra.mxu0 0.0
    %637 = vmatprep.subr.mxu0 0.0
    %638 = vmatpush2.msra.mxu0 0.0
    %639 = vmatprep.subr.mxu0 0.0
    %640 = vmatpush2.msra.mxu0 0.0
    %641 = vmatprep.subr.mxu0 0.0
    %642 = vmatpush2.msra.mxu0 0.0
    %643 = vmatprep.subr.mxu0 0.0
    %644 = vmatpush2.msra.mxu0 0.0
    %645 = vmatprep.subr.mxu0 0.0
    %646 = vmatpush2.msra.mxu0 0.0
    %647 = vmatprep.mubr.f32.mxu0 0.0
    %648 = vmatmul.mubr.f32.gmra.mxu0 %v581
    %v649 = vpop.f32.mrf.mxu0
    %v650 = vadd.f32 0.0, %v649
    %v651 = vpop.f32.mrf.mxu0
    %652 = vdwg.mxu0
    %v653 = vadd.f32 %v543, %v650
    %v654 = vxor.u32 %v653, 2147483648
    %v655 = vmul.f32 %v654, 1.442695
    %v656 = vpow.pop %v655
    %v657 = vadd.f32 %v656, 1.0
    %v658 = vrcp.pop %v657
    %v659 = vmul.f32 1.0, %v658
    %v660 = vtanh.pop %v653
    %v661 = vmul.f32 %v659, %v353
    %663 = vrot.lane.b32.xlu0 %v660, 64
    %v664 = vpop.permute.xlu0 %663
    %v666 = vmul.f32 %v659, %v664
    %668 = vrot.lane.b32.xlu0 %v666, 32
    %v669 = vpop.permute.xlu0 %668
    %v671 = vadd.f32 %v661, %v669
    %v672 = vtanh.pop %v671
    %674 = vrot.lane.b32.xlu0 %v672, 64
    %v675 = vpop.permute.xlu0 %674
    %v677 = vmul.f32 %v659, %v675
    %s678 = scalar_lea.vmem %s5, 32
    %v679 = vld [vmem:[%s678] sm:$0xff]
    %v680 = vld [vmem:[%s678 + $0x8] sm:$0xff]
    %v681 = vld [vmem:[%s678 + $0x10] sm:$0xff]
    %v682 = vld [vmem:[%s678 + $0x18] sm:$0xff]
    %684 = vrot.lane.b32.xlu0 %v677, 32
    %v685 = vpop.permute.xlu0 %684
    %v686 = vsel %vm580, %v685, 0
    %688 = vmatprep.subr.mxu0 0.0
    %689 = vmatpush1.msra.mxu0 0.0
    %690 = vmatprep.subr.mxu0 0.0
    %691 = vmatpush1.msra.mxu0 0.0
    %692 = vmatprep.subr.mxu0 0.0
    %693 = vmatpush1.msra.mxu0 0.0
    %694 = vmatprep.subr.mxu0 0.0
    %695 = vmatpush1.msra.mxu0 0.0
    %696 = vmatprep.subr.mxu0 0.0
    %697 = vmatpush1.msra.mxu0 0.0
    %698 = vmatprep.subr.mxu0 0.0
    %699 = vmatpush1.msra.mxu0 0.0
    %700 = vmatprep.subr.mxu0 0.0
    %701 = vmatpush1.msra.mxu0 0.0
    %702 = vmatprep.subr.mxu0 0.0
    %703 = vmatpush1.msra.mxu0 0.0
    %704 = vmatprep.subr.mxu0 0.0
    %705 = vmatpush1.msra.mxu0 0.0
    %706 = vmatprep.subr.mxu0 0.0
    %707 = vmatpush1.msra.mxu0 0.0
    %708 = vmatprep.subr.mxu0 0.0
    %709 = vmatpush1.msra.mxu0 0.0
    %710 = vmatprep.subr.mxu0 0.0
    %711 = vmatpush1.msra.mxu0 0.0
    %712 = vmatprep.subr.mxu0 0.0
    %713 = vmatpush1.msra.mxu0 %v682
    %714 = vmatprep.subr.mxu0 0.0
    %715 = vmatpush1.msra.mxu0 %v681
    %716 = vmatprep.subr.mxu0 0.0
    %717 = vmatpush1.msra.mxu0 %v680
    %718 = vmatprep.subr.mxu0 0.0
    %719 = vmatpush1.msra.mxu0 %v679
    %720 = vmatprep.subr.mxu0 0.0
    %721 = vmatpush2.msra.mxu0 0.0
    %722 = vmatprep.subr.mxu0 0.0
    %723 = vmatpush2.msra.mxu0 0.0
    %724 = vmatprep.subr.mxu0 0.0
    %725 = vmatpush2.msra.mxu0 0.0
    %726 = vmatprep.subr.mxu0 0.0
    %727 = vmatpush2.msra.mxu0 0.0
    %728 = vmatprep.subr.mxu0 0.0
    %729 = vmatpush2.msra.mxu0 0.0
    %730 = vmatprep.subr.mxu0 0.0
    %731 = vmatpush2.msra.mxu0 0.0
    %732 = vmatprep.subr.mxu0 0.0
    %733 = vmatpush2.msra.mxu0 0.0
    %734 = vmatprep.subr.mxu0 0.0
    %735 = vmatpush2.msra.mxu0 0.0
    %736 = vmatprep.subr.mxu0 0.0
    %737 = vmatpush2.msra.mxu0 0.0
    %738 = vmatprep.subr.mxu0 0.0
    %739 = vmatpush2.msra.mxu0 0.0
    %740 = vmatprep.subr.mxu0 0.0
    %741 = vmatpush2.msra.mxu0 0.0
    %742 = vmatprep.subr.mxu0 0.0
    %743 = vmatpush2.msra.mxu0 0.0
    %744 = vmatprep.subr.mxu0 0.0
    %745 = vmatpush2.msra.mxu0 0.0
    %746 = vmatprep.subr.mxu0 0.0
    %747 = vmatpush2.msra.mxu0 0.0
    %748 = vmatprep.subr.mxu0 0.0
    %749 = vmatpush2.msra.mxu0 0.0
    %750 = vmatprep.subr.mxu0 0.0
    %751 = vmatpush2.msra.mxu0 0.0
    %752 = vmatprep.mubr.f32.mxu0 0.0
    %753 = vmatmul.mubr.f32.gmra.mxu0 %v686
    %v754 = vpop.f32.mrf.mxu0
    %v755 = vadd.f32 0.0, %v754
    %v756 = vpop.f32.mrf.mxu0
    %757 = vdwg.mxu0
    %v758 = vadd.f32 %v544, %v755
    %v759 = vxor.u32 %v758, 2147483648
    %v760 = vmul.f32 %v759, 1.442695
    %v761 = vpow.pop %v760
    %v762 = vadd.f32 %v761, 1.0
    %v763 = vrcp.pop %v762
    %v764 = vmul.f32 1.0, %v763
    %v765 = vtanh.pop %v758
    %766 = vrot.lane.b32.xlu0 %v353, 96
    %v767 = vpop.permute.xlu0 %766
    %v769 = vmul.f32 %v764, %v767
    %771 = vrot.lane.b32.xlu0 %v765, 64
    %v772 = vpop.permute.xlu0 %771
    %v774 = vmul.f32 %v764, %v772
    %776 = vrot.lane.b32.xlu0 %v774, 32
    %v777 = vpop.permute.xlu0 %776
    %v779 = vadd.f32 %v769, %v777
    %v780 = vtanh.pop %v779
    %782 = vrot.lane.b32.xlu0 %v780, 64
    %v783 = vpop.permute.xlu0 %782
    %v785 = vmul.f32 %v764, %v783
    %787 = vrot.lane.b32.xlu0 %v677, 64
    %v788 = vpop.permute.xlu0 %787
    %791 = vrot.lane.b32.xlu0 %v785, 96
    %v792 = vpop.permute.xlu0 %791
    %v794 = vsel %vm580, %v579, %v788
    %vm795 = vcmask 523264
    %v796 = vsel %vm795, %v794, %v792
    %797 = vst.msk [vmem:[#allocation3] sm:$0xff] %vm397, %v796
    %s798 = smul.u32 1, 3
    %s799 = smul.addr %s798, 8
    %s800 = scalar_lea.vmem [#allocation2], %s799
    %v801 = vld [vmem:[%s800] sm:$0xff]
    %v802 = vld [vmem:[%s800 + $0x8] sm:$0xff]
    %v803 = vld [vmem:[%s800 + $0x10] sm:$0xff]
    %v804 = vld [vmem:[%s4] sm:$0xff]
    %v805 = vld [vmem:[%s4 + $0x8] sm:$0xff]
    %v806 = vld [vmem:[%s4 + $0x10] sm:$0xff]
    %v807 = vld [vmem:[%s4 + $0x18] sm:$0xff]
    %v808 = vld [vmem:[%s4 + $0x20] sm:$0xff]
    %v809 = vld [vmem:[%s4 + $0x28] sm:$0xff]
    %v810 = vld [vmem:[%s4 + $0x30] sm:$0xff]
    %v811 = vld [vmem:[%s4 + $0x38] sm:$0xff]
    %v812 = vld [vmem:[%s4 + $0x40] sm:$0xff]
    %v813 = vld [vmem:[%s4 + $0x48] sm:$0xff]
    %v814 = vld [vmem:[%s4 + $0x50] sm:$0xff]
    %v815 = vld [vmem:[%s4 + $0x58] sm:$0xff]
    %v816 = vld [vmem:[%s4 + $0x60] sm:$0xff]
    %v817 = vld [vmem:[%s4 + $0x68] sm:$0xff]
    %v818 = vld [vmem:[%s4 + $0x70] sm:$0xff]
    %v819 = vld [vmem:[%s4 + $0x78] sm:$0xff]
    %v820 = vld [vmem:[%s4 + $0x80] sm:$0xff]
    %v821 = vld [vmem:[%s4 + $0x88] sm:$0xff]
    %v822 = vld [vmem:[%s4 + $0x90] sm:$0xff]
    %v823 = vld [vmem:[%s4 + $0x98] sm:$0xff]
    %v824 = vld [vmem:[%s4 + $0xa0] sm:$0xff]
    %v825 = vld [vmem:[%s4 + $0xa8] sm:$0xff]
    %v826 = vld [vmem:[%s4 + $0xb0] sm:$0xff]
    %v827 = vld [vmem:[%s4 + $0xb8] sm:$0xff]
    %v828 = vld [vmem:[%s4 + $0xc0] sm:$0xff]
    %v829 = vld [vmem:[%s4 + $0xc8] sm:$0xff]
    %v830 = vld [vmem:[%s4 + $0xd0] sm:$0xff]
    %v831 = vld [vmem:[%s4 + $0xd8] sm:$0xff]
    %v832 = vld [vmem:[%s4 + $0xe0] sm:$0xff]
    %v833 = vld [vmem:[%s4 + $0xe8] sm:$0xff]
    %v834 = vld [vmem:[%s4 + $0xf0] sm:$0xff]
    %v835 = vld [vmem:[%s4 + $0xf8] sm:$0xff]
    %v836 = vld [vmem:[%s4 + $0x100] sm:$0xff]
    %v837 = vld [vmem:[%s4 + $0x108] sm:$0xff]
    %v838 = vld [vmem:[%s4 + $0x110] sm:$0xff]
    %v839 = vld [vmem:[%s4 + $0x118] sm:$0xff]
    %v841 = vsel %vm397, %v796, 0
    %843 = vmatprep.subr.mxu0 0.0
    %844 = vmatpush1.msra.mxu0 0.0
    %845 = vmatprep.subr.mxu0 0.0
    %846 = vmatpush1.msra.mxu0 0.0
    %847 = vmatprep.subr.mxu0 0.0
    %848 = vmatpush1.msra.mxu0 0.0
    %849 = vmatprep.subr.mxu0 0.0
    %850 = vmatpush1.msra.mxu0 0.0
    %851 = vmatprep.subr.mxu0 %v838
    %852 = vmatpush1.msra.mxu0 %v837
    %853 = vmatprep.subr.mxu0 %v835
    %854 = vmatpush1.msra.mxu0 %v834
    %855 = vmatprep.subr.mxu0 %v832
    %856 = vmatpush1.msra.mxu0 %v831
    %857 = vmatprep.subr.mxu0 %v829
    %858 = vmatpush1.msra.mxu0 %v828
    %859 = vmatprep.subr.mxu0 %v826
    %860 = vmatpush1.msra.mxu0 %v825
    %861 = vmatprep.subr.mxu0 %v823
    %862 = vmatpush1.msra.mxu0 %v822
    %863 = vmatprep.subr.mxu0 %v820
    %864 = vmatpush1.msra.mxu0 %v819
    %865 = vmatprep.subr.mxu0 %v817
    %866 = vmatpush1.msra.mxu0 %v816
    %867 = vmatprep.subr.mxu0 %v814
    %868 = vmatpush1.msra.mxu0 %v813
    %869 = vmatprep.subr.mxu0 %v811
    %870 = vmatpush1.msra.mxu0 %v810
    %871 = vmatprep.subr.mxu0 %v808
    %872 = vmatpush1.msra.mxu0 %v807
    %873 = vmatprep.subr.mxu0 %v805
    %874 = vmatpush1.msra.mxu0 %v804
    %875 = vmatprep.subr.mxu0 0.0
    %876 = vmatpush2.msra.mxu0 0.0
    %877 = vmatprep.subr.mxu0 0.0
    %878 = vmatpush2.msra.mxu0 0.0
    %879 = vmatprep.subr.mxu0 0.0
    %880 = vmatpush2.msra.mxu0 0.0
    %881 = vmatprep.subr.mxu0 0.0
    %882 = vmatpush2.msra.mxu0 0.0
    %883 = vmatprep.subr.mxu0 0.0
    %884 = vmatpush2.msra.mxu0 0.0
    %885 = vmatprep.subr.mxu0 0.0
    %886 = vmatpush2.msra.mxu0 0.0
    %887 = vmatprep.subr.mxu0 0.0
    %888 = vmatpush2.msra.mxu0 0.0
    %889 = vmatprep.subr.mxu0 0.0
    %890 = vmatpush2.msra.mxu0 0.0
    %891 = vmatprep.subr.mxu0 0.0
    %892 = vmatpush2.msra.mxu0 0.0
    %893 = vmatprep.subr.mxu0 0.0
    %894 = vmatpush2.msra.mxu0 0.0
    %895 = vmatprep.subr.mxu0 0.0
    %896 = vmatpush2.msra.mxu0 0.0
    %897 = vmatprep.subr.mxu0 0.0
    %898 = vmatpush2.msra.mxu0 0.0
    %899 = vmatprep.subr.mxu0 0.0
    %900 = vmatpush2.msra.mxu0 0.0
    %901 = vmatprep.subr.mxu0 0.0
    %902 = vmatpush2.msra.mxu0 0.0
    %903 = vmatprep.subr.mxu0 0.0
    %904 = vmatpush2.msra.mxu0 0.0
    %905 = vmatprep.subr.mxu0 0.0
    %906 = vmatpush2.msra.mxu0 0.0
    %907 = vmatprep.mubr.f32.mxu0 0.0
    %908 = vmatmul.mubr.f32.gmra.mxu0 %v841
    %v909 = vpop.f32.mrf.mxu0
    %v910 = vadd.f32 0.0, %v909
    %v911 = vpop.f32.mrf.mxu0
    %v912 = vadd.f32 0.0, %v911
    %913 = vdwg.mxu0
    %914 = vmatprep.subr.mxu0 0.0
    %915 = vmatpush1.msra.mxu0 0.0
    %916 = vmatprep.subr.mxu0 0.0
    %917 = vmatpush1.msra.mxu0 0.0
    %918 = vmatprep.subr.mxu0 0.0
    %919 = vmatpush1.msra.mxu0 0.0
    %920 = vmatprep.subr.mxu0 0.0
    %921 = vmatpush1.msra.mxu0 0.0
    %922 = vmatprep.subr.mxu0 0.0
    %923 = vmatpush1.msra.mxu0 %v839
    %924 = vmatprep.subr.mxu0 0.0
    %925 = vmatpush1.msra.mxu0 %v836
    %926 = vmatprep.subr.mxu0 0.0
    %927 = vmatpush1.msra.mxu0 %v833
    %928 = vmatprep.subr.mxu0 0.0
    %929 = vmatpush1.msra.mxu0 %v830
    %930 = vmatprep.subr.mxu0 0.0
    %931 = vmatpush1.msra.mxu0 %v827
    %932 = vmatprep.subr.mxu0 0.0
    %933 = vmatpush1.msra.mxu0 %v824
    %934 = vmatprep.subr.mxu0 0.0
    %935 = vmatpush1.msra.mxu0 %v821
    %936 = vmatprep.subr.mxu0 0.0
    %937 = vmatpush1.msra.mxu0 %v818
    %938 = vmatprep.subr.mxu0 0.0
    %939 = vmatpush1.msra.mxu0 %v815
    %940 = vmatprep.subr.mxu0 0.0
    %941 = vmatpush1.msra.mxu0 %v812
    %942 = vmatprep.subr.mxu0 0.0
    %943 = vmatpush1.msra.mxu0 %v809
    %944 = vmatprep.subr.mxu0 0.0
    %945 = vmatpush1.msra.mxu0 %v806
    %946 = vmatprep.subr.mxu0 0.0
    %947 = vmatpush2.msra.mxu0 0.0
    %948 = vmatprep.subr.mxu0 0.0
    %949 = vmatpush2.msra.mxu0 0.0
    %950 = vmatprep.subr.mxu0 0.0
    %951 = vmatpush2.msra.mxu0 0.0
    %952 = vmatprep.subr.mxu0 0.0
    %953 = vmatpush2.msra.mxu0 0.0
    %954 = vmatprep.subr.mxu0 0.0
    %955 = vmatpush2.msra.mxu0 0.0
    %956 = vmatprep.subr.mxu0 0.0
    %957 = vmatpush2.msra.mxu0 0.0
    %958 = vmatprep.subr.mxu0 0.0
    %959 = vmatpush2.msra.mxu0 0.0
    %960 = vmatprep.subr.mxu0 0.0
    %961 = vmatpush2.msra.mxu0 0.0
    %962 = vmatprep.subr.mxu0 0.0
    %963 = vmatpush2.msra.mxu0 0.0
    %964 = vmatprep.subr.mxu0 0.0
    %965 = vmatpush2.msra.mxu0 0.0
    %966 = vmatprep.subr.mxu0 0.0
    %967 = vmatpush2.msra.mxu0 0.0
    %968 = vmatprep.subr.mxu0 0.0
    %969 = vmatpush2.msra.mxu0 0.0
    %970 = vmatprep.subr.mxu0 0.0
    %971 = vmatpush2.msra.mxu0 0.0
    %972 = vmatprep.subr.mxu0 0.0
    %973 = vmatpush2.msra.mxu0 0.0
    %974 = vmatprep.subr.mxu0 0.0
    %975 = vmatpush2.msra.mxu0 0.0
    %976 = vmatprep.subr.mxu0 0.0
    %977 = vmatpush2.msra.mxu0 0.0
    %978 = vmatprep.mubr.f32.mxu0 0.0
    %979 = vmatmul.mubr.f32.gmra.mxu0 %v841
    %v980 = vpop.f32.mrf.mxu0
    %v981 = vadd.f32 0.0, %v980
    %v982 = vpop.f32.mrf.mxu0
    %983 = vdwg.mxu0
    %v984 = vadd.f32 %v801, %v910
    %v985 = vadd.f32 %v802, %v912
    %v986 = vadd.f32 %v803, %v981
    %v987 = vxor.u32 %v984, 2147483648
    %v988 = vmul.f32 %v987, 1.442695
    %v989 = vpow.pop %v988
    %v990 = vadd.f32 %v989, 1.0
    %v991 = vrcp.pop %v990
    %v992 = vmul.f32 1.0, %v991
    %v993 = vtanh.pop %v984
    %v994 = vmul.f32 %v992, %v566
    %996 = vrot.lane.b32.xlu0 %v993, 64
    %v997 = vpop.permute.xlu0 %996
    %v999 = vmul.f32 %v992, %v997
    %1001 = vrot.lane.b32.xlu0 %v999, 32
    %v1002 = vpop.permute.xlu0 %1001
    %v1004 = vadd.f32 %v994, %v1002
    %v1005 = vtanh.pop %v1004
    %1007 = vrot.lane.b32.xlu0 %v1005, 64
    %v1008 = vpop.permute.xlu0 %1007
    %v1010 = vmul.f32 %v992, %v1008
    %v1011 = vld [vmem:[%s5] sm:$0xff]
    %v1012 = vld [vmem:[%s5 + $0x8] sm:$0xff]
    %v1013 = vld [vmem:[%s5 + $0x10] sm:$0xff]
    %v1014 = vld [vmem:[%s5 + $0x18] sm:$0xff]
    %1016 = vrot.lane.b32.xlu0 %v1010, 32
    %v1017 = vpop.permute.xlu0 %1016
    %v1018 = vsel %vm580, %v1017, 0
    %1020 = vmatprep.subr.mxu0 0.0
    %1021 = vmatpush1.msra.mxu0 0.0
    %1022 = vmatprep.subr.mxu0 0.0
    %1023 = vmatpush1.msra.mxu0 0.0
    %1024 = vmatprep.subr.mxu0 0.0
    %1025 = vmatpush1.msra.mxu0 0.0
    %1026 = vmatprep.subr.mxu0 0.0
    %1027 = vmatpush1.msra.mxu0 0.0
    %1028 = vmatprep.subr.mxu0 0.0
    %1029 = vmatpush1.msra.mxu0 0.0
    %1030 = vmatprep.subr.mxu0 0.0
    %1031 = vmatpush1.msra.mxu0 0.0
    %1032 = vmatprep.subr.mxu0 0.0
    %1033 = vmatpush1.msra.mxu0 0.0
    %1034 = vmatprep.subr.mxu0 0.0
    %1035 = vmatpush1.msra.mxu0 0.0
    %1036 = vmatprep.subr.mxu0 0.0
    %1037 = vmatpush1.msra.mxu0 0.0
    %1038 = vmatprep.subr.mxu0 0.0
    %1039 = vmatpush1.msra.mxu0 0.0
    %1040 = vmatprep.subr.mxu0 0.0
    %1041 = vmatpush1.msra.mxu0 0.0
    %1042 = vmatprep.subr.mxu0 0.0
    %1043 = vmatpush1.msra.mxu0 0.0
    %1044 = vmatprep.subr.mxu0 0.0
    %1045 = vmatpush1.msra.mxu0 %v1014
    %1046 = vmatprep.subr.mxu0 0.0
    %1047 = vmatpush1.msra.mxu0 %v1013
    %1048 = vmatprep.subr.mxu0 0.0
    %1049 = vmatpush1.msra.mxu0 %v1012
    %1050 = vmatprep.subr.mxu0 0.0
    %1051 = vmatpush1.msra.mxu0 %v1011
    %1052 = vmatprep.subr.mxu0 0.0
    %1053 = vmatpush2.msra.mxu0 0.0
    %1054 = vmatprep.subr.mxu0 0.0
    %1055 = vmatpush2.msra.mxu0 0.0
    %1056 = vmatprep.subr.mxu0 0.0
    %1057 = vmatpush2.msra.mxu0 0.0
    %1058 = vmatprep.subr.mxu0 0.0
    %1059 = vmatpush2.msra.mxu0 0.0
    %1060 = vmatprep.subr.mxu0 0.0
    %1061 = vmatpush2.msra.mxu0 0.0
    %1062 = vmatprep.subr.mxu0 0.0
    %1063 = vmatpush2.msra.mxu0 0.0
    %1064 = vmatprep.subr.mxu0 0.0
    %1065 = vmatpush2.msra.mxu0 0.0
    %1066 = vmatprep.subr.mxu0 0.0
    %1067 = vmatpush2.msra.mxu0 0.0
    %1068 = vmatprep.subr.mxu0 0.0
    %1069 = vmatpush2.msra.mxu0 0.0
    %1070 = vmatprep.subr.mxu0 0.0
    %1071 = vmatpush2.msra.mxu0 0.0
    %1072 = vmatprep.subr.mxu0 0.0
    %1073 = vmatpush2.msra.mxu0 0.0
    %1074 = vmatprep.subr.mxu0 0.0
    %1075 = vmatpush2.msra.mxu0 0.0
    %1076 = vmatprep.subr.mxu0 0.0
    %1077 = vmatpush2.msra.mxu0 0.0
    %1078 = vmatprep.subr.mxu0 0.0
    %1079 = vmatpush2.msra.mxu0 0.0
    %1080 = vmatprep.subr.mxu0 0.0
    %1081 = vmatpush2.msra.mxu0 0.0
    %1082 = vmatprep.subr.mxu0 0.0
    %1083 = vmatpush2.msra.mxu0 0.0
    %1084 = vmatprep.mubr.f32.mxu0 0.0
    %1085 = vmatmul.mubr.f32.gmra.mxu0 %v1018
    %v1086 = vpop.f32.mrf.mxu0
    %v1087 = vadd.f32 0.0, %v1086
    %v1088 = vpop.f32.mrf.mxu0
    %1089 = vdwg.mxu0
    %v1090 = vadd.f32 %v985, %v1087
    %v1091 = vxor.u32 %v1090, 2147483648
    %v1092 = vmul.f32 %v1091, 1.442695
    %v1093 = vpow.pop %v1092
    %v1094 = vadd.f32 %v1093, 1.0
    %v1095 = vrcp.pop %v1094
    %v1096 = vmul.f32 1.0, %v1095
    %v1097 = vtanh.pop %v1090
    %v1098 = vmul.f32 %v1096, %v671
    %1100 = vrot.lane.b32.xlu0 %v1097, 64
    %v1101 = vpop.permute.xlu0 %1100
    %v1103 = vmul.f32 %v1096, %v1101
    %1105 = vrot.lane.b32.xlu0 %v1103, 32
    %v1106 = vpop.permute.xlu0 %1105
    %v1108 = vadd.f32 %v1098, %v1106
    %v1109 = vtanh.pop %v1108
    %1111 = vrot.lane.b32.xlu0 %v1109, 64
    %v1112 = vpop.permute.xlu0 %1111
    %v1114 = vmul.f32 %v1096, %v1112
    %v1115 = vld [vmem:[%s678] sm:$0xff]
    %v1116 = vld [vmem:[%s678 + $0x8] sm:$0xff]
    %v1117 = vld [vmem:[%s678 + $0x10] sm:$0xff]
    %v1118 = vld [vmem:[%s678 + $0x18] sm:$0xff]
    %1120 = vrot.lane.b32.xlu0 %v1114, 32
    %v1121 = vpop.permute.xlu0 %1120
    %v1122 = vsel %vm580, %v1121, 0
    %1124 = vmatprep.subr.mxu0 0.0
    %1125 = vmatpush1.msra.mxu0 0.0
    %1126 = vmatprep.subr.mxu0 0.0
    %1127 = vmatpush1.msra.mxu0 0.0
    %1128 = vmatprep.subr.mxu0 0.0
    %1129 = vmatpush1.msra.mxu0 0.0
    %1130 = vmatprep.subr.mxu0 0.0
    %1131 = vmatpush1.msra.mxu0 0.0
    %1132 = vmatprep.subr.mxu0 0.0
    %1133 = vmatpush1.msra.mxu0 0.0
    %1134 = vmatprep.subr.mxu0 0.0
    %1135 = vmatpush1.msra.mxu0 0.0
    %1136 = vmatprep.subr.mxu0 0.0
    %1137 = vmatpush1.msra.mxu0 0.0
    %1138 = vmatprep.subr.mxu0 0.0
    %1139 = vmatpush1.msra.mxu0 0.0
    %1140 = vmatprep.subr.mxu0 0.0
    %1141 = vmatpush1.msra.mxu0 0.0
    %1142 = vmatprep.subr.mxu0 0.0
    %1143 = vmatpush1.msra.mxu0 0.0
    %1144 = vmatprep.subr.mxu0 0.0
    %1145 = vmatpush1.msra.mxu0 0.0
    %1146 = vmatprep.subr.mxu0 0.0
    %1147 = vmatpush1.msra.mxu0 0.0
    %1148 = vmatprep.subr.mxu0 0.0
    %1149 = vmatpush1.msra.mxu0 %v1118
    %1150 = vmatprep.subr.mxu0 0.0
    %1151 = vmatpush1.msra.mxu0 %v1117
    %1152 = vmatprep.subr.mxu0 0.0
    %1153 = vmatpush1.msra.mxu0 %v1116
    %1154 = vmatprep.subr.mxu0 0.0
    %1155 = vmatpush1.msra.mxu0 %v1115
    %1156 = vmatprep.subr.mxu0 0.0
    %1157 = vmatpush2.msra.mxu0 0.0
    %1158 = vmatprep.subr.mxu0 0.0
    %1159 = vmatpush2.msra.mxu0 0.0
    %1160 = vmatprep.subr.mxu0 0.0
    %1161 = vmatpush2.msra.mxu0 0.0
    %1162 = vmatprep.subr.mxu0 0.0
    %1163 = vmatpush2.msra.mxu0 0.0
    %1164 = vmatprep.subr.mxu0 0.0
    %1165 = vmatpush2.msra.mxu0 0.0
    %1166 = vmatprep.subr.mxu0 0.0
    %1167 = vmatpush2.msra.mxu0 0.0
    %1168 = vmatprep.subr.mxu0 0.0
    %1169 = vmatpush2.msra.mxu0 0.0
    %1170 = vmatprep.subr.mxu0 0.0
    %1171 = vmatpush2.msra.mxu0 0.0
    %1172 = vmatprep.subr.mxu0 0.0
    %1173 = vmatpush2.msra.mxu0 0.0
    %1174 = vmatprep.subr.mxu0 0.0
    %1175 = vmatpush2.msra.mxu0 0.0
    %1176 = vmatprep.subr.mxu0 0.0
    %1177 = vmatpush2.msra.mxu0 0.0
    %1178 = vmatprep.subr.mxu0 0.0
    %1179 = vmatpush2.msra.mxu0 0.0
    %1180 = vmatprep.subr.mxu0 0.0
    %1181 = vmatpush2.msra.mxu0 0.0
    %1182 = vmatprep.subr.mxu0 0.0
    %1183 = vmatpush2.msra.mxu0 0.0
    %1184 = vmatprep.subr.mxu0 0.0
    %1185 = vmatpush2.msra.mxu0 0.0
    %1186 = vmatprep.subr.mxu0 0.0
    %1187 = vmatpush2.msra.mxu0 0.0
    %1188 = vmatprep.mubr.f32.mxu0 0.0
    %1189 = vmatmul.mubr.f32.gmra.mxu0 %v1122
    %v1190 = vpop.f32.mrf.mxu0
    %v1191 = vadd.f32 0.0, %v1190
    %v1192 = vpop.f32.mrf.mxu0
    %1193 = vdwg.mxu0
    %v1194 = vadd.f32 %v986, %v1191
    %v1195 = vxor.u32 %v1194, 2147483648
    %v1196 = vmul.f32 %v1195, 1.442695
    %v1197 = vpow.pop %v1196
    %v1198 = vadd.f32 %v1197, 1.0
    %v1199 = vrcp.pop %v1198
    %v1200 = vmul.f32 1.0, %v1199
    %v1201 = vtanh.pop %v1194
    %v1202 = vmul.f32 %v1200, %v779
    %1204 = vrot.lane.b32.xlu0 %v1201, 64
    %v1205 = vpop.permute.xlu0 %1204
    %v1207 = vmul.f32 %v1200, %v1205
    %1209 = vrot.lane.b32.xlu0 %v1207, 32
    %v1210 = vpop.permute.xlu0 %1209
    %v1212 = vadd.f32 %v1202, %v1210
    %v1213 = vtanh.pop %v1212
    %1215 = vrot.lane.b32.xlu0 %v1213, 64
    %v1216 = vpop.permute.xlu0 %1215
    %v1218 = vmul.f32 %v1200, %v1216
    %1220 = vrot.lane.b32.xlu0 %v1114, 64
    %v1221 = vpop.permute.xlu0 %1220
    %1224 = vrot.lane.b32.xlu0 %v1218, 96
    %v1225 = vpop.permute.xlu0 %1224
    %v1227 = vsel %vm580, %v1017, %v1221
    %v1228 = vsel %vm795, %v1227, %v1225
    %s1229 = scalar_lea.vmem [#allocation3], 8
    %1230 = vst.msk [vmem:[%s1229] sm:$0xff] %vm397, %v1228
    %s1231 = smul.u32 2, 3
    %s1232 = smul.addr %s1231, 8
    %s1233 = scalar_lea.vmem [#allocation2], %s1232
    %v1234 = vld [vmem:[%s1233] sm:$0xff]
    %v1235 = vld [vmem:[%s1233 + $0x8] sm:$0xff]
    %v1236 = vld [vmem:[%s1233 + $0x10] sm:$0xff]
    %v1237 = vld [vmem:[%s4] sm:$0xff]
    %v1238 = vld [vmem:[%s4 + $0x8] sm:$0xff]
    %v1239 = vld [vmem:[%s4 + $0x10] sm:$0xff]
    %v1240 = vld [vmem:[%s4 + $0x18] sm:$0xff]
    %v1241 = vld [vmem:[%s4 + $0x20] sm:$0xff]
    %v1242 = vld [vmem:[%s4 + $0x28] sm:$0xff]
    %v1243 = vld [vmem:[%s4 + $0x30] sm:$0xff]
    %v1244 = vld [vmem:[%s4 + $0x38] sm:$0xff]
    %v1245 = vld [vmem:[%s4 + $0x40] sm:$0xff]
    %v1246 = vld [vmem:[%s4 + $0x48] sm:$0xff]
    %v1247 = vld [vmem:[%s4 + $0x50] sm:$0xff]
    %v1248 = vld [vmem:[%s4 + $0x58] sm:$0xff]
    %v1249 = vld [vmem:[%s4 + $0x60] sm:$0xff]
    %v1250 = vld [vmem:[%s4 + $0x68] sm:$0xff]
    %v1251 = vld [vmem:[%s4 + $0x70] sm:$0xff]
    %v1252 = vld [vmem:[%s4 + $0x78] sm:$0xff]
    %v1253 = vld [vmem:[%s4 + $0x80] sm:$0xff]
    %v1254 = vld [vmem:[%s4 + $0x88] sm:$0xff]
    %v1255 = vld [vmem:[%s4 + $0x90] sm:$0xff]
    %v1256 = vld [vmem:[%s4 + $0x98] sm:$0xff]
    %v1257 = vld [vmem:[%s4 + $0xa0] sm:$0xff]
    %v1258 = vld [vmem:[%s4 + $0xa8] sm:$0xff]
    %v1259 = vld [vmem:[%s4 + $0xb0] sm:$0xff]
    %v1260 = vld [vmem:[%s4 + $0xb8] sm:$0xff]
    %v1261 = vld [vmem:[%s4 + $0xc0] sm:$0xff]
    %v1262 = vld [vmem:[%s4 + $0xc8] sm:$0xff]
    %v1263 = vld [vmem:[%s4 + $0xd0] sm:$0xff]
    %v1264 = vld [vmem:[%s4 + $0xd8] sm:$0xff]
    %v1265 = vld [vmem:[%s4 + $0xe0] sm:$0xff]
    %v1266 = vld [vmem:[%s4 + $0xe8] sm:$0xff]
    %v1267 = vld [vmem:[%s4 + $0xf0] sm:$0xff]
    %v1268 = vld [vmem:[%s4 + $0xf8] sm:$0xff]
    %v1269 = vld [vmem:[%s4 + $0x100] sm:$0xff]
    %v1270 = vld [vmem:[%s4 + $0x108] sm:$0xff]
    %v1271 = vld [vmem:[%s4 + $0x110] sm:$0xff]
    %v1272 = vld [vmem:[%s4 + $0x118] sm:$0xff]
    %v1274 = vsel %vm397, %v1228, 0
    %1276 = vmatprep.subr.mxu0 0.0
    %1277 = vmatpush1.msra.mxu0 0.0
    %1278 = vmatprep.subr.mxu0 0.0
    %1279 = vmatpush1.msra.mxu0 0.0
    %1280 = vmatprep.subr.mxu0 0.0
    %1281 = vmatpush1.msra.mxu0 0.0
    %1282 = vmatprep.subr.mxu0 0.0
    %1283 = vmatpush1.msra.mxu0 0.0
    %1284 = vmatprep.subr.mxu0 %v1271
    %1285 = vmatpush1.msra.mxu0 %v1270
    %1286 = vmatprep.subr.mxu0 %v1268
    %1287 = vmatpush1.msra.mxu0 %v1267
    %1288 = vmatprep.subr.mxu0 %v1265
    %1289 = vmatpush1.msra.mxu0 %v1264
    %1290 = vmatprep.subr.mxu0 %v1262
    %1291 = vmatpush1.msra.mxu0 %v1261
    %1292 = vmatprep.subr.mxu0 %v1259
    %1293 = vmatpush1.msra.mxu0 %v1258
    %1294 = vmatprep.subr.mxu0 %v1256
    %1295 = vmatpush1.msra.mxu0 %v1255
    %1296 = vmatprep.subr.mxu0 %v1253
    %1297 = vmatpush1.msra.mxu0 %v1252
    %1298 = vmatprep.subr.mxu0 %v1250
    %1299 = vmatpush1.msra.mxu0 %v1249
    %1300 = vmatprep.subr.mxu0 %v1247
    %1301 = vmatpush1.msra.mxu0 %v1246
    %1302 = vmatprep.subr.mxu0 %v1244
    %1303 = vmatpush1.msra.mxu0 %v1243
    %1304 = vmatprep.subr.mxu0 %v1241
    %1305 = vmatpush1.msra.mxu0 %v1240
    %1306 = vmatprep.subr.mxu0 %v1238
    %1307 = vmatpush1.msra.mxu0 %v1237
    %1308 = vmatprep.subr.mxu0 0.0
    %1309 = vmatpush2.msra.mxu0 0.0
    %1310 = vmatprep.subr.mxu0 0.0
    %1311 = vmatpush2.msra.mxu0 0.0
    %1312 = vmatprep.subr.mxu0 0.0
    %1313 = vmatpush2.msra.mxu0 0.0
    %1314 = vmatprep.subr.mxu0 0.0
    %1315 = vmatpush2.msra.mxu0 0.0
    %1316 = vmatprep.subr.mxu0 0.0
    %1317 = vmatpush2.msra.mxu0 0.0
    %1318 = vmatprep.subr.mxu0 0.0
    %1319 = vmatpush2.msra.mxu0 0.0
    %1320 = vmatprep.subr.mxu0 0.0
    %1321 = vmatpush2.msra.mxu0 0.0
    %1322 = vmatprep.subr.mxu0 0.0
    %1323 = vmatpush2.msra.mxu0 0.0
    %1324 = vmatprep.subr.mxu0 0.0
    %1325 = vmatpush2.msra.mxu0 0.0
    %1326 = vmatprep.subr.mxu0 0.0
    %1327 = vmatpush2.msra.mxu0 0.0
    %1328 = vmatprep.subr.mxu0 0.0
    %1329 = vmatpush2.msra.mxu0 0.0
    %1330 = vmatprep.subr.mxu0 0.0
    %1331 = vmatpush2.msra.mxu0 0.0
    %1332 = vmatprep.subr.mxu0 0.0
    %1333 = vmatpush2.msra.mxu0 0.0
    %1334 = vmatprep.subr.mxu0 0.0
    %1335 = vmatpush2.msra.mxu0 0.0
    %1336 = vmatprep.subr.mxu0 0.0
    %1337 = vmatpush2.msra.mxu0 0.0
    %1338 = vmatprep.subr.mxu0 0.0
    %1339 = vmatpush2.msra.mxu0 0.0
    %1340 = vmatprep.mubr.f32.mxu0 0.0
    %1341 = vmatmul.mubr.f32.gmra.mxu0 %v1274
    %v1342 = vpop.f32.mrf.mxu0
    %v1343 = vadd.f32 0.0, %v1342
    %v1344 = vpop.f32.mrf.mxu0
    %v1345 = vadd.f32 0.0, %v1344
    %1346 = vdwg.mxu0
    %1347 = vmatprep.subr.mxu0 0.0
    %1348 = vmatpush1.msra.mxu0 0.0
    %1349 = vmatprep.subr.mxu0 0.0
    %1350 = vmatpush1.msra.mxu0 0.0
    %1351 = vmatprep.subr.mxu0 0.0
    %1352 = vmatpush1.msra.mxu0 0.0
    %1353 = vmatprep.subr.mxu0 0.0
    %1354 = vmatpush1.msra.mxu0 0.0
    %1355 = vmatprep.subr.mxu0 0.0
    %1356 = vmatpush1.msra.mxu0 %v1272
    %1357 = vmatprep.subr.mxu0 0.0
    %1358 = vmatpush1.msra.mxu0 %v1269
    %1359 = vmatprep.subr.mxu0 0.0
    %1360 = vmatpush1.msra.mxu0 %v1266
    %1361 = vmatprep.subr.mxu0 0.0
    %1362 = vmatpush1.msra.mxu0 %v1263
    %1363 = vmatprep.subr.mxu0 0.0
    %1364 = vmatpush1.msra.mxu0 %v1260
    %1365 = vmatprep.subr.mxu0 0.0
    %1366 = vmatpush1.msra.mxu0 %v1257
    %1367 = vmatprep.subr.mxu0 0.0
    %1368 = vmatpush1.msra.mxu0 %v1254
    %1369 = vmatprep.subr.mxu0 0.0
    %1370 = vmatpush1.msra.mxu0 %v1251
    %1371 = vmatprep.subr.mxu0 0.0
    %1372 = vmatpush1.msra.mxu0 %v1248
    %1373 = vmatprep.subr.mxu0 0.0
    %1374 = vmatpush1.msra.mxu0 %v1245
    %1375 = vmatprep.subr.mxu0 0.0
    %1376 = vmatpush1.msra.mxu0 %v1242
    %1377 = vmatprep.subr.mxu0 0.0
    %1378 = vmatpush1.msra.mxu0 %v1239
    %1379 = vmatprep.subr.mxu0 0.0
    %1380 = vmatpush2.msra.mxu0 0.0
    %1381 = vmatprep.subr.mxu0 0.0
    %1382 = vmatpush2.msra.mxu0 0.0
    %1383 = vmatprep.subr.mxu0 0.0
    %1384 = vmatpush2.msra.mxu0 0.0
    %1385 = vmatprep.subr.mxu0 0.0
    %1386 = vmatpush2.msra.mxu0 0.0
    %1387 = vmatprep.subr.mxu0 0.0
    %1388 = vmatpush2.msra.mxu0 0.0
    %1389 = vmatprep.subr.mxu0 0.0
    %1390 = vmatpush2.msra.mxu0 0.0
    %1391 = vmatprep.subr.mxu0 0.0
    %1392 = vmatpush2.msra.mxu0 0.0
    %1393 = vmatprep.subr.mxu0 0.0
    %1394 = vmatpush2.msra.mxu0 0.0
    %1395 = vmatprep.subr.mxu0 0.0
    %1396 = vmatpush2.msra.mxu0 0.0
    %1397 = vmatprep.subr.mxu0 0.0
    %1398 = vmatpush2.msra.mxu0 0.0
    %1399 = vmatprep.subr.mxu0 0.0
    %1400 = vmatpush2.msra.mxu0 0.0
    %1401 = vmatprep.subr.mxu0 0.0
    %1402 = vmatpush2.msra.mxu0 0.0
    %1403 = vmatprep.subr.mxu0 0.0
    %1404 = vmatpush2.msra.mxu0 0.0
    %1405 = vmatprep.subr.mxu0 0.0
    %1406 = vmatpush2.msra.mxu0 0.0
    %1407 = vmatprep.subr.mxu0 0.0
    %1408 = vmatpush2.msra.mxu0 0.0
    %1409 = vmatprep.subr.mxu0 0.0
    %1410 = vmatpush2.msra.mxu0 0.0
    %1411 = vmatprep.mubr.f32.mxu0 0.0
    %1412 = vmatmul.mubr.f32.gmra.mxu0 %v1274
    %v1413 = vpop.f32.mrf.mxu0
    %v1414 = vadd.f32 0.0, %v1413
    %v1415 = vpop.f32.mrf.mxu0
    %1416 = vdwg.mxu0
    %v1417 = vadd.f32 %v1234, %v1343
    %v1418 = vadd.f32 %v1235, %v1345
    %v1419 = vadd.f32 %v1236, %v1414
    %v1420 = vxor.u32 %v1417, 2147483648
    %v1421 = vmul.f32 %v1420, 1.442695
    %v1422 = vpow.pop %v1421
    %v1423 = vadd.f32 %v1422, 1.0
    %v1424 = vrcp.pop %v1423
    %v1425 = vmul.f32 1.0, %v1424
    %v1426 = vtanh.pop %v1417
    %v1427 = vmul.f32 %v1425, %v1004
    %1429 = vrot.lane.b32.xlu0 %v1426, 64
    %v1430 = vpop.permute.xlu0 %1429
    %v1432 = vmul.f32 %v1425, %v1430
    %1434 = vrot.lane.b32.xlu0 %v1432, 32
    %v1435 = vpop.permute.xlu0 %1434
    %v1437 = vadd.f32 %v1427, %v1435
    %v1438 = vtanh.pop %v1437
    %1440 = vrot.lane.b32.xlu0 %v1438, 64
    %v1441 = vpop.permute.xlu0 %1440
    %v1443 = vmul.f32 %v1425, %v1441
    %v1444 = vld [vmem:[%s5] sm:$0xff]
    %v1445 = vld [vmem:[%s5 + $0x8] sm:$0xff]
    %v1446 = vld [vmem:[%s5 + $0x10] sm:$0xff]
    %v1447 = vld [vmem:[%s5 + $0x18] sm:$0xff]
    %1449 = vrot.lane.b32.xlu0 %v1443, 32
    %v1450 = vpop.permute.xlu0 %1449
    %v1451 = vsel %vm580, %v1450, 0
    %1453 = vmatprep.subr.mxu0 0.0
    %1454 = vmatpush1.msra.mxu0 0.0
    %1455 = vmatprep.subr.mxu0 0.0
    %1456 = vmatpush1.msra.mxu0 0.0
    %1457 = vmatprep.subr.mxu0 0.0
    %1458 = vmatpush1.msra.mxu0 0.0
    %1459 = vmatprep.subr.mxu0 0.0
    %1460 = vmatpush1.msra.mxu0 0.0
    %1461 = vmatprep.subr.mxu0 0.0
    %1462 = vmatpush1.msra.mxu0 0.0
    %1463 = vmatprep.subr.mxu0 0.0
    %1464 = vmatpush1.msra.mxu0 0.0
    %1465 = vmatprep.subr.mxu0 0.0
    %1466 = vmatpush1.msra.mxu0 0.0
    %1467 = vmatprep.subr.mxu0 0.0
    %1468 = vmatpush1.msra.mxu0 0.0
    %1469 = vmatprep.subr.mxu0 0.0
    %1470 = vmatpush1.msra.mxu0 0.0
    %1471 = vmatprep.subr.mxu0 0.0
    %1472 = vmatpush1.msra.mxu0 0.0
    %1473 = vmatprep.subr.mxu0 0.0
    %1474 = vmatpush1.msra.mxu0 0.0
    %1475 = vmatprep.subr.mxu0 0.0
    %1476 = vmatpush1.msra.mxu0 0.0
    %1477 = vmatprep.subr.mxu0 0.0
    %1478 = vmatpush1.msra.mxu0 %v1447
    %1479 = vmatprep.subr.mxu0 0.0
    %1480 = vmatpush1.msra.mxu0 %v1446
    %1481 = vmatprep.subr.mxu0 0.0
    %1482 = vmatpush1.msra.mxu0 %v1445
    %1483 = vmatprep.subr.mxu0 0.0
    %1484 = vmatpush1.msra.mxu0 %v1444
    %1485 = vmatprep.subr.mxu0 0.0
    %1486 = vmatpush2.msra.mxu0 0.0
    %1487 = vmatprep.subr.mxu0 0.0
    %1488 = vmatpush2.msra.mxu0 0.0
    %1489 = vmatprep.subr.mxu0 0.0
    %1490 = vmatpush2.msra.mxu0 0.0
    %1491 = vmatprep.subr.mxu0 0.0
    %1492 = vmatpush2.msra.mxu0 0.0
    %1493 = vmatprep.subr.mxu0 0.0
    %1494 = vmatpush2.msra.mxu0 0.0
    %1495 = vmatprep.subr.mxu0 0.0
    %1496 = vmatpush2.msra.mxu0 0.0
    %1497 = vmatprep.subr.mxu0 0.0
    %1498 = vmatpush2.msra.mxu0 0.0
    %1499 = vmatprep.subr.mxu0 0.0
    %1500 = vmatpush2.msra.mxu0 0.0
    %1501 = vmatprep.subr.mxu0 0.0
    %1502 = vmatpush2.msra.mxu0 0.0
    %1503 = vmatprep.subr.mxu0 0.0
    %1504 = vmatpush2.msra.mxu0 0.0
    %1505 = vmatprep.subr.mxu0 0.0
    %1506 = vmatpush2.msra.mxu0 0.0
    %1507 = vmatprep.subr.mxu0 0.0
    %1508 = vmatpush2.msra.mxu0 0.0
    %1509 = vmatprep.subr.mxu0 0.0
    %1510 = vmatpush2.msra.mxu0 0.0
    %1511 = vmatprep.subr.mxu0 0.0
    %1512 = vmatpush2.msra.mxu0 0.0
    %1513 = vmatprep.subr.mxu0 0.0
    %1514 = vmatpush2.msra.mxu0 0.0
    %1515 = vmatprep.subr.mxu0 0.0
    %1516 = vmatpush2.msra.mxu0 0.0
    %1517 = vmatprep.mubr.f32.mxu0 0.0
    %1518 = vmatmul.mubr.f32.gmra.mxu0 %v1451
    %v1519 = vpop.f32.mrf.mxu0
    %v1520 = vadd.f32 0.0, %v1519
    %v1521 = vpop.f32.mrf.mxu0
    %1522 = vdwg.mxu0
    %v1523 = vadd.f32 %v1418, %v1520
    %v1524 = vxor.u32 %v1523, 2147483648
    %v1525 = vmul.f32 %v1524, 1.442695
    %v1526 = vpow.pop %v1525
    %v1527 = vadd.f32 %v1526, 1.0
    %v1528 = vrcp.pop %v1527
    %v1529 = vmul.f32 1.0, %v1528
    %v1530 = vtanh.pop %v1523
    %v1531 = vmul.f32 %v1529, %v1108
    %1533 = vrot.lane.b32.xlu0 %v1530, 64
    %v1534 = vpop.permute.xlu0 %1533
    %v1536 = vmul.f32 %v1529, %v1534
    %1538 = vrot.lane.b32.xlu0 %v1536, 32
    %v1539 = vpop.permute.xlu0 %1538
    %v1541 = vadd.f32 %v1531, %v1539
    %v1542 = vtanh.pop %v1541
    %1544 = vrot.lane.b32.xlu0 %v1542, 64
    %v1545 = vpop.permute.xlu0 %1544
    %v1547 = vmul.f32 %v1529, %v1545
    %v1548 = vld [vmem:[%s678] sm:$0xff]
    %v1549 = vld [vmem:[%s678 + $0x8] sm:$0xff]
    %v1550 = vld [vmem:[%s678 + $0x10] sm:$0xff]
    %v1551 = vld [vmem:[%s678 + $0x18] sm:$0xff]
    %1553 = vrot.lane.b32.xlu0 %v1547, 32
    %v1554 = vpop.permute.xlu0 %1553
    %v1555 = vsel %vm580, %v1554, 0
    %1557 = vmatprep.subr.mxu0 0.0
    %1558 = vmatpush1.msra.mxu0 0.0
    %1559 = vmatprep.subr.mxu0 0.0
    %1560 = vmatpush1.msra.mxu0 0.0
    %1561 = vmatprep.subr.mxu0 0.0
    %1562 = vmatpush1.msra.mxu0 0.0
    %1563 = vmatprep.subr.mxu0 0.0
    %1564 = vmatpush1.msra.mxu0 0.0
    %1565 = vmatprep.subr.mxu0 0.0
    %1566 = vmatpush1.msra.mxu0 0.0
    %1567 = vmatprep.subr.mxu0 0.0
    %1568 = vmatpush1.msra.mxu0 0.0
    %1569 = vmatprep.subr.mxu0 0.0
    %1570 = vmatpush1.msra.mxu0 0.0
    %1571 = vmatprep.subr.mxu0 0.0
    %1572 = vmatpush1.msra.mxu0 0.0
    %1573 = vmatprep.subr.mxu0 0.0
    %1574 = vmatpush1.msra.mxu0 0.0
    %1575 = vmatprep.subr.mxu0 0.0
    %1576 = vmatpush1.msra.mxu0 0.0
    %1577 = vmatprep.subr.mxu0 0.0
    %1578 = vmatpush1.msra.mxu0 0.0
    %1579 = vmatprep.subr.mxu0 0.0
    %1580 = vmatpush1.msra.mxu0 0.0
    %1581 = vmatprep.subr.mxu0 0.0
    %1582 = vmatpush1.msra.mxu0 %v1551
    %1583 = vmatprep.subr.mxu0 0.0
    %1584 = vmatpush1.msra.mxu0 %v1550
    %1585 = vmatprep.subr.mxu0 0.0
    %1586 = vmatpush1.msra.mxu0 %v1549
    %1587 = vmatprep.subr.mxu0 0.0
    %1588 = vmatpush1.msra.mxu0 %v1548
    %1589 = vmatprep.subr.mxu0 0.0
    %1590 = vmatpush2.msra.mxu0 0.0
    %1591 = vmatprep.subr.mxu0 0.0
    %1592 = vmatpush2.msra.mxu0 0.0
    %1593 = vmatprep.subr.mxu0 0.0
    %1594 = vmatpush2.msra.mxu0 0.0
    %1595 = vmatprep.subr.mxu0 0.0
    %1596 = vmatpush2.msra.mxu0 0.0
    %1597 = vmatprep.subr.mxu0 0.0
    %1598 = vmatpush2.msra.mxu0 0.0
    %1599 = vmatprep.subr.mxu0 0.0
    %1600 = vmatpush2.msra.mxu0 0.0
    %1601 = vmatprep.subr.mxu0 0.0
    %1602 = vmatpush2.msra.mxu0 0.0
    %1603 = vmatprep.subr.mxu0 0.0
    %1604 = vmatpush2.msra.mxu0 0.0
    %1605 = vmatprep.subr.mxu0 0.0
    %1606 = vmatpush2.msra.mxu0 0.0
    %1607 = vmatprep.subr.mxu0 0.0
    %1608 = vmatpush2.msra.mxu0 0.0
    %1609 = vmatprep.subr.mxu0 0.0
    %1610 = vmatpush2.msra.mxu0 0.0
    %1611 = vmatprep.subr.mxu0 0.0
    %1612 = vmatpush2.msra.mxu0 0.0
    %1613 = vmatprep.subr.mxu0 0.0
    %1614 = vmatpush2.msra.mxu0 0.0
    %1615 = vmatprep.subr.mxu0 0.0
    %1616 = vmatpush2.msra.mxu0 0.0
    %1617 = vmatprep.subr.mxu0 0.0
    %1618 = vmatpush2.msra.mxu0 0.0
    %1619 = vmatprep.subr.mxu0 0.0
    %1620 = vmatpush2.msra.mxu0 0.0
    %1621 = vmatprep.mubr.f32.mxu0 0.0
    %1622 = vmatmul.mubr.f32.gmra.mxu0 %v1555
    %v1623 = vpop.f32.mrf.mxu0
    %v1624 = vadd.f32 0.0, %v1623
    %v1625 = vpop.f32.mrf.mxu0
    %1626 = vdwg.mxu0
    %v1627 = vadd.f32 %v1419, %v1624
    %v1628 = vxor.u32 %v1627, 2147483648
    %v1629 = vmul.f32 %v1628, 1.442695
    %v1630 = vpow.pop %v1629
    %v1631 = vadd.f32 %v1630, 1.0
    %v1632 = vrcp.pop %v1631
    %v1633 = vmul.f32 1.0, %v1632
    %v1634 = vtanh.pop %v1627
    %v1635 = vmul.f32 %v1633, %v1212
    %1637 = vrot.lane.b32.xlu0 %v1634, 64
    %v1638 = vpop.permute.xlu0 %1637
    %v1640 = vmul.f32 %v1633, %v1638
    %1642 = vrot.lane.b32.xlu0 %v1640, 32
    %v1643 = vpop.permute.xlu0 %1642
    %v1645 = vadd.f32 %v1635, %v1643
    %v1646 = vtanh.pop %v1645
    %1648 = vrot.lane.b32.xlu0 %v1646, 64
    %v1649 = vpop.permute.xlu0 %1648
    %v1651 = vmul.f32 %v1633, %v1649
    %1653 = vrot.lane.b32.xlu0 %v1547, 64
    %v1654 = vpop.permute.xlu0 %1653
    %1657 = vrot.lane.b32.xlu0 %v1651, 96
    %v1658 = vpop.permute.xlu0 %1657
    %v1660 = vsel %vm580, %v1450, %v1654
    %v1661 = vsel %vm795, %v1660, %v1658
    %s1662 = scalar_lea.vmem [#allocation3], 16
    %1663 = vst.msk [vmem:[%s1662] sm:$0xff] %vm397, %v1661
    %s1664 = smul.u32 3, 3
    %s1665 = smul.addr %s1664, 8
    %s1666 = scalar_lea.vmem [#allocation2], %s1665
    %v1667 = vld [vmem:[%s1666] sm:$0xff]
    %v1668 = vld [vmem:[%s1666 + $0x8] sm:$0xff]
    %v1669 = vld [vmem:[%s1666 + $0x10] sm:$0xff]
    %v1670 = vld [vmem:[%s4] sm:$0xff]
    %v1671 = vld [vmem:[%s4 + $0x8] sm:$0xff]
    %v1672 = vld [vmem:[%s4 + $0x10] sm:$0xff]
    %v1673 = vld [vmem:[%s4 + $0x18] sm:$0xff]
    %v1674 = vld [vmem:[%s4 + $0x20] sm:$0xff]
    %v1675 = vld [vmem:[%s4 + $0x28] sm:$0xff]
    %v1676 = vld [vmem:[%s4 + $0x30] sm:$0xff]
    %v1677 = vld [vmem:[%s4 + $0x38] sm:$0xff]
    %v1678 = vld [vmem:[%s4 + $0x40] sm:$0xff]
    %v1679 = vld [vmem:[%s4 + $0x48] sm:$0xff]
    %v1680 = vld [vmem:[%s4 + $0x50] sm:$0xff]
    %v1681 = vld [vmem:[%s4 + $0x58] sm:$0xff]
    %v1682 = vld [vmem:[%s4 + $0x60] sm:$0xff]
    %v1683 = vld [vmem:[%s4 + $0x68] sm:$0xff]
    %v1684 = vld [vmem:[%s4 + $0x70] sm:$0xff]
    %v1685 = vld [vmem:[%s4 + $0x78] sm:$0xff]
    %v1686 = vld [vmem:[%s4 + $0x80] sm:$0xff]
    %v1687 = vld [vmem:[%s4 + $0x88] sm:$0xff]
    %v1688 = vld [vmem:[%s4 + $0x90] sm:$0xff]
    %v1689 = vld [vmem:[%s4 + $0x98] sm:$0xff]
    %v1690 = vld [vmem:[%s4 + $0xa0] sm:$0xff]
    %v1691 = vld [vmem:[%s4 + $0xa8] sm:$0xff]
    %v1692 = vld [vmem:[%s4 + $0xb0] sm:$0xff]
    %v1693 = vld [vmem:[%s4 + $0xb8] sm:$0xff]
    %v1694 = vld [vmem:[%s4 + $0xc0] sm:$0xff]
    %v1695 = vld [vmem:[%s4 + $0xc8] sm:$0xff]
    %v1696 = vld [vmem:[%s4 + $0xd0] sm:$0xff]
    %v1697 = vld [vmem:[%s4 + $0xd8] sm:$0xff]
    %v1698 = vld [vmem:[%s4 + $0xe0] sm:$0xff]
    %v1699 = vld [vmem:[%s4 + $0xe8] sm:$0xff]
    %v1700 = vld [vmem:[%s4 + $0xf0] sm:$0xff]
    %v1701 = vld [vmem:[%s4 + $0xf8] sm:$0xff]
    %v1702 = vld [vmem:[%s4 + $0x100] sm:$0xff]
    %v1703 = vld [vmem:[%s4 + $0x108] sm:$0xff]
    %v1704 = vld [vmem:[%s4 + $0x110] sm:$0xff]
    %v1705 = vld [vmem:[%s4 + $0x118] sm:$0xff]
    %v1707 = vsel %vm397, %v1661, 0
    %1709 = vmatprep.subr.mxu0 0.0
    %1710 = vmatpush1.msra.mxu0 0.0
    %1711 = vmatprep.subr.mxu0 0.0
    %1712 = vmatpush1.msra.mxu0 0.0
    %1713 = vmatprep.subr.mxu0 0.0
    %1714 = vmatpush1.msra.mxu0 0.0
    %1715 = vmatprep.subr.mxu0 0.0
    %1716 = vmatpush1.msra.mxu0 0.0
    %1717 = vmatprep.subr.mxu0 %v1704
    %1718 = vmatpush1.msra.mxu0 %v1703
    %1719 = vmatprep.subr.mxu0 %v1701
    %1720 = vmatpush1.msra.mxu0 %v1700
    %1721 = vmatprep.subr.mxu0 %v1698
    %1722 = vmatpush1.msra.mxu0 %v1697
    %1723 = vmatprep.subr.mxu0 %v1695
    %1724 = vmatpush1.msra.mxu0 %v1694
    %1725 = vmatprep.subr.mxu0 %v1692
    %1726 = vmatpush1.msra.mxu0 %v1691
    %1727 = vmatprep.subr.mxu0 %v1689
    %1728 = vmatpush1.msra.mxu0 %v1688
    %1729 = vmatprep.subr.mxu0 %v1686
    %1730 = vmatpush1.msra.mxu0 %v1685
    %1731 = vmatprep.subr.mxu0 %v1683
    %1732 = vmatpush1.msra.mxu0 %v1682
    %1733 = vmatprep.subr.mxu0 %v1680
    %1734 = vmatpush1.msra.mxu0 %v1679
    %1735 = vmatprep.subr.mxu0 %v1677
    %1736 = vmatpush1.msra.mxu0 %v1676
    %1737 = vmatprep.subr.mxu0 %v1674
    %1738 = vmatpush1.msra.mxu0 %v1673
    %1739 = vmatprep.subr.mxu0 %v1671
    %1740 = vmatpush1.msra.mxu0 %v1670
    %1741 = vmatprep.subr.mxu0 0.0
    %1742 = vmatpush2.msra.mxu0 0.0
    %1743 = vmatprep.subr.mxu0 0.0
    %1744 = vmatpush2.msra.mxu0 0.0
    %1745 = vmatprep.subr.mxu0 0.0
    %1746 = vmatpush2.msra.mxu0 0.0
    %1747 = vmatprep.subr.mxu0 0.0
    %1748 = vmatpush2.msra.mxu0 0.0
    %1749 = vmatprep.subr.mxu0 0.0
    %1750 = vmatpush2.msra.mxu0 0.0
    %1751 = vmatprep.subr.mxu0 0.0
    %1752 = vmatpush2.msra.mxu0 0.0
    %1753 = vmatprep.subr.mxu0 0.0
    %1754 = vmatpush2.msra.mxu0 0.0
    %1755 = vmatprep.subr.mxu0 0.0
    %1756 = vmatpush2.msra.mxu0 0.0
    %1757 = vmatprep.subr.mxu0 0.0
    %1758 = vmatpush2.msra.mxu0 0.0
    %1759 = vmatprep.subr.mxu0 0.0
    %1760 = vmatpush2.msra.mxu0 0.0
    %1761 = vmatprep.subr.mxu0 0.0
    %1762 = vmatpush2.msra.mxu0 0.0
    %1763 = vmatprep.subr.mxu0 0.0
    %1764 = vmatpush2.msra.mxu0 0.0
    %1765 = vmatprep.subr.mxu0 0.0
    %1766 = vmatpush2.msra.mxu0 0.0
    %1767 = vmatprep.subr.mxu0 0.0
    %1768 = vmatpush2.msra.mxu0 0.0
    %1769 = vmatprep.subr.mxu0 0.0
    %1770 = vmatpush2.msra.mxu0 0.0
    %1771 = vmatprep.subr.mxu0 0.0
    %1772 = vmatpush2.msra.mxu0 0.0
    %1773 = vmatprep.mubr.f32.mxu0 0.0
    %1774 = vmatmul.mubr.f32.gmra.mxu0 %v1707
    %v1775 = vpop.f32.mrf.mxu0
    %v1776 = vadd.f32 0.0, %v1775
    %v1777 = vpop.f32.mrf.mxu0
    %v1778 = vadd.f32 0.0, %v1777
    %1779 = vdwg.mxu0
    %1780 = vmatprep.subr.mxu0 0.0
    %1781 = vmatpush1.msra.mxu0 0.0
    %1782 = vmatprep.subr.mxu0 0.0
    %1783 = vmatpush1.msra.mxu0 0.0
    %1784 = vmatprep.subr.mxu0 0.0
    %1785 = vmatpush1.msra.mxu0 0.0
    %1786 = vmatprep.subr.mxu0 0.0
    %1787 = vmatpush1.msra.mxu0 0.0
    %1788 = vmatprep.subr.mxu0 0.0
    %1789 = vmatpush1.msra.mxu0 %v1705
    %1790 = vmatprep.subr.mxu0 0.0
    %1791 = vmatpush1.msra.mxu0 %v1702
    %1792 = vmatprep.subr.mxu0 0.0
    %1793 = vmatpush1.msra.mxu0 %v1699
    %1794 = vmatprep.subr.mxu0 0.0
    %1795 = vmatpush1.msra.mxu0 %v1696
    %1796 = vmatprep.subr.mxu0 0.0
    %1797 = vmatpush1.msra.mxu0 %v1693
    %1798 = vmatprep.subr.mxu0 0.0
    %1799 = vmatpush1.msra.mxu0 %v1690
    %1800 = vmatprep.subr.mxu0 0.0
    %1801 = vmatpush1.msra.mxu0 %v1687
    %1802 = vmatprep.subr.mxu0 0.0
    %1803 = vmatpush1.msra.mxu0 %v1684
    %1804 = vmatprep.subr.mxu0 0.0
    %1805 = vmatpush1.msra.mxu0 %v1681
    %1806 = vmatprep.subr.mxu0 0.0
    %1807 = vmatpush1.msra.mxu0 %v1678
    %1808 = vmatprep.subr.mxu0 0.0
    %1809 = vmatpush1.msra.mxu0 %v1675
    %1810 = vmatprep.subr.mxu0 0.0
    %1811 = vmatpush1.msra.mxu0 %v1672
    %1812 = vmatprep.subr.mxu0 0.0
    %1813 = vmatpush2.msra.mxu0 0.0
    %1814 = vmatprep.subr.mxu0 0.0
    %1815 = vmatpush2.msra.mxu0 0.0
    %1816 = vmatprep.subr.mxu0 0.0
    %1817 = vmatpush2.msra.mxu0 0.0
    %1818 = vmatprep.subr.mxu0 0.0
    %1819 = vmatpush2.msra.mxu0 0.0
    %1820 = vmatprep.subr.mxu0 0.0
    %1821 = vmatpush2.msra.mxu0 0.0
    %1822 = vmatprep.subr.mxu0 0.0
    %1823 = vmatpush2.msra.mxu0 0.0
    %1824 = vmatprep.subr.mxu0 0.0
    %1825 = vmatpush2.msra.mxu0 0.0
    %1826 = vmatprep.subr.mxu0 0.0
    %1827 = vmatpush2.msra.mxu0 0.0
    %1828 = vmatprep.subr.mxu0 0.0
    %1829 = vmatpush2.msra.mxu0 0.0
    %1830 = vmatprep.subr.mxu0 0.0
    %1831 = vmatpush2.msra.mxu0 0.0
    %1832 = vmatprep.subr.mxu0 0.0
    %1833 = vmatpush2.msra.mxu0 0.0
    %1834 = vmatprep.subr.mxu0 0.0
    %1835 = vmatpush2.msra.mxu0 0.0
    %1836 = vmatprep.subr.mxu0 0.0
    %1837 = vmatpush2.msra.mxu0 0.0
    %1838 = vmatprep.subr.mxu0 0.0
    %1839 = vmatpush2.msra.mxu0 0.0
    %1840 = vmatprep.subr.mxu0 0.0
    %1841 = vmatpush2.msra.mxu0 0.0
    %1842 = vmatprep.subr.mxu0 0.0
    %1843 = vmatpush2.msra.mxu0 0.0
    %1844 = vmatprep.mubr.f32.mxu0 0.0
    %1845 = vmatmul.mubr.f32.gmra.mxu0 %v1707
    %v1846 = vpop.f32.mrf.mxu0
    %v1847 = vadd.f32 0.0, %v1846
    %v1848 = vpop.f32.mrf.mxu0
    %1849 = vdwg.mxu0
    %v1850 = vadd.f32 %v1667, %v1776
    %v1851 = vadd.f32 %v1668, %v1778
    %v1852 = vadd.f32 %v1669, %v1847
    %v1853 = vxor.u32 %v1850, 2147483648
    %v1854 = vmul.f32 %v1853, 1.442695
    %v1855 = vpow.pop %v1854
    %v1856 = vadd.f32 %v1855, 1.0
    %v1857 = vrcp.pop %v1856
    %v1858 = vmul.f32 1.0, %v1857
    %v1859 = vtanh.pop %v1850
    %v1860 = vmul.f32 %v1858, %v1437
    %1862 = vrot.lane.b32.xlu0 %v1859, 64
    %v1863 = vpop.permute.xlu0 %1862
    %v1865 = vmul.f32 %v1858, %v1863
    %1867 = vrot.lane.b32.xlu0 %v1865, 32
    %v1868 = vpop.permute.xlu0 %1867
    %v1870 = vadd.f32 %v1860, %v1868
    %v1871 = vtanh.pop %v1870
    %1873 = vrot.lane.b32.xlu0 %v1871, 64
    %v1874 = vpop.permute.xlu0 %1873
    %v1876 = vmul.f32 %v1858, %v1874
    %v1877 = vld [vmem:[%s5] sm:$0xff]
    %v1878 = vld [vmem:[%s5 + $0x8] sm:$0xff]
    %v1879 = vld [vmem:[%s5 + $0x10] sm:$0xff]
    %v1880 = vld [vmem:[%s5 + $0x18] sm:$0xff]
    %1882 = vrot.lane.b32.xlu0 %v1876, 32
    %v1883 = vpop.permute.xlu0 %1882
    %v1884 = vsel %vm580, %v1883, 0
    %1886 = vmatprep.subr.mxu0 0.0
    %1887 = vmatpush1.msra.mxu0 0.0
    %1888 = vmatprep.subr.mxu0 0.0
    %1889 = vmatpush1.msra.mxu0 0.0
    %1890 = vmatprep.subr.mxu0 0.0
    %1891 = vmatpush1.msra.mxu0 0.0
    %1892 = vmatprep.subr.mxu0 0.0
    %1893 = vmatpush1.msra.mxu0 0.0
    %1894 = vmatprep.subr.mxu0 0.0
    %1895 = vmatpush1.msra.mxu0 0.0
    %1896 = vmatprep.subr.mxu0 0.0
    %1897 = vmatpush1.msra.mxu0 0.0
    %1898 = vmatprep.subr.mxu0 0.0
    %1899 = vmatpush1.msra.mxu0 0.0
    %1900 = vmatprep.subr.mxu0 0.0
    %1901 = vmatpush1.msra.mxu0 0.0
    %1902 = vmatprep.subr.mxu0 0.0
    %1903 = vmatpush1.msra.mxu0 0.0
    %1904 = vmatprep.subr.mxu0 0.0
    %1905 = vmatpush1.msra.mxu0 0.0
    %1906 = vmatprep.subr.mxu0 0.0
    %1907 = vmatpush1.msra.mxu0 0.0
    %1908 = vmatprep.subr.mxu0 0.0
    %1909 = vmatpush1.msra.mxu0 0.0
    %1910 = vmatprep.subr.mxu0 0.0
    %1911 = vmatpush1.msra.mxu0 %v1880
    %1912 = vmatprep.subr.mxu0 0.0
    %1913 = vmatpush1.msra.mxu0 %v1879
    %1914 = vmatprep.subr.mxu0 0.0
    %1915 = vmatpush1.msra.mxu0 %v1878
    %1916 = vmatprep.subr.mxu0 0.0
    %1917 = vmatpush1.msra.mxu0 %v1877
    %1918 = vmatprep.subr.mxu0 0.0
    %1919 = vmatpush2.msra.mxu0 0.0
    %1920 = vmatprep.subr.mxu0 0.0
    %1921 = vmatpush2.msra.mxu0 0.0
    %1922 = vmatprep.subr.mxu0 0.0
    %1923 = vmatpush2.msra.mxu0 0.0
    %1924 = vmatprep.subr.mxu0 0.0
    %1925 = vmatpush2.msra.mxu0 0.0
    %1926 = vmatprep.subr.mxu0 0.0
    %1927 = vmatpush2.msra.mxu0 0.0
    %1928 = vmatprep.subr.mxu0 0.0
    %1929 = vmatpush2.msra.mxu0 0.0
    %1930 = vmatprep.subr.mxu0 0.0
    %1931 = vmatpush2.msra.mxu0 0.0
    %1932 = vmatprep.subr.mxu0 0.0
    %1933 = vmatpush2.msra.mxu0 0.0
    %1934 = vmatprep.subr.mxu0 0.0
    %1935 = vmatpush2.msra.mxu0 0.0
    %1936 = vmatprep.subr.mxu0 0.0
    %1937 = vmatpush2.msra.mxu0 0.0
    %1938 = vmatprep.subr.mxu0 0.0
    %1939 = vmatpush2.msra.mxu0 0.0
    %1940 = vmatprep.subr.mxu0 0.0
    %1941 = vmatpush2.msra.mxu0 0.0
    %1942 = vmatprep.subr.mxu0 0.0
    %1943 = vmatpush2.msra.mxu0 0.0
    %1944 = vmatprep.subr.mxu0 0.0
    %1945 = vmatpush2.msra.mxu0 0.0
    %1946 = vmatprep.subr.mxu0 0.0
    %1947 = vmatpush2.msra.mxu0 0.0
    %1948 = vmatprep.subr.mxu0 0.0
    %1949 = vmatpush2.msra.mxu0 0.0
    %1950 = vmatprep.mubr.f32.mxu0 0.0
    %1951 = vmatmul.mubr.f32.gmra.mxu0 %v1884
    %v1952 = vpop.f32.mrf.mxu0
    %v1953 = vadd.f32 0.0, %v1952
    %v1954 = vpop.f32.mrf.mxu0
    %1955 = vdwg.mxu0
    %v1956 = vadd.f32 %v1851, %v1953
    %v1957 = vxor.u32 %v1956, 2147483648
    %v1958 = vmul.f32 %v1957, 1.442695
    %v1959 = vpow.pop %v1958
    %v1960 = vadd.f32 %v1959, 1.0
    %v1961 = vrcp.pop %v1960
    %v1962 = vmul.f32 1.0, %v1961
    %v1963 = vtanh.pop %v1956
    %v1964 = vmul.f32 %v1962, %v1541
    %1966 = vrot.lane.b32.xlu0 %v1963, 64
    %v1967 = vpop.permute.xlu0 %1966
    %v1969 = vmul.f32 %v1962, %v1967
    %1971 = vrot.lane.b32.xlu0 %v1969, 32
    %v1972 = vpop.permute.xlu0 %1971
    %v1974 = vadd.f32 %v1964, %v1972
    %v1975 = vtanh.pop %v1974
    %1977 = vrot.lane.b32.xlu0 %v1975, 64
    %v1978 = vpop.permute.xlu0 %1977
    %v1980 = vmul.f32 %v1962, %v1978
    %v1981 = vld [vmem:[%s678] sm:$0xff]
    %v1982 = vld [vmem:[%s678 + $0x8] sm:$0xff]
    %v1983 = vld [vmem:[%s678 + $0x10] sm:$0xff]
    %v1984 = vld [vmem:[%s678 + $0x18] sm:$0xff]
    %1986 = vrot.lane.b32.xlu0 %v1980, 32
    %v1987 = vpop.permute.xlu0 %1986
    %v1988 = vsel %vm580, %v1987, 0
    %1990 = vmatprep.subr.mxu0 0.0
    %1991 = vmatpush1.msra.mxu0 0.0
    %1992 = vmatprep.subr.mxu0 0.0
    %1993 = vmatpush1.msra.mxu0 0.0
    %1994 = vmatprep.subr.mxu0 0.0
    %1995 = vmatpush1.msra.mxu0 0.0
    %1996 = vmatprep.subr.mxu0 0.0
    %1997 = vmatpush1.msra.mxu0 0.0
    %1998 = vmatprep.subr.mxu0 0.0
    %1999 = vmatpush1.msra.mxu0 0.0
    %2000 = vmatprep.subr.mxu0 0.0
    %2001 = vmatpush1.msra.mxu0 0.0
    %2002 = vmatprep.subr.mxu0 0.0
    %2003 = vmatpush1.msra.mxu0 0.0
    %2004 = vmatprep.subr.mxu0 0.0
    %2005 = vmatpush1.msra.mxu0 0.0
    %2006 = vmatprep.subr.mxu0 0.0
    %2007 = vmatpush1.msra.mxu0 0.0
    %2008 = vmatprep.subr.mxu0 0.0
    %2009 = vmatpush1.msra.mxu0 0.0
    %2010 = vmatprep.subr.mxu0 0.0
    %2011 = vmatpush1.msra.mxu0 0.0
    %2012 = vmatprep.subr.mxu0 0.0
    %2013 = vmatpush1.msra.mxu0 0.0
    %2014 = vmatprep.subr.mxu0 0.0
    %2015 = vmatpush1.msra.mxu0 %v1984
    %2016 = vmatprep.subr.mxu0 0.0
    %2017 = vmatpush1.msra.mxu0 %v1983
    %2018 = vmatprep.subr.mxu0 0.0
    %2019 = vmatpush1.msra.mxu0 %v1982
    %2020 = vmatprep.subr.mxu0 0.0
    %2021 = vmatpush1.msra.mxu0 %v1981
    %2022 = vmatprep.subr.mxu0 0.0
    %2023 = vmatpush2.msra.mxu0 0.0
    %2024 = vmatprep.subr.mxu0 0.0
    %2025 = vmatpush2.msra.mxu0 0.0
    %2026 = vmatprep.subr.mxu0 0.0
    %2027 = vmatpush2.msra.mxu0 0.0
    %2028 = vmatprep.subr.mxu0 0.0
    %2029 = vmatpush2.msra.mxu0 0.0
    %2030 = vmatprep.subr.mxu0 0.0
    %2031 = vmatpush2.msra.mxu0 0.0
    %2032 = vmatprep.subr.mxu0 0.0
    %2033 = vmatpush2.msra.mxu0 0.0
    %2034 = vmatprep.subr.mxu0 0.0
    %2035 = vmatpush2.msra.mxu0 0.0
    %2036 = vmatprep.subr.mxu0 0.0
    %2037 = vmatpush2.msra.mxu0 0.0
    %2038 = vmatprep.subr.mxu0 0.0
    %2039 = vmatpush2.msra.mxu0 0.0
    %2040 = vmatprep.subr.mxu0 0.0
    %2041 = vmatpush2.msra.mxu0 0.0
    %2042 = vmatprep.subr.mxu0 0.0
    %2043 = vmatpush2.msra.mxu0 0.0
    %2044 = vmatprep.subr.mxu0 0.0
    %2045 = vmatpush2.msra.mxu0 0.0
    %2046 = vmatprep.subr.mxu0 0.0
    %2047 = vmatpush2.msra.mxu0 0.0
    %2048 = vmatprep.subr.mxu0 0.0
    %2049 = vmatpush2.msra.mxu0 0.0
    %2050 = vmatprep.subr.mxu0 0.0
    %2051 = vmatpush2.msra.mxu0 0.0
    %2052 = vmatprep.subr.mxu0 0.0
    %2053 = vmatpush2.msra.mxu0 0.0
    %2054 = vmatprep.mubr.f32.mxu0 0.0
    %2055 = vmatmul.mubr.f32.gmra.mxu0 %v1988
    %v2056 = vpop.f32.mrf.mxu0
    %v2057 = vadd.f32 0.0, %v2056
    %v2058 = vpop.f32.mrf.mxu0
    %2059 = vdwg.mxu0
    %v2060 = vadd.f32 %v1852, %v2057
    %v2061 = vxor.u32 %v2060, 2147483648
    %v2062 = vmul.f32 %v2061, 1.442695
    %v2063 = vpow.pop %v2062
    %v2064 = vadd.f32 %v2063, 1.0
    %v2065 = vrcp.pop %v2064
    %v2066 = vmul.f32 1.0, %v2065
    %v2067 = vtanh.pop %v2060
    %v2068 = vmul.f32 %v2066, %v1645
    %2070 = vrot.lane.b32.xlu0 %v2067, 64
    %v2071 = vpop.permute.xlu0 %2070
    %v2073 = vmul.f32 %v2066, %v2071
    %2075 = vrot.lane.b32.xlu0 %v2073, 32
    %v2076 = vpop.permute.xlu0 %2075
    %v2078 = vadd.f32 %v2068, %v2076
    %v2079 = vtanh.pop %v2078
    %2081 = vrot.lane.b32.xlu0 %v2079, 64
    %v2082 = vpop.permute.xlu0 %2081
    %v2084 = vmul.f32 %v2066, %v2082
    %2086 = vrot.lane.b32.xlu0 %v1980, 64
    %v2087 = vpop.permute.xlu0 %2086
    %2090 = vrot.lane.b32.xlu0 %v2084, 96
    %v2091 = vpop.permute.xlu0 %2090
    %v2093 = vsel %vm580, %v1883, %v2087
    %v2094 = vsel %vm795, %v2093, %v2091
    %s2095 = scalar_lea.vmem [#allocation3], 24
    %2096 = vst.msk [vmem:[%s2095] sm:$0xff] %vm397, %v2094
    %s2097 = smul.u32 4, 3
    %s2098 = smul.addr %s2097, 8
    %s2099 = scalar_lea.vmem [#allocation2], %s2098
    %v2100 = vld [vmem:[%s2099] sm:$0xff]
    %v2101 = vld [vmem:[%s2099 + $0x8] sm:$0xff]
    %v2102 = vld [vmem:[%s2099 + $0x10] sm:$0xff]
    %v2103 = vld [vmem:[%s4] sm:$0xff]
    %v2104 = vld [vmem:[%s4 + $0x8] sm:$0xff]
    %v2105 = vld [vmem:[%s4 + $0x10] sm:$0xff]
    %v2106 = vld [vmem:[%s4 + $0x18] sm:$0xff]
    %v2107 = vld [vmem:[%s4 + $0x20] sm:$0xff]
    %v2108 = vld [vmem:[%s4 + $0x28] sm:$0xff]
    %v2109 = vld [vmem:[%s4 + $0x30] sm:$0xff]
    %v2110 = vld [vmem:[%s4 + $0x38] sm:$0xff]
    %v2111 = vld [vmem:[%s4 + $0x40] sm:$0xff]
    %v2112 = vld [vmem:[%s4 + $0x48] sm:$0xff]
    %v2113 = vld [vmem:[%s4 + $0x50] sm:$0xff]
    %v2114 = vld [vmem:[%s4 + $0x58] sm:$0xff]
    %v2115 = vld [vmem:[%s4 + $0x60] sm:$0xff]
    %v2116 = vld [vmem:[%s4 + $0x68] sm:$0xff]
    %v2117 = vld [vmem:[%s4 + $0x70] sm:$0xff]
    %v2118 = vld [vmem:[%s4 + $0x78] sm:$0xff]
    %v2119 = vld [vmem:[%s4 + $0x80] sm:$0xff]
    %v2120 = vld [vmem:[%s4 + $0x88] sm:$0xff]
    %v2121 = vld [vmem:[%s4 + $0x90] sm:$0xff]
    %v2122 = vld [vmem:[%s4 + $0x98] sm:$0xff]
    %v2123 = vld [vmem:[%s4 + $0xa0] sm:$0xff]
    %v2124 = vld [vmem:[%s4 + $0xa8] sm:$0xff]
    %v2125 = vld [vmem:[%s4 + $0xb0] sm:$0xff]
    %v2126 = vld [vmem:[%s4 + $0xb8] sm:$0xff]
    %v2127 = vld [vmem:[%s4 + $0xc0] sm:$0xff]
    %v2128 = vld [vmem:[%s4 + $0xc8] sm:$0xff]
    %v2129 = vld [vmem:[%s4 + $0xd0] sm:$0xff]
    %v2130 = vld [vmem:[%s4 + $0xd8] sm:$0xff]
    %v2131 = vld [vmem:[%s4 + $0xe0] sm:$0xff]
    %v2132 = vld [vmem:[%s4 + $0xe8] sm:$0xff]
    %v2133 = vld [vmem:[%s4 + $0xf0] sm:$0xff]
    %v2134 = vld [vmem:[%s4 + $0xf8] sm:$0xff]
    %v2135 = vld [vmem:[%s4 + $0x100] sm:$0xff]
    %v2136 = vld [vmem:[%s4 + $0x108] sm:$0xff]
    %v2137 = vld [vmem:[%s4 + $0x110] sm:$0xff]
    %v2138 = vld [vmem:[%s4 + $0x118] sm:$0xff]
    %v2140 = vsel %vm397, %v2094, 0
    %2142 = vmatprep.subr.mxu0 0.0
    %2143 = vmatpush1.msra.mxu0 0.0
    %2144 = vmatprep.subr.mxu0 0.0
    %2145 = vmatpush1.msra.mxu0 0.0
    %2146 = vmatprep.subr.mxu0 0.0
    %2147 = vmatpush1.msra.mxu0 0.0
    %2148 = vmatprep.subr.mxu0 0.0
    %2149 = vmatpush1.msra.mxu0 0.0
    %2150 = vmatprep.subr.mxu0 %v2137
    %2151 = vmatpush1.msra.mxu0 %v2136
    %2152 = vmatprep.subr.mxu0 %v2134
    %2153 = vmatpush1.msra.mxu0 %v2133
    %2154 = vmatprep.subr.mxu0 %v2131
    %2155 = vmatpush1.msra.mxu0 %v2130
    %2156 = vmatprep.subr.mxu0 %v2128
    %2157 = vmatpush1.msra.mxu0 %v2127
    %2158 = vmatprep.subr.mxu0 %v2125
    %2159 = vmatpush1.msra.mxu0 %v2124
    %2160 = vmatprep.subr.mxu0 %v2122
    %2161 = vmatpush1.msra.mxu0 %v2121
    %2162 = vmatprep.subr.mxu0 %v2119
    %2163 = vmatpush1.msra.mxu0 %v2118
    %2164 = vmatprep.subr.mxu0 %v2116
    %2165 = vmatpush1.msra.mxu0 %v2115
    %2166 = vmatprep.subr.mxu0 %v2113
    %2167 = vmatpush1.msra.mxu0 %v2112
    %2168 = vmatprep.subr.mxu0 %v2110
    %2169 = vmatpush1.msra.mxu0 %v2109
    %2170 = vmatprep.subr.mxu0 %v2107
    %2171 = vmatpush1.msra.mxu0 %v2106
    %2172 = vmatprep.subr.mxu0 %v2104
    %2173 = vmatpush1.msra.mxu0 %v2103
    %2174 = vmatprep.subr.mxu0 0.0
    %2175 = vmatpush2.msra.mxu0 0.0
    %2176 = vmatprep.subr.mxu0 0.0
    %2177 = vmatpush2.msra.mxu0 0.0
    %2178 = vmatprep.subr.mxu0 0.0
    %2179 = vmatpush2.msra.mxu0 0.0
    %2180 = vmatprep.subr.mxu0 0.0
    %2181 = vmatpush2.msra.mxu0 0.0
    %2182 = vmatprep.subr.mxu0 0.0
    %2183 = vmatpush2.msra.mxu0 0.0
    %2184 = vmatprep.subr.mxu0 0.0
    %2185 = vmatpush2.msra.mxu0 0.0
    %2186 = vmatprep.subr.mxu0 0.0
    %2187 = vmatpush2.msra.mxu0 0.0
    %2188 = vmatprep.subr.mxu0 0.0
    %2189 = vmatpush2.msra.mxu0 0.0
    %2190 = vmatprep.subr.mxu0 0.0
    %2191 = vmatpush2.msra.mxu0 0.0
    %2192 = vmatprep.subr.mxu0 0.0
    %2193 = vmatpush2.msra.mxu0 0.0
    %2194 = vmatprep.subr.mxu0 0.0
    %2195 = vmatpush2.msra.mxu0 0.0
    %2196 = vmatprep.subr.mxu0 0.0
    %2197 = vmatpush2.msra.mxu0 0.0
    %2198 = vmatprep.subr.mxu0 0.0
    %2199 = vmatpush2.msra.mxu0 0.0
    %2200 = vmatprep.subr.mxu0 0.0
    %2201 = vmatpush2.msra.mxu0 0.0
    %2202 = vmatprep.subr.mxu0 0.0
    %2203 = vmatpush2.msra.mxu0 0.0
    %2204 = vmatprep.subr.mxu0 0.0
    %2205 = vmatpush2.msra.mxu0 0.0
    %2206 = vmatprep.mubr.f32.mxu0 0.0
    %2207 = vmatmul.mubr.f32.gmra.mxu0 %v2140
    %v2208 = vpop.f32.mrf.mxu0
    %v2209 = vadd.f32 0.0, %v2208
    %v2210 = vpop.f32.mrf.mxu0
    %v2211 = vadd.f32 0.0, %v2210
    %2212 = vdwg.mxu0
    %2213 = vmatprep.subr.mxu0 0.0
    %2214 = vmatpush1.msra.mxu0 0.0
    %2215 = vmatprep.subr.mxu0 0.0
    %2216 = vmatpush1.msra.mxu0 0.0
    %2217 = vmatprep.subr.mxu0 0.0
    %2218 = vmatpush1.msra.mxu0 0.0
    %2219 = vmatprep.subr.mxu0 0.0
    %2220 = vmatpush1.msra.mxu0 0.0
    %2221 = vmatprep.subr.mxu0 0.0
    %2222 = vmatpush1.msra.mxu0 %v2138
    %2223 = vmatprep.subr.mxu0 0.0
    %2224 = vmatpush1.msra.mxu0 %v2135
    %2225 = vmatprep.subr.mxu0 0.0
    %2226 = vmatpush1.msra.mxu0 %v2132
    %2227 = vmatprep.subr.mxu0 0.0
    %2228 = vmatpush1.msra.mxu0 %v2129
    %2229 = vmatprep.subr.mxu0 0.0
    %2230 = vmatpush1.msra.mxu0 %v2126
    %2231 = vmatprep.subr.mxu0 0.0
    %2232 = vmatpush1.msra.mxu0 %v2123
    %2233 = vmatprep.subr.mxu0 0.0
    %2234 = vmatpush1.msra.mxu0 %v2120
    %2235 = vmatprep.subr.mxu0 0.0
    %2236 = vmatpush1.msra.mxu0 %v2117
    %2237 = vmatprep.subr.mxu0 0.0
    %2238 = vmatpush1.msra.mxu0 %v2114
    %2239 = vmatprep.subr.mxu0 0.0
    %2240 = vmatpush1.msra.mxu0 %v2111
    %2241 = vmatprep.subr.mxu0 0.0
    %2242 = vmatpush1.msra.mxu0 %v2108
    %2243 = vmatprep.subr.mxu0 0.0
    %2244 = vmatpush1.msra.mxu0 %v2105
    %2245 = vmatprep.subr.mxu0 0.0
    %2246 = vmatpush2.msra.mxu0 0.0
    %2247 = vmatprep.subr.mxu0 0.0
    %2248 = vmatpush2.msra.mxu0 0.0
    %2249 = vmatprep.subr.mxu0 0.0
    %2250 = vmatpush2.msra.mxu0 0.0
    %2251 = vmatprep.subr.mxu0 0.0
    %2252 = vmatpush2.msra.mxu0 0.0
    %2253 = vmatprep.subr.mxu0 0.0
    %2254 = vmatpush2.msra.mxu0 0.0
    %2255 = vmatprep.subr.mxu0 0.0
    %2256 = vmatpush2.msra.mxu0 0.0
    %2257 = vmatprep.subr.mxu0 0.0
    %2258 = vmatpush2.msra.mxu0 0.0
    %2259 = vmatprep.subr.mxu0 0.0
    %2260 = vmatpush2.msra.mxu0 0.0
    %2261 = vmatprep.subr.mxu0 0.0
    %2262 = vmatpush2.msra.mxu0 0.0
    %2263 = vmatprep.subr.mxu0 0.0
    %2264 = vmatpush2.msra.mxu0 0.0
    %2265 = vmatprep.subr.mxu0 0.0
    %2266 = vmatpush2.msra.mxu0 0.0
    %2267 = vmatprep.subr.mxu0 0.0
    %2268 = vmatpush2.msra.mxu0 0.0
    %2269 = vmatprep.subr.mxu0 0.0
    %2270 = vmatpush2.msra.mxu0 0.0
    %2271 = vmatprep.subr.mxu0 0.0
    %2272 = vmatpush2.msra.mxu0 0.0
    %2273 = vmatprep.subr.mxu0 0.0
    %2274 = vmatpush2.msra.mxu0 0.0
    %2275 = vmatprep.subr.mxu0 0.0
    %2276 = vmatpush2.msra.mxu0 0.0
    %2277 = vmatprep.mubr.f32.mxu0 0.0
    %2278 = vmatmul.mubr.f32.gmra.mxu0 %v2140
    %v2279 = vpop.f32.mrf.mxu0
    %v2280 = vadd.f32 0.0, %v2279
    %v2281 = vpop.f32.mrf.mxu0
    %2282 = vdwg.mxu0
    %v2283 = vadd.f32 %v2100, %v2209
    %v2284 = vadd.f32 %v2101, %v2211
    %v2285 = vadd.f32 %v2102, %v2280
    %v2286 = vxor.u32 %v2283, 2147483648
    %v2287 = vmul.f32 %v2286, 1.442695
    %v2288 = vpow.pop %v2287
    %v2289 = vadd.f32 %v2288, 1.0
    %v2290 = vrcp.pop %v2289
    %v2291 = vmul.f32 1.0, %v2290
    %v2292 = vtanh.pop %v2283
    %v2293 = vmul.f32 %v2291, %v1870
    %2295 = vrot.lane.b32.xlu0 %v2292, 64
    %v2296 = vpop.permute.xlu0 %2295
    %v2298 = vmul.f32 %v2291, %v2296
    %2300 = vrot.lane.b32.xlu0 %v2298, 32
    %v2301 = vpop.permute.xlu0 %2300
    %v2303 = vadd.f32 %v2293, %v2301
    %v2304 = vtanh.pop %v2303
    %2306 = vrot.lane.b32.xlu0 %v2304, 64
    %v2307 = vpop.permute.xlu0 %2306
    %v2309 = vmul.f32 %v2291, %v2307
    %v2310 = vld [vmem:[%s5] sm:$0xff]
    %v2311 = vld [vmem:[%s5 + $0x8] sm:$0xff]
    %v2312 = vld [vmem:[%s5 + $0x10] sm:$0xff]
    %v2313 = vld [vmem:[%s5 + $0x18] sm:$0xff]
    %2315 = vrot.lane.b32.xlu0 %v2309, 32
    %v2316 = vpop.permute.xlu0 %2315
    %v2317 = vsel %vm580, %v2316, 0
    %2319 = vmatprep.subr.mxu0 0.0
    %2320 = vmatpush1.msra.mxu0 0.0
    %2321 = vmatprep.subr.mxu0 0.0
    %2322 = vmatpush1.msra.mxu0 0.0
    %2323 = vmatprep.subr.mxu0 0.0
    %2324 = vmatpush1.msra.mxu0 0.0
    %2325 = vmatprep.subr.mxu0 0.0
    %2326 = vmatpush1.msra.mxu0 0.0
    %2327 = vmatprep.subr.mxu0 0.0
    %2328 = vmatpush1.msra.mxu0 0.0
    %2329 = vmatprep.subr.mxu0 0.0
    %2330 = vmatpush1.msra.mxu0 0.0
    %2331 = vmatprep.subr.mxu0 0.0
    %2332 = vmatpush1.msra.mxu0 0.0
    %2333 = vmatprep.subr.mxu0 0.0
    %2334 = vmatpush1.msra.mxu0 0.0
    %2335 = vmatprep.subr.mxu0 0.0
    %2336 = vmatpush1.msra.mxu0 0.0
    %2337 = vmatprep.subr.mxu0 0.0
    %2338 = vmatpush1.msra.mxu0 0.0
    %2339 = vmatprep.subr.mxu0 0.0
    %2340 = vmatpush1.msra.mxu0 0.0
    %2341 = vmatprep.subr.mxu0 0.0
    %2342 = vmatpush1.msra.mxu0 0.0
    %2343 = vmatprep.subr.mxu0 0.0
    %2344 = vmatpush1.msra.mxu0 %v2313
    %2345 = vmatprep.subr.mxu0 0.0
    %2346 = vmatpush1.msra.mxu0 %v2312
    %2347 = vmatprep.subr.mxu0 0.0
    %2348 = vmatpush1.msra.mxu0 %v2311
    %2349 = vmatprep.subr.mxu0 0.0
    %2350 = vmatpush1.msra.mxu0 %v2310
    %2351 = vmatprep.subr.mxu0 0.0
    %2352 = vmatpush2.msra.mxu0 0.0
    %2353 = vmatprep.subr.mxu0 0.0
    %2354 = vmatpush2.msra.mxu0 0.0
    %2355 = vmatprep.subr.mxu0 0.0
    %2356 = vmatpush2.msra.mxu0 0.0
    %2357 = vmatprep.subr.mxu0 0.0
    %2358 = vmatpush2.msra.mxu0 0.0
    %2359 = vmatprep.subr.mxu0 0.0
    %2360 = vmatpush2.msra.mxu0 0.0
    %2361 = vmatprep.subr.mxu0 0.0
    %2362 = vmatpush2.msra.mxu0 0.0
    %2363 = vmatprep.subr.mxu0 0.0
    %2364 = vmatpush2.msra.mxu0 0.0
    %2365 = vmatprep.subr.mxu0 0.0
    %2366 = vmatpush2.msra.mxu0 0.0
    %2367 = vmatprep.subr.mxu0 0.0
    %2368 = vmatpush2.msra.mxu0 0.0
    %2369 = vmatprep.subr.mxu0 0.0
    %2370 = vmatpush2.msra.mxu0 0.0
    %2371 = vmatprep.subr.mxu0 0.0
    %2372 = vmatpush2.msra.mxu0 0.0
    %2373 = vmatprep.subr.mxu0 0.0
    %2374 = vmatpush2.msra.mxu0 0.0
    %2375 = vmatprep.subr.mxu0 0.0
    %2376 = vmatpush2.msra.mxu0 0.0
    %2377 = vmatprep.subr.mxu0 0.0
    %2378 = vmatpush2.msra.mxu0 0.0
    %2379 = vmatprep.subr.mxu0 0.0
    %2380 = vmatpush2.msra.mxu0 0.0
    %2381 = vmatprep.subr.mxu0 0.0
    %2382 = vmatpush2.msra.mxu0 0.0
    %2383 = vmatprep.mubr.f32.mxu0 0.0
    %2384 = vmatmul.mubr.f32.gmra.mxu0 %v2317
    %v2385 = vpop.f32.mrf.mxu0
    %v2386 = vadd.f32 0.0, %v2385
    %v2387 = vpop.f32.mrf.mxu0
    %2388 = vdwg.mxu0
    %v2389 = vadd.f32 %v2284, %v2386
    %v2390 = vxor.u32 %v2389, 2147483648
    %v2391 = vmul.f32 %v2390, 1.442695
    %v2392 = vpow.pop %v2391
    %v2393 = vadd.f32 %v2392, 1.0
    %v2394 = vrcp.pop %v2393
    %v2395 = vmul.f32 1.0, %v2394
    %v2396 = vtanh.pop %v2389
    %v2397 = vmul.f32 %v2395, %v1974
    %2399 = vrot.lane.b32.xlu0 %v2396, 64
    %v2400 = vpop.permute.xlu0 %2399
    %v2402 = vmul.f32 %v2395, %v2400
    %2404 = vrot.lane.b32.xlu0 %v2402, 32
    %v2405 = vpop.permute.xlu0 %2404
    %v2407 = vadd.f32 %v2397, %v2405
    %v2408 = vtanh.pop %v2407
    %2410 = vrot.lane.b32.xlu0 %v2408, 64
    %v2411 = vpop.permute.xlu0 %2410
    %v2413 = vmul.f32 %v2395, %v2411
    %v2414 = vld [vmem:[%s678] sm:$0xff]
    %v2415 = vld [vmem:[%s678 + $0x8] sm:$0xff]
    %v2416 = vld [vmem:[%s678 + $0x10] sm:$0xff]
    %v2417 = vld [vmem:[%s678 + $0x18] sm:$0xff]
    %2419 = vrot.lane.b32.xlu0 %v2413, 32
    %v2420 = vpop.permute.xlu0 %2419
    %v2421 = vsel %vm580, %v2420, 0
    %2423 = vmatprep.subr.mxu0 0.0
    %2424 = vmatpush1.msra.mxu0 0.0
    %2425 = vmatprep.subr.mxu0 0.0
    %2426 = vmatpush1.msra.mxu0 0.0
    %2427 = vmatprep.subr.mxu0 0.0
    %2428 = vmatpush1.msra.mxu0 0.0
    %2429 = vmatprep.subr.mxu0 0.0
    %2430 = vmatpush1.msra.mxu0 0.0
    %2431 = vmatprep.subr.mxu0 0.0
    %2432 = vmatpush1.msra.mxu0 0.0
    %2433 = vmatprep.subr.mxu0 0.0
    %2434 = vmatpush1.msra.mxu0 0.0
    %2435 = vmatprep.subr.mxu0 0.0
    %2436 = vmatpush1.msra.mxu0 0.0
    %2437 = vmatprep.subr.mxu0 0.0
    %2438 = vmatpush1.msra.mxu0 0.0
    %2439 = vmatprep.subr.mxu0 0.0
    %2440 = vmatpush1.msra.mxu0 0.0
    %2441 = vmatprep.subr.mxu0 0.0
    %2442 = vmatpush1.msra.mxu0 0.0
    %2443 = vmatprep.subr.mxu0 0.0
    %2444 = vmatpush1.msra.mxu0 0.0
    %2445 = vmatprep.subr.mxu0 0.0
    %2446 = vmatpush1.msra.mxu0 0.0
    %2447 = vmatprep.subr.mxu0 0.0
    %2448 = vmatpush1.msra.mxu0 %v2417
    %2449 = vmatprep.subr.mxu0 0.0
    %2450 = vmatpush1.msra.mxu0 %v2416
    %2451 = vmatprep.subr.mxu0 0.0
    %2452 = vmatpush1.msra.mxu0 %v2415
    %2453 = vmatprep.subr.mxu0 0.0
    %2454 = vmatpush1.msra.mxu0 %v2414
    %2455 = vmatprep.subr.mxu0 0.0
    %2456 = vmatpush2.msra.mxu0 0.0
    %2457 = vmatprep.subr.mxu0 0.0
    %2458 = vmatpush2.msra.mxu0 0.0
    %2459 = vmatprep.subr.mxu0 0.0
    %2460 = vmatpush2.msra.mxu0 0.0
    %2461 = vmatprep.subr.mxu0 0.0
    %2462 = vmatpush2.msra.mxu0 0.0
    %2463 = vmatprep.subr.mxu0 0.0
    %2464 = vmatpush2.msra.mxu0 0.0
    %2465 = vmatprep.subr.mxu0 0.0
    %2466 = vmatpush2.msra.mxu0 0.0
    %2467 = vmatprep.subr.mxu0 0.0
    %2468 = vmatpush2.msra.mxu0 0.0
    %2469 = vmatprep.subr.mxu0 0.0
    %2470 = vmatpush2.msra.mxu0 0.0
    %2471 = vmatprep.subr.mxu0 0.0
    %2472 = vmatpush2.msra.mxu0 0.0
    %2473 = vmatprep.subr.mxu0 0.0
    %2474 = vmatpush2.msra.mxu0 0.0
    %2475 = vmatprep.subr.mxu0 0.0
    %2476 = vmatpush2.msra.mxu0 0.0
    %2477 = vmatprep.subr.mxu0 0.0
    %2478 = vmatpush2.msra.mxu0 0.0
    %2479 = vmatprep.subr.mxu0 0.0
    %2480 = vmatpush2.msra.mxu0 0.0
    %2481 = vmatprep.subr.mxu0 0.0
    %2482 = vmatpush2.msra.mxu0 0.0
    %2483 = vmatprep.subr.mxu0 0.0
    %2484 = vmatpush2.msra.mxu0 0.0
    %2485 = vmatprep.subr.mxu0 0.0
    %2486 = vmatpush2.msra.mxu0 0.0
    %2487 = vmatprep.mubr.f32.mxu0 0.0
    %2488 = vmatmul.mubr.f32.gmra.mxu0 %v2421
    %v2489 = vpop.f32.mrf.mxu0
    %v2490 = vadd.f32 0.0, %v2489
    %v2491 = vpop.f32.mrf.mxu0
    %2492 = vdwg.mxu0
    %v2493 = vadd.f32 %v2285, %v2490
    %v2494 = vxor.u32 %v2493, 2147483648
    %v2495 = vmul.f32 %v2494, 1.442695
    %v2496 = vpow.pop %v2495
    %v2497 = vadd.f32 %v2496, 1.0
    %v2498 = vrcp.pop %v2497
    %v2499 = vmul.f32 1.0, %v2498
    %v2500 = vtanh.pop %v2493
    %v2501 = vmul.f32 %v2499, %v2078
    %2503 = vrot.lane.b32.xlu0 %v2500, 64
    %v2504 = vpop.permute.xlu0 %2503
    %v2506 = vmul.f32 %v2499, %v2504
    %2508 = vrot.lane.b32.xlu0 %v2506, 32
    %v2509 = vpop.permute.xlu0 %2508
    %v2511 = vadd.f32 %v2501, %v2509
    %v2512 = vtanh.pop %v2511
    %2514 = vrot.lane.b32.xlu0 %v2512, 64
    %v2515 = vpop.permute.xlu0 %2514
    %v2517 = vmul.f32 %v2499, %v2515
    %2519 = vrot.lane.b32.xlu0 %v2413, 64
    %v2520 = vpop.permute.xlu0 %2519
    %2523 = vrot.lane.b32.xlu0 %v2517, 96
    %v2524 = vpop.permute.xlu0 %2523
    %v2526 = vsel %vm580, %v2316, %v2520
    %v2527 = vsel %vm795, %v2526, %v2524
    %s2528 = scalar_lea.vmem [#allocation3], 32
    %2529 = vst.msk [vmem:[%s2528] sm:$0xff] %vm397, %v2527
    %s2530 = smul.u32 5, 3
    %s2531 = smul.addr %s2530, 8
    %s2532 = scalar_lea.vmem [#allocation2], %s2531
    %v2533 = vld [vmem:[%s2532] sm:$0xff]
    %v2534 = vld [vmem:[%s2532 + $0x8] sm:$0xff]
    %v2535 = vld [vmem:[%s2532 + $0x10] sm:$0xff]
    %v2536 = vld [vmem:[%s4] sm:$0xff]
    %v2537 = vld [vmem:[%s4 + $0x8] sm:$0xff]
    %v2538 = vld [vmem:[%s4 + $0x10] sm:$0xff]
    %v2539 = vld [vmem:[%s4 + $0x18] sm:$0xff]
    %v2540 = vld [vmem:[%s4 + $0x20] sm:$0xff]
    %v2541 = vld [vmem:[%s4 + $0x28] sm:$0xff]
    %v2542 = vld [vmem:[%s4 + $0x30] sm:$0xff]
    %v2543 = vld [vmem:[%s4 + $0x38] sm:$0xff]
    %v2544 = vld [vmem:[%s4 + $0x40] sm:$0xff]
    %v2545 = vld [vmem:[%s4 + $0x48] sm:$0xff]
    %v2546 = vld [vmem:[%s4 + $0x50] sm:$0xff]
    %v2547 = vld [vmem:[%s4 + $0x58] sm:$0xff]
    %v2548 = vld [vmem:[%s4 + $0x60] sm:$0xff]
    %v2549 = vld [vmem:[%s4 + $0x68] sm:$0xff]
    %v2550 = vld [vmem:[%s4 + $0x70] sm:$0xff]
    %v2551 = vld [vmem:[%s4 + $0x78] sm:$0xff]
    %v2552 = vld [vmem:[%s4 + $0x80] sm:$0xff]
    %v2553 = vld [vmem:[%s4 + $0x88] sm:$0xff]
    %v2554 = vld [vmem:[%s4 + $0x90] sm:$0xff]
    %v2555 = vld [vmem:[%s4 + $0x98] sm:$0xff]
    %v2556 = vld [vmem:[%s4 + $0xa0] sm:$0xff]
    %v2557 = vld [vmem:[%s4 + $0xa8] sm:$0xff]
    %v2558 = vld [vmem:[%s4 + $0xb0] sm:$0xff]
    %v2559 = vld [vmem:[%s4 + $0xb8] sm:$0xff]
    %v2560 = vld [vmem:[%s4 + $0xc0] sm:$0xff]
    %v2561 = vld [vmem:[%s4 + $0xc8] sm:$0xff]
    %v2562 = vld [vmem:[%s4 + $0xd0] sm:$0xff]
    %v2563 = vld [vmem:[%s4 + $0xd8] sm:$0xff]
    %v2564 = vld [vmem:[%s4 + $0xe0] sm:$0xff]
    %v2565 = vld [vmem:[%s4 + $0xe8] sm:$0xff]
    %v2566 = vld [vmem:[%s4 + $0xf0] sm:$0xff]
    %v2567 = vld [vmem:[%s4 + $0xf8] sm:$0xff]
    %v2568 = vld [vmem:[%s4 + $0x100] sm:$0xff]
    %v2569 = vld [vmem:[%s4 + $0x108] sm:$0xff]
    %v2570 = vld [vmem:[%s4 + $0x110] sm:$0xff]
    %v2571 = vld [vmem:[%s4 + $0x118] sm:$0xff]
    %v2573 = vsel %vm397, %v2527, 0
    %2575 = vmatprep.subr.mxu0 0.0
    %2576 = vmatpush1.msra.mxu0 0.0
    %2577 = vmatprep.subr.mxu0 0.0
    %2578 = vmatpush1.msra.mxu0 0.0
    %2579 = vmatprep.subr.mxu0 0.0
    %2580 = vmatpush1.msra.mxu0 0.0
    %2581 = vmatprep.subr.mxu0 0.0
    %2582 = vmatpush1.msra.mxu0 0.0
    %2583 = vmatprep.subr.mxu0 %v2570
    %2584 = vmatpush1.msra.mxu0 %v2569
    %2585 = vmatprep.subr.mxu0 %v2567
    %2586 = vmatpush1.msra.mxu0 %v2566
    %2587 = vmatprep.subr.mxu0 %v2564
    %2588 = vmatpush1.msra.mxu0 %v2563
    %2589 = vmatprep.subr.mxu0 %v2561
    %2590 = vmatpush1.msra.mxu0 %v2560
    %2591 = vmatprep.subr.mxu0 %v2558
    %2592 = vmatpush1.msra.mxu0 %v2557
    %2593 = vmatprep.subr.mxu0 %v2555
    %2594 = vmatpush1.msra.mxu0 %v2554
    %2595 = vmatprep.subr.mxu0 %v2552
    %2596 = vmatpush1.msra.mxu0 %v2551
    %2597 = vmatprep.subr.mxu0 %v2549
    %2598 = vmatpush1.msra.mxu0 %v2548
    %2599 = vmatprep.subr.mxu0 %v2546
    %2600 = vmatpush1.msra.mxu0 %v2545
    %2601 = vmatprep.subr.mxu0 %v2543
    %2602 = vmatpush1.msra.mxu0 %v2542
    %2603 = vmatprep.subr.mxu0 %v2540
    %2604 = vmatpush1.msra.mxu0 %v2539
    %2605 = vmatprep.subr.mxu0 %v2537
    %2606 = vmatpush1.msra.mxu0 %v2536
    %2607 = vmatprep.subr.mxu0 0.0
    %2608 = vmatpush2.msra.mxu0 0.0
    %2609 = vmatprep.subr.mxu0 0.0
    %2610 = vmatpush2.msra.mxu0 0.0
    %2611 = vmatprep.subr.mxu0 0.0
    %2612 = vmatpush2.msra.mxu0 0.0
    %2613 = vmatprep.subr.mxu0 0.0
    %2614 = vmatpush2.msra.mxu0 0.0
    %2615 = vmatprep.subr.mxu0 0.0
    %2616 = vmatpush2.msra.mxu0 0.0
    %2617 = vmatprep.subr.mxu0 0.0
    %2618 = vmatpush2.msra.mxu0 0.0
    %2619 = vmatprep.subr.mxu0 0.0
    %2620 = vmatpush2.msra.mxu0 0.0
    %2621 = vmatprep.subr.mxu0 0.0
    %2622 = vmatpush2.msra.mxu0 0.0
    %2623 = vmatprep.subr.mxu0 0.0
    %2624 = vmatpush2.msra.mxu0 0.0
    %2625 = vmatprep.subr.mxu0 0.0
    %2626 = vmatpush2.msra.mxu0 0.0
    %2627 = vmatprep.subr.mxu0 0.0
    %2628 = vmatpush2.msra.mxu0 0.0
    %2629 = vmatprep.subr.mxu0 0.0
    %2630 = vmatpush2.msra.mxu0 0.0
    %2631 = vmatprep.subr.mxu0 0.0
    %2632 = vmatpush2.msra.mxu0 0.0
    %2633 = vmatprep.subr.mxu0 0.0
    %2634 = vmatpush2.msra.mxu0 0.0
    %2635 = vmatprep.subr.mxu0 0.0
    %2636 = vmatpush2.msra.mxu0 0.0
    %2637 = vmatprep.subr.mxu0 0.0
    %2638 = vmatpush2.msra.mxu0 0.0
    %2639 = vmatprep.mubr.f32.mxu0 0.0
    %2640 = vmatmul.mubr.f32.gmra.mxu0 %v2573
    %v2641 = vpop.f32.mrf.mxu0
    %v2642 = vadd.f32 0.0, %v2641
    %v2643 = vpop.f32.mrf.mxu0
    %v2644 = vadd.f32 0.0, %v2643
    %2645 = vdwg.mxu0
    %2646 = vmatprep.subr.mxu0 0.0
    %2647 = vmatpush1.msra.mxu0 0.0
    %2648 = vmatprep.subr.mxu0 0.0
    %2649 = vmatpush1.msra.mxu0 0.0
    %2650 = vmatprep.subr.mxu0 0.0
    %2651 = vmatpush1.msra.mxu0 0.0
    %2652 = vmatprep.subr.mxu0 0.0
    %2653 = vmatpush1.msra.mxu0 0.0
    %2654 = vmatprep.subr.mxu0 0.0
    %2655 = vmatpush1.msra.mxu0 %v2571
    %2656 = vmatprep.subr.mxu0 0.0
    %2657 = vmatpush1.msra.mxu0 %v2568
    %2658 = vmatprep.subr.mxu0 0.0
    %2659 = vmatpush1.msra.mxu0 %v2565
    %2660 = vmatprep.subr.mxu0 0.0
    %2661 = vmatpush1.msra.mxu0 %v2562
    %2662 = vmatprep.subr.mxu0 0.0
    %2663 = vmatpush1.msra.mxu0 %v2559
    %2664 = vmatprep.subr.mxu0 0.0
    %2665 = vmatpush1.msra.mxu0 %v2556
    %2666 = vmatprep.subr.mxu0 0.0
    %2667 = vmatpush1.msra.mxu0 %v2553
    %2668 = vmatprep.subr.mxu0 0.0
    %2669 = vmatpush1.msra.mxu0 %v2550
    %2670 = vmatprep.subr.mxu0 0.0
    %2671 = vmatpush1.msra.mxu0 %v2547
    %2672 = vmatprep.subr.mxu0 0.0
    %2673 = vmatpush1.msra.mxu0 %v2544
    %2674 = vmatprep.subr.mxu0 0.0
    %2675 = vmatpush1.msra.mxu0 %v2541
    %2676 = vmatprep.subr.mxu0 0.0
    %2677 = vmatpush1.msra.mxu0 %v2538
    %2678 = vmatprep.subr.mxu0 0.0
    %2679 = vmatpush2.msra.mxu0 0.0
    %2680 = vmatprep.subr.mxu0 0.0
    %2681 = vmatpush2.msra.mxu0 0.0
    %2682 = vmatprep.subr.mxu0 0.0
    %2683 = vmatpush2.msra.mxu0 0.0
    %2684 = vmatprep.subr.mxu0 0.0
    %2685 = vmatpush2.msra.mxu0 0.0
    %2686 = vmatprep.subr.mxu0 0.0
    %2687 = vmatpush2.msra.mxu0 0.0
    %2688 = vmatprep.subr.mxu0 0.0
    %2689 = vmatpush2.msra.mxu0 0.0
    %2690 = vmatprep.subr.mxu0 0.0
    %2691 = vmatpush2.msra.mxu0 0.0
    %2692 = vmatprep.subr.mxu0 0.0
    %2693 = vmatpush2.msra.mxu0 0.0
    %2694 = vmatprep.subr.mxu0 0.0
    %2695 = vmatpush2.msra.mxu0 0.0
    %2696 = vmatprep.subr.mxu0 0.0
    %2697 = vmatpush2.msra.mxu0 0.0
    %2698 = vmatprep.subr.mxu0 0.0
    %2699 = vmatpush2.msra.mxu0 0.0
    %2700 = vmatprep.subr.mxu0 0.0
    %2701 = vmatpush2.msra.mxu0 0.0
    %2702 = vmatprep.subr.mxu0 0.0
    %2703 = vmatpush2.msra.mxu0 0.0
    %2704 = vmatprep.subr.mxu0 0.0
    %2705 = vmatpush2.msra.mxu0 0.0
    %2706 = vmatprep.subr.mxu0 0.0
    %2707 = vmatpush2.msra.mxu0 0.0
    %2708 = vmatprep.subr.mxu0 0.0
    %2709 = vmatpush2.msra.mxu0 0.0
    %2710 = vmatprep.mubr.f32.mxu0 0.0
    %2711 = vmatmul.mubr.f32.gmra.mxu0 %v2573
    %v2712 = vpop.f32.mrf.mxu0
    %v2713 = vadd.f32 0.0, %v2712
    %v2714 = vpop.f32.mrf.mxu0
    %2715 = vdwg.mxu0
    %v2716 = vadd.f32 %v2533, %v2642
    %v2717 = vadd.f32 %v2534, %v2644
    %v2718 = vadd.f32 %v2535, %v2713
    %v2719 = vxor.u32 %v2716, 2147483648
    %v2720 = vmul.f32 %v2719, 1.442695
    %v2721 = vpow.pop %v2720
    %v2722 = vadd.f32 %v2721, 1.0
    %v2723 = vrcp.pop %v2722
    %v2724 = vmul.f32 1.0, %v2723
    %v2725 = vtanh.pop %v2716
    %v2726 = vmul.f32 %v2724, %v2303
    %2728 = vrot.lane.b32.xlu0 %v2725, 64
    %v2729 = vpop.permute.xlu0 %2728
    %v2731 = vmul.f32 %v2724, %v2729
    %2733 = vrot.lane.b32.xlu0 %v2731, 32
    %v2734 = vpop.permute.xlu0 %2733
    %v2736 = vadd.f32 %v2726, %v2734
    %v2737 = vtanh.pop %v2736
    %2739 = vrot.lane.b32.xlu0 %v2737, 64
    %v2740 = vpop.permute.xlu0 %2739
    %v2742 = vmul.f32 %v2724, %v2740
    %v2743 = vld [vmem:[%s5] sm:$0xff]
    %v2744 = vld [vmem:[%s5 + $0x8] sm:$0xff]
    %v2745 = vld [vmem:[%s5 + $0x10] sm:$0xff]
    %v2746 = vld [vmem:[%s5 + $0x18] sm:$0xff]
    %2748 = vrot.lane.b32.xlu0 %v2742, 32
    %v2749 = vpop.permute.xlu0 %2748
    %v2750 = vsel %vm580, %v2749, 0
    %2752 = vmatprep.subr.mxu0 0.0
    %2753 = vmatpush1.msra.mxu0 0.0
    %2754 = vmatprep.subr.mxu0 0.0
    %2755 = vmatpush1.msra.mxu0 0.0
    %2756 = vmatprep.subr.mxu0 0.0
    %2757 = vmatpush1.msra.mxu0 0.0
    %2758 = vmatprep.subr.mxu0 0.0
    %2759 = vmatpush1.msra.mxu0 0.0
    %2760 = vmatprep.subr.mxu0 0.0
    %2761 = vmatpush1.msra.mxu0 0.0
    %2762 = vmatprep.subr.mxu0 0.0
    %2763 = vmatpush1.msra.mxu0 0.0
    %2764 = vmatprep.subr.mxu0 0.0
    %2765 = vmatpush1.msra.mxu0 0.0
    %2766 = vmatprep.subr.mxu0 0.0
    %2767 = vmatpush1.msra.mxu0 0.0
    %2768 = vmatprep.subr.mxu0 0.0
    %2769 = vmatpush1.msra.mxu0 0.0
    %2770 = vmatprep.subr.mxu0 0.0
    %2771 = vmatpush1.msra.mxu0 0.0
    %2772 = vmatprep.subr.mxu0 0.0
    %2773 = vmatpush1.msra.mxu0 0.0
    %2774 = vmatprep.subr.mxu0 0.0
    %2775 = vmatpush1.msra.mxu0 0.0
    %2776 = vmatprep.subr.mxu0 0.0
    %2777 = vmatpush1.msra.mxu0 %v2746
    %2778 = vmatprep.subr.mxu0 0.0
    %2779 = vmatpush1.msra.mxu0 %v2745
    %2780 = vmatprep.subr.mxu0 0.0
    %2781 = vmatpush1.msra.mxu0 %v2744
    %2782 = vmatprep.subr.mxu0 0.0
    %2783 = vmatpush1.msra.mxu0 %v2743
    %2784 = vmatprep.subr.mxu0 0.0
    %2785 = vmatpush2.msra.mxu0 0.0
    %2786 = vmatprep.subr.mxu0 0.0
    %2787 = vmatpush2.msra.mxu0 0.0
    %2788 = vmatprep.subr.mxu0 0.0
    %2789 = vmatpush2.msra.mxu0 0.0
    %2790 = vmatprep.subr.mxu0 0.0
    %2791 = vmatpush2.msra.mxu0 0.0
    %2792 = vmatprep.subr.mxu0 0.0
    %2793 = vmatpush2.msra.mxu0 0.0
    %2794 = vmatprep.subr.mxu0 0.0
    %2795 = vmatpush2.msra.mxu0 0.0
    %2796 = vmatprep.subr.mxu0 0.0
    %2797 = vmatpush2.msra.mxu0 0.0
    %2798 = vmatprep.subr.mxu0 0.0
    %2799 = vmatpush2.msra.mxu0 0.0
    %2800 = vmatprep.subr.mxu0 0.0
    %2801 = vmatpush2.msra.mxu0 0.0
    %2802 = vmatprep.subr.mxu0 0.0
    %2803 = vmatpush2.msra.mxu0 0.0
    %2804 = vmatprep.subr.mxu0 0.0
    %2805 = vmatpush2.msra.mxu0 0.0
    %2806 = vmatprep.subr.mxu0 0.0
    %2807 = vmatpush2.msra.mxu0 0.0
    %2808 = vmatprep.subr.mxu0 0.0
    %2809 = vmatpush2.msra.mxu0 0.0
    %2810 = vmatprep.subr.mxu0 0.0
    %2811 = vmatpush2.msra.mxu0 0.0
    %2812 = vmatprep.subr.mxu0 0.0
    %2813 = vmatpush2.msra.mxu0 0.0
    %2814 = vmatprep.subr.mxu0 0.0
    %2815 = vmatpush2.msra.mxu0 0.0
    %2816 = vmatprep.mubr.f32.mxu0 0.0
    %2817 = vmatmul.mubr.f32.gmra.mxu0 %v2750
    %v2818 = vpop.f32.mrf.mxu0
    %v2819 = vadd.f32 0.0, %v2818
    %v2820 = vpop.f32.mrf.mxu0
    %2821 = vdwg.mxu0
    %v2822 = vadd.f32 %v2717, %v2819
    %v2823 = vxor.u32 %v2822, 2147483648
    %v2824 = vmul.f32 %v2823, 1.442695
    %v2825 = vpow.pop %v2824
    %v2826 = vadd.f32 %v2825, 1.0
    %v2827 = vrcp.pop %v2826
    %v2828 = vmul.f32 1.0, %v2827
    %v2829 = vtanh.pop %v2822
    %v2830 = vmul.f32 %v2828, %v2407
    %2832 = vrot.lane.b32.xlu0 %v2829, 64
    %v2833 = vpop.permute.xlu0 %2832
    %v2835 = vmul.f32 %v2828, %v2833
    %2837 = vrot.lane.b32.xlu0 %v2835, 32
    %v2838 = vpop.permute.xlu0 %2837
    %v2840 = vadd.f32 %v2830, %v2838
    %v2841 = vtanh.pop %v2840
    %2843 = vrot.lane.b32.xlu0 %v2841, 64
    %v2844 = vpop.permute.xlu0 %2843
    %v2846 = vmul.f32 %v2828, %v2844
    %v2847 = vld [vmem:[%s678] sm:$0xff]
    %v2848 = vld [vmem:[%s678 + $0x8] sm:$0xff]
    %v2849 = vld [vmem:[%s678 + $0x10] sm:$0xff]
    %v2850 = vld [vmem:[%s678 + $0x18] sm:$0xff]
    %2852 = vrot.lane.b32.xlu0 %v2846, 32
    %v2853 = vpop.permute.xlu0 %2852
    %v2854 = vsel %vm580, %v2853, 0
    %2856 = vmatprep.subr.mxu0 0.0
    %2857 = vmatpush1.msra.mxu0 0.0
    %2858 = vmatprep.subr.mxu0 0.0
    %2859 = vmatpush1.msra.mxu0 0.0
    %2860 = vmatprep.subr.mxu0 0.0
    %2861 = vmatpush1.msra.mxu0 0.0
    %2862 = vmatprep.subr.mxu0 0.0
    %2863 = vmatpush1.msra.mxu0 0.0
    %2864 = vmatprep.subr.mxu0 0.0
    %2865 = vmatpush1.msra.mxu0 0.0
    %2866 = vmatprep.subr.mxu0 0.0
    %2867 = vmatpush1.msra.mxu0 0.0
    %2868 = vmatprep.subr.mxu0 0.0
    %2869 = vmatpush1.msra.mxu0 0.0
    %2870 = vmatprep.subr.mxu0 0.0
    %2871 = vmatpush1.msra.mxu0 0.0
    %2872 = vmatprep.subr.mxu0 0.0
    %2873 = vmatpush1.msra.mxu0 0.0
    %2874 = vmatprep.subr.mxu0 0.0
    %2875 = vmatpush1.msra.mxu0 0.0
    %2876 = vmatprep.subr.mxu0 0.0
    %2877 = vmatpush1.msra.mxu0 0.0
    %2878 = vmatprep.subr.mxu0 0.0
    %2879 = vmatpush1.msra.mxu0 0.0
    %2880 = vmatprep.subr.mxu0 0.0
    %2881 = vmatpush1.msra.mxu0 %v2850
    %2882 = vmatprep.subr.mxu0 0.0
    %2883 = vmatpush1.msra.mxu0 %v2849
    %2884 = vmatprep.subr.mxu0 0.0
    %2885 = vmatpush1.msra.mxu0 %v2848
    %2886 = vmatprep.subr.mxu0 0.0
    %2887 = vmatpush1.msra.mxu0 %v2847
    %2888 = vmatprep.subr.mxu0 0.0
    %2889 = vmatpush2.msra.mxu0 0.0
    %2890 = vmatprep.subr.mxu0 0.0
    %2891 = vmatpush2.msra.mxu0 0.0
    %2892 = vmatprep.subr.mxu0 0.0
    %2893 = vmatpush2.msra.mxu0 0.0
    %2894 = vmatprep.subr.mxu0 0.0
    %2895 = vmatpush2.msra.mxu0 0.0
    %2896 = vmatprep.subr.mxu0 0.0
    %2897 = vmatpush2.msra.mxu0 0.0
    %2898 = vmatprep.subr.mxu0 0.0
    %2899 = vmatpush2.msra.mxu0 0.0
    %2900 = vmatprep.subr.mxu0 0.0
    %2901 = vmatpush2.msra.mxu0 0.0
    %2902 = vmatprep.subr.mxu0 0.0
    %2903 = vmatpush2.msra.mxu0 0.0
    %2904 = vmatprep.subr.mxu0 0.0
    %2905 = vmatpush2.msra.mxu0 0.0
    %2906 = vmatprep.subr.mxu0 0.0
    %2907 = vmatpush2.msra.mxu0 0.0
    %2908 = vmatprep.subr.mxu0 0.0
    %2909 = vmatpush2.msra.mxu0 0.0
    %2910 = vmatprep.subr.mxu0 0.0
    %2911 = vmatpush2.msra.mxu0 0.0
    %2912 = vmatprep.subr.mxu0 0.0
    %2913 = vmatpush2.msra.mxu0 0.0
    %2914 = vmatprep.subr.mxu0 0.0
    %2915 = vmatpush2.msra.mxu0 0.0
    %2916 = vmatprep.subr.mxu0 0.0
    %2917 = vmatpush2.msra.mxu0 0.0
    %2918 = vmatprep.subr.mxu0 0.0
    %2919 = vmatpush2.msra.mxu0 0.0
    %2920 = vmatprep.mubr.f32.mxu0 0.0
    %2921 = vmatmul.mubr.f32.gmra.mxu0 %v2854
    %v2922 = vpop.f32.mrf.mxu0
    %v2923 = vadd.f32 0.0, %v2922
    %v2924 = vpop.f32.mrf.mxu0
    %2925 = vdwg.mxu0
    %v2926 = vadd.f32 %v2718, %v2923
    %v2927 = vxor.u32 %v2926, 2147483648
    %v2928 = vmul.f32 %v2927, 1.442695
    %v2929 = vpow.pop %v2928
    %v2930 = vadd.f32 %v2929, 1.0
    %v2931 = vrcp.pop %v2930
    %v2932 = vmul.f32 1.0, %v2931
    %v2933 = vtanh.pop %v2926
    %v2934 = vmul.f32 %v2932, %v2511
    %2936 = vrot.lane.b32.xlu0 %v2933, 64
    %v2937 = vpop.permute.xlu0 %2936
    %v2939 = vmul.f32 %v2932, %v2937
    %2941 = vrot.lane.b32.xlu0 %v2939, 32
    %v2942 = vpop.permute.xlu0 %2941
    %v2944 = vadd.f32 %v2934, %v2942
    %v2945 = vtanh.pop %v2944
    %2947 = vrot.lane.b32.xlu0 %v2945, 64
    %v2948 = vpop.permute.xlu0 %2947
    %v2950 = vmul.f32 %v2932, %v2948
    %2952 = vrot.lane.b32.xlu0 %v2846, 64
    %v2953 = vpop.permute.xlu0 %2952
    %2956 = vrot.lane.b32.xlu0 %v2950, 96
    %v2957 = vpop.permute.xlu0 %2956
    %v2959 = vsel %vm580, %v2749, %v2953
    %v2960 = vsel %vm795, %v2959, %v2957
    %s2961 = scalar_lea.vmem [#allocation3], 40
    %2962 = vst.msk [vmem:[%s2961] sm:$0xff] %vm397, %v2960
    %s2963 = smul.u32 6, 3
    %s2964 = smul.addr %s2963, 8
    %s2965 = scalar_lea.vmem [#allocation2], %s2964
    %v2966 = vld [vmem:[%s2965] sm:$0xff]
    %v2967 = vld [vmem:[%s2965 + $0x8] sm:$0xff]
    %v2968 = vld [vmem:[%s2965 + $0x10] sm:$0xff]
    %v2969 = vld [vmem:[%s4] sm:$0xff]
    %v2970 = vld [vmem:[%s4 + $0x8] sm:$0xff]
    %v2971 = vld [vmem:[%s4 + $0x10] sm:$0xff]
    %v2972 = vld [vmem:[%s4 + $0x18] sm:$0xff]
    %v2973 = vld [vmem:[%s4 + $0x20] sm:$0xff]
    %v2974 = vld [vmem:[%s4 + $0x28] sm:$0xff]
    %v2975 = vld [vmem:[%s4 + $0x30] sm:$0xff]
    %v2976 = vld [vmem:[%s4 + $0x38] sm:$0xff]
    %v2977 = vld [vmem:[%s4 + $0x40] sm:$0xff]
    %v2978 = vld [vmem:[%s4 + $0x48] sm:$0xff]
    %v2979 = vld [vmem:[%s4 + $0x50] sm:$0xff]
    %v2980 = vld [vmem:[%s4 + $0x58] sm:$0xff]
    %v2981 = vld [vmem:[%s4 + $0x60] sm:$0xff]
    %v2982 = vld [vmem:[%s4 + $0x68] sm:$0xff]
    %v2983 = vld [vmem:[%s4 + $0x70] sm:$0xff]
    %v2984 = vld [vmem:[%s4 + $0x78] sm:$0xff]
    %v2985 = vld [vmem:[%s4 + $0x80] sm:$0xff]
    %v2986 = vld [vmem:[%s4 + $0x88] sm:$0xff]
    %v2987 = vld [vmem:[%s4 + $0x90] sm:$0xff]
    %v2988 = vld [vmem:[%s4 + $0x98] sm:$0xff]
    %v2989 = vld [vmem:[%s4 + $0xa0] sm:$0xff]
    %v2990 = vld [vmem:[%s4 + $0xa8] sm:$0xff]
    %v2991 = vld [vmem:[%s4 + $0xb0] sm:$0xff]
    %v2992 = vld [vmem:[%s4 + $0xb8] sm:$0xff]
    %v2993 = vld [vmem:[%s4 + $0xc0] sm:$0xff]
    %v2994 = vld [vmem:[%s4 + $0xc8] sm:$0xff]
    %v2995 = vld [vmem:[%s4 + $0xd0] sm:$0xff]
    %v2996 = vld [vmem:[%s4 + $0xd8] sm:$0xff]
    %v2997 = vld [vmem:[%s4 + $0xe0] sm:$0xff]
    %v2998 = vld [vmem:[%s4 + $0xe8] sm:$0xff]
    %v2999 = vld [vmem:[%s4 + $0xf0] sm:$0xff]
    %v3000 = vld [vmem:[%s4 + $0xf8] sm:$0xff]
    %v3001 = vld [vmem:[%s4 + $0x100] sm:$0xff]
    %v3002 = vld [vmem:[%s4 + $0x108] sm:$0xff]
    %v3003 = vld [vmem:[%s4 + $0x110] sm:$0xff]
    %v3004 = vld [vmem:[%s4 + $0x118] sm:$0xff]
    %v3006 = vsel %vm397, %v2960, 0
    %3008 = vmatprep.subr.mxu0 0.0
    %3009 = vmatpush1.msra.mxu0 0.0
    %3010 = vmatprep.subr.mxu0 0.0
    %3011 = vmatpush1.msra.mxu0 0.0
    %3012 = vmatprep.subr.mxu0 0.0
    %3013 = vmatpush1.msra.mxu0 0.0
    %3014 = vmatprep.subr.mxu0 0.0
    %3015 = vmatpush1.msra.mxu0 0.0
    %3016 = vmatprep.subr.mxu0 %v3003
    %3017 = vmatpush1.msra.mxu0 %v3002
    %3018 = vmatprep.subr.mxu0 %v3000
    %3019 = vmatpush1.msra.mxu0 %v2999
    %3020 = vmatprep.subr.mxu0 %v2997
    %3021 = vmatpush1.msra.mxu0 %v2996
    %3022 = vmatprep.subr.mxu0 %v2994
    %3023 = vmatpush1.msra.mxu0 %v2993
    %3024 = vmatprep.subr.mxu0 %v2991
    %3025 = vmatpush1.msra.mxu0 %v2990
    %3026 = vmatprep.subr.mxu0 %v2988
    %3027 = vmatpush1.msra.mxu0 %v2987
    %3028 = vmatprep.subr.mxu0 %v2985
    %3029 = vmatpush1.msra.mxu0 %v2984
    %3030 = vmatprep.subr.mxu0 %v2982
    %3031 = vmatpush1.msra.mxu0 %v2981
    %3032 = vmatprep.subr.mxu0 %v2979
    %3033 = vmatpush1.msra.mxu0 %v2978
    %3034 = vmatprep.subr.mxu0 %v2976
    %3035 = vmatpush1.msra.mxu0 %v2975
    %3036 = vmatprep.subr.mxu0 %v2973
    %3037 = vmatpush1.msra.mxu0 %v2972
    %3038 = vmatprep.subr.mxu0 %v2970
    %3039 = vmatpush1.msra.mxu0 %v2969
    %3040 = vmatprep.subr.mxu0 0.0
    %3041 = vmatpush2.msra.mxu0 0.0
    %3042 = vmatprep.subr.mxu0 0.0
    %3043 = vmatpush2.msra.mxu0 0.0
    %3044 = vmatprep.subr.mxu0 0.0
    %3045 = vmatpush2.msra.mxu0 0.0
    %3046 = vmatprep.subr.mxu0 0.0
    %3047 = vmatpush2.msra.mxu0 0.0
    %3048 = vmatprep.subr.mxu0 0.0
    %3049 = vmatpush2.msra.mxu0 0.0
    %3050 = vmatprep.subr.mxu0 0.0
    %3051 = vmatpush2.msra.mxu0 0.0
    %3052 = vmatprep.subr.mxu0 0.0
    %3053 = vmatpush2.msra.mxu0 0.0
    %3054 = vmatprep.subr.mxu0 0.0
    %3055 = vmatpush2.msra.mxu0 0.0
    %3056 = vmatprep.subr.mxu0 0.0
    %3057 = vmatpush2.msra.mxu0 0.0
    %3058 = vmatprep.subr.mxu0 0.0
    %3059 = vmatpush2.msra.mxu0 0.0
    %3060 = vmatprep.subr.mxu0 0.0
    %3061 = vmatpush2.msra.mxu0 0.0
    %3062 = vmatprep.subr.mxu0 0.0
    %3063 = vmatpush2.msra.mxu0 0.0
    %3064 = vmatprep.subr.mxu0 0.0
    %3065 = vmatpush2.msra.mxu0 0.0
    %3066 = vmatprep.subr.mxu0 0.0
    %3067 = vmatpush2.msra.mxu0 0.0
    %3068 = vmatprep.subr.mxu0 0.0
    %3069 = vmatpush2.msra.mxu0 0.0
    %3070 = vmatprep.subr.mxu0 0.0
    %3071 = vmatpush2.msra.mxu0 0.0
    %3072 = vmatprep.mubr.f32.mxu0 0.0
    %3073 = vmatmul.mubr.f32.gmra.mxu0 %v3006
    %v3074 = vpop.f32.mrf.mxu0
    %v3075 = vadd.f32 0.0, %v3074
    %v3076 = vpop.f32.mrf.mxu0
    %v3077 = vadd.f32 0.0, %v3076
    %3078 = vdwg.mxu0
    %3079 = vmatprep.subr.mxu0 0.0
    %3080 = vmatpush1.msra.mxu0 0.0
    %3081 = vmatprep.subr.mxu0 0.0
    %3082 = vmatpush1.msra.mxu0 0.0
    %3083 = vmatprep.subr.mxu0 0.0
    %3084 = vmatpush1.msra.mxu0 0.0
    %3085 = vmatprep.subr.mxu0 0.0
    %3086 = vmatpush1.msra.mxu0 0.0
    %3087 = vmatprep.subr.mxu0 0.0
    %3088 = vmatpush1.msra.mxu0 %v3004
    %3089 = vmatprep.subr.mxu0 0.0
    %3090 = vmatpush1.msra.mxu0 %v3001
    %3091 = vmatprep.subr.mxu0 0.0
    %3092 = vmatpush1.msra.mxu0 %v2998
    %3093 = vmatprep.subr.mxu0 0.0
    %3094 = vmatpush1.msra.mxu0 %v2995
    %3095 = vmatprep.subr.mxu0 0.0
    %3096 = vmatpush1.msra.mxu0 %v2992
    %3097 = vmatprep.subr.mxu0 0.0
    %3098 = vmatpush1.msra.mxu0 %v2989
    %3099 = vmatprep.subr.mxu0 0.0
    %3100 = vmatpush1.msra.mxu0 %v2986
    %3101 = vmatprep.subr.mxu0 0.0
    %3102 = vmatpush1.msra.mxu0 %v2983
    %3103 = vmatprep.subr.mxu0 0.0
    %3104 = vmatpush1.msra.mxu0 %v2980
    %3105 = vmatprep.subr.mxu0 0.0
    %3106 = vmatpush1.msra.mxu0 %v2977
    %3107 = vmatprep.subr.mxu0 0.0
    %3108 = vmatpush1.msra.mxu0 %v2974
    %3109 = vmatprep.subr.mxu0 0.0
    %3110 = vmatpush1.msra.mxu0 %v2971
    %3111 = vmatprep.subr.mxu0 0.0
    %3112 = vmatpush2.msra.mxu0 0.0
    %3113 = vmatprep.subr.mxu0 0.0
    %3114 = vmatpush2.msra.mxu0 0.0
    %3115 = vmatprep.subr.mxu0 0.0
    %3116 = vmatpush2.msra.mxu0 0.0
    %3117 = vmatprep.subr.mxu0 0.0
    %3118 = vmatpush2.msra.mxu0 0.0
    %3119 = vmatprep.subr.mxu0 0.0
    %3120 = vmatpush2.msra.mxu0 0.0
    %3121 = vmatprep.subr.mxu0 0.0
    %3122 = vmatpush2.msra.mxu0 0.0
    %3123 = vmatprep.subr.mxu0 0.0
    %3124 = vmatpush2.msra.mxu0 0.0
    %3125 = vmatprep.subr.mxu0 0.0
    %3126 = vmatpush2.msra.mxu0 0.0
    %3127 = vmatprep.subr.mxu0 0.0
    %3128 = vmatpush2.msra.mxu0 0.0
    %3129 = vmatprep.subr.mxu0 0.0
    %3130 = vmatpush2.msra.mxu0 0.0
    %3131 = vmatprep.subr.mxu0 0.0
    %3132 = vmatpush2.msra.mxu0 0.0
    %3133 = vmatprep.subr.mxu0 0.0
    %3134 = vmatpush2.msra.mxu0 0.0
    %3135 = vmatprep.subr.mxu0 0.0
    %3136 = vmatpush2.msra.mxu0 0.0
    %3137 = vmatprep.subr.mxu0 0.0
    %3138 = vmatpush2.msra.mxu0 0.0
    %3139 = vmatprep.subr.mxu0 0.0
    %3140 = vmatpush2.msra.mxu0 0.0
    %3141 = vmatprep.subr.mxu0 0.0
    %3142 = vmatpush2.msra.mxu0 0.0
    %3143 = vmatprep.mubr.f32.mxu0 0.0
    %3144 = vmatmul.mubr.f32.gmra.mxu0 %v3006
    %v3145 = vpop.f32.mrf.mxu0
    %v3146 = vadd.f32 0.0, %v3145
    %v3147 = vpop.f32.mrf.mxu0
    %3148 = vdwg.mxu0
    %v3149 = vadd.f32 %v2966, %v3075
    %v3150 = vadd.f32 %v2967, %v3077
    %v3151 = vadd.f32 %v2968, %v3146
    %v3152 = vxor.u32 %v3149, 2147483648
    %v3153 = vmul.f32 %v3152, 1.442695
    %v3154 = vpow.pop %v3153
    %v3155 = vadd.f32 %v3154, 1.0
    %v3156 = vrcp.pop %v3155
    %v3157 = vmul.f32 1.0, %v3156
    %v3158 = vtanh.pop %v3149
    %v3159 = vmul.f32 %v3157, %v2736
    %3161 = vrot.lane.b32.xlu0 %v3158, 64
    %v3162 = vpop.permute.xlu0 %3161
    %v3164 = vmul.f32 %v3157, %v3162
    %3166 = vrot.lane.b32.xlu0 %v3164, 32
    %v3167 = vpop.permute.xlu0 %3166
    %v3169 = vadd.f32 %v3159, %v3167
    %v3170 = vtanh.pop %v3169
    %3172 = vrot.lane.b32.xlu0 %v3170, 64
    %v3173 = vpop.permute.xlu0 %3172
    %v3175 = vmul.f32 %v3157, %v3173
    %v3176 = vld [vmem:[%s5] sm:$0xff]
    %v3177 = vld [vmem:[%s5 + $0x8] sm:$0xff]
    %v3178 = vld [vmem:[%s5 + $0x10] sm:$0xff]
    %v3179 = vld [vmem:[%s5 + $0x18] sm:$0xff]
    %3181 = vrot.lane.b32.xlu0 %v3175, 32
    %v3182 = vpop.permute.xlu0 %3181
    %v3183 = vsel %vm580, %v3182, 0
    %3185 = vmatprep.subr.mxu0 0.0
    %3186 = vmatpush1.msra.mxu0 0.0
    %3187 = vmatprep.subr.mxu0 0.0
    %3188 = vmatpush1.msra.mxu0 0.0
    %3189 = vmatprep.subr.mxu0 0.0
    %3190 = vmatpush1.msra.mxu0 0.0
    %3191 = vmatprep.subr.mxu0 0.0
    %3192 = vmatpush1.msra.mxu0 0.0
    %3193 = vmatprep.subr.mxu0 0.0
    %3194 = vmatpush1.msra.mxu0 0.0
    %3195 = vmatprep.subr.mxu0 0.0
    %3196 = vmatpush1.msra.mxu0 0.0
    %3197 = vmatprep.subr.mxu0 0.0
    %3198 = vmatpush1.msra.mxu0 0.0
    %3199 = vmatprep.subr.mxu0 0.0
    %3200 = vmatpush1.msra.mxu0 0.0
    %3201 = vmatprep.subr.mxu0 0.0
    %3202 = vmatpush1.msra.mxu0 0.0
    %3203 = vmatprep.subr.mxu0 0.0
    %3204 = vmatpush1.msra.mxu0 0.0
    %3205 = vmatprep.subr.mxu0 0.0
    %3206 = vmatpush1.msra.mxu0 0.0
    %3207 = vmatprep.subr.mxu0 0.0
    %3208 = vmatpush1.msra.mxu0 0.0
    %3209 = vmatprep.subr.mxu0 0.0
    %3210 = vmatpush1.msra.mxu0 %v3179
    %3211 = vmatprep.subr.mxu0 0.0
    %3212 = vmatpush1.msra.mxu0 %v3178
    %3213 = vmatprep.subr.mxu0 0.0
    %3214 = vmatpush1.msra.mxu0 %v3177
    %3215 = vmatprep.subr.mxu0 0.0
    %3216 = vmatpush1.msra.mxu0 %v3176
    %3217 = vmatprep.subr.mxu0 0.0
    %3218 = vmatpush2.msra.mxu0 0.0
    %3219 = vmatprep.subr.mxu0 0.0
    %3220 = vmatpush2.msra.mxu0 0.0
    %3221 = vmatprep.subr.mxu0 0.0
    %3222 = vmatpush2.msra.mxu0 0.0
    %3223 = vmatprep.subr.mxu0 0.0
    %3224 = vmatpush2.msra.mxu0 0.0
    %3225 = vmatprep.subr.mxu0 0.0
    %3226 = vmatpush2.msra.mxu0 0.0
    %3227 = vmatprep.subr.mxu0 0.0
    %3228 = vmatpush2.msra.mxu0 0.0
    %3229 = vmatprep.subr.mxu0 0.0
    %3230 = vmatpush2.msra.mxu0 0.0
    %3231 = vmatprep.subr.mxu0 0.0
    %3232 = vmatpush2.msra.mxu0 0.0
    %3233 = vmatprep.subr.mxu0 0.0
    %3234 = vmatpush2.msra.mxu0 0.0
    %3235 = vmatprep.subr.mxu0 0.0
    %3236 = vmatpush2.msra.mxu0 0.0
    %3237 = vmatprep.subr.mxu0 0.0
    %3238 = vmatpush2.msra.mxu0 0.0
    %3239 = vmatprep.subr.mxu0 0.0
    %3240 = vmatpush2.msra.mxu0 0.0
    %3241 = vmatprep.subr.mxu0 0.0
    %3242 = vmatpush2.msra.mxu0 0.0
    %3243 = vmatprep.subr.mxu0 0.0
    %3244 = vmatpush2.msra.mxu0 0.0
    %3245 = vmatprep.subr.mxu0 0.0
    %3246 = vmatpush2.msra.mxu0 0.0
    %3247 = vmatprep.subr.mxu0 0.0
    %3248 = vmatpush2.msra.mxu0 0.0
    %3249 = vmatprep.mubr.f32.mxu0 0.0
    %3250 = vmatmul.mubr.f32.gmra.mxu0 %v3183
    %v3251 = vpop.f32.mrf.mxu0
    %v3252 = vadd.f32 0.0, %v3251
    %v3253 = vpop.f32.mrf.mxu0
    %3254 = vdwg.mxu0
    %v3255 = vadd.f32 %v3150, %v3252
    %v3256 = vxor.u32 %v3255, 2147483648
    %v3257 = vmul.f32 %v3256, 1.442695
    %v3258 = vpow.pop %v3257
    %v3259 = vadd.f32 %v3258, 1.0
    %v3260 = vrcp.pop %v3259
    %v3261 = vmul.f32 1.0, %v3260
    %v3262 = vtanh.pop %v3255
    %v3263 = vmul.f32 %v3261, %v2840
    %3265 = vrot.lane.b32.xlu0 %v3262, 64
    %v3266 = vpop.permute.xlu0 %3265
    %v3268 = vmul.f32 %v3261, %v3266
    %3270 = vrot.lane.b32.xlu0 %v3268, 32
    %v3271 = vpop.permute.xlu0 %3270
    %v3273 = vadd.f32 %v3263, %v3271
    %v3274 = vtanh.pop %v3273
    %3276 = vrot.lane.b32.xlu0 %v3274, 64
    %v3277 = vpop.permute.xlu0 %3276
    %v3279 = vmul.f32 %v3261, %v3277
    %v3280 = vld [vmem:[%s678] sm:$0xff]
    %v3281 = vld [vmem:[%s678 + $0x8] sm:$0xff]
    %v3282 = vld [vmem:[%s678 + $0x10] sm:$0xff]
    %v3283 = vld [vmem:[%s678 + $0x18] sm:$0xff]
    %3285 = vrot.lane.b32.xlu0 %v3279, 32
    %v3286 = vpop.permute.xlu0 %3285
    %v3287 = vsel %vm580, %v3286, 0
    %3289 = vmatprep.subr.mxu0 0.0
    %3290 = vmatpush1.msra.mxu0 0.0
    %3291 = vmatprep.subr.mxu0 0.0
    %3292 = vmatpush1.msra.mxu0 0.0
    %3293 = vmatprep.subr.mxu0 0.0
    %3294 = vmatpush1.msra.mxu0 0.0
    %3295 = vmatprep.subr.mxu0 0.0
    %3296 = vmatpush1.msra.mxu0 0.0
    %3297 = vmatprep.subr.mxu0 0.0
    %3298 = vmatpush1.msra.mxu0 0.0
    %3299 = vmatprep.subr.mxu0 0.0
    %3300 = vmatpush1.msra.mxu0 0.0
    %3301 = vmatprep.subr.mxu0 0.0
    %3302 = vmatpush1.msra.mxu0 0.0
    %3303 = vmatprep.subr.mxu0 0.0
    %3304 = vmatpush1.msra.mxu0 0.0
    %3305 = vmatprep.subr.mxu0 0.0
    %3306 = vmatpush1.msra.mxu0 0.0
    %3307 = vmatprep.subr.mxu0 0.0
    %3308 = vmatpush1.msra.mxu0 0.0
    %3309 = vmatprep.subr.mxu0 0.0
    %3310 = vmatpush1.msra.mxu0 0.0
    %3311 = vmatprep.subr.mxu0 0.0
    %3312 = vmatpush1.msra.mxu0 0.0
    %3313 = vmatprep.subr.mxu0 0.0
    %3314 = vmatpush1.msra.mxu0 %v3283
    %3315 = vmatprep.subr.mxu0 0.0
    %3316 = vmatpush1.msra.mxu0 %v3282
    %3317 = vmatprep.subr.mxu0 0.0
    %3318 = vmatpush1.msra.mxu0 %v3281
    %3319 = vmatprep.subr.mxu0 0.0
    %3320 = vmatpush1.msra.mxu0 %v3280
    %3321 = vmatprep.subr.mxu0 0.0
    %3322 = vmatpush2.msra.mxu0 0.0
    %3323 = vmatprep.subr.mxu0 0.0
    %3324 = vmatpush2.msra.mxu0 0.0
    %3325 = vmatprep.subr.mxu0 0.0
    %3326 = vmatpush2.msra.mxu0 0.0
    %3327 = vmatprep.subr.mxu0 0.0
    %3328 = vmatpush2.msra.mxu0 0.0
    %3329 = vmatprep.subr.mxu0 0.0
    %3330 = vmatpush2.msra.mxu0 0.0
    %3331 = vmatprep.subr.mxu0 0.0
    %3332 = vmatpush2.msra.mxu0 0.0
    %3333 = vmatprep.subr.mxu0 0.0
    %3334 = vmatpush2.msra.mxu0 0.0
    %3335 = vmatprep.subr.mxu0 0.0
    %3336 = vmatpush2.msra.mxu0 0.0
    %3337 = vmatprep.subr.mxu0 0.0
    %3338 = vmatpush2.msra.mxu0 0.0
    %3339 = vmatprep.subr.mxu0 0.0
    %3340 = vmatpush2.msra.mxu0 0.0
    %3341 = vmatprep.subr.mxu0 0.0
    %3342 = vmatpush2.msra.mxu0 0.0
    %3343 = vmatprep.subr.mxu0 0.0
    %3344 = vmatpush2.msra.mxu0 0.0
    %3345 = vmatprep.subr.mxu0 0.0
    %3346 = vmatpush2.msra.mxu0 0.0
    %3347 = vmatprep.subr.mxu0 0.0
    %3348 = vmatpush2.msra.mxu0 0.0
    %3349 = vmatprep.subr.mxu0 0.0
    %3350 = vmatpush2.msra.mxu0 0.0
    %3351 = vmatprep.subr.mxu0 0.0
    %3352 = vmatpush2.msra.mxu0 0.0
    %3353 = vmatprep.mubr.f32.mxu0 0.0
    %3354 = vmatmul.mubr.f32.gmra.mxu0 %v3287
    %v3355 = vpop.f32.mrf.mxu0
    %v3356 = vadd.f32 0.0, %v3355
    %v3357 = vpop.f32.mrf.mxu0
    %3358 = vdwg.mxu0
    %v3359 = vadd.f32 %v3151, %v3356
    %v3360 = vxor.u32 %v3359, 2147483648
    %v3361 = vmul.f32 %v3360, 1.442695
    %v3362 = vpow.pop %v3361
    %v3363 = vadd.f32 %v3362, 1.0
    %v3364 = vrcp.pop %v3363
    %v3365 = vmul.f32 1.0, %v3364
    %v3366 = vtanh.pop %v3359
    %v3367 = vmul.f32 %v3365, %v2944
    %3369 = vrot.lane.b32.xlu0 %v3366, 64
    %v3370 = vpop.permute.xlu0 %3369
    %v3372 = vmul.f32 %v3365, %v3370
    %3374 = vrot.lane.b32.xlu0 %v3372, 32
    %v3375 = vpop.permute.xlu0 %3374
    %v3377 = vadd.f32 %v3367, %v3375
    %v3378 = vtanh.pop %v3377
    %3380 = vrot.lane.b32.xlu0 %v3378, 64
    %v3381 = vpop.permute.xlu0 %3380
    %v3383 = vmul.f32 %v3365, %v3381
    %3385 = vrot.lane.b32.xlu0 %v3279, 64
    %v3386 = vpop.permute.xlu0 %3385
    %3389 = vrot.lane.b32.xlu0 %v3383, 96
    %v3390 = vpop.permute.xlu0 %3389
    %v3392 = vsel %vm580, %v3182, %v3386
    %v3393 = vsel %vm795, %v3392, %v3390
    %s3394 = scalar_lea.vmem [#allocation3], 48
    %3395 = vst.msk [vmem:[%s3394] sm:$0xff] %vm397, %v3393
    %s3396 = smul.u32 7, 3
    %s3397 = smul.addr %s3396, 8
    %s3398 = scalar_lea.vmem [#allocation2], %s3397
    %v3399 = vld [vmem:[%s3398] sm:$0xff]
    %v3400 = vld [vmem:[%s3398 + $0x8] sm:$0xff]
    %v3401 = vld [vmem:[%s3398 + $0x10] sm:$0xff]
    %v3402 = vld [vmem:[%s4] sm:$0xff]
    %v3403 = vld [vmem:[%s4 + $0x8] sm:$0xff]
    %v3404 = vld [vmem:[%s4 + $0x10] sm:$0xff]
    %v3405 = vld [vmem:[%s4 + $0x18] sm:$0xff]
    %v3406 = vld [vmem:[%s4 + $0x20] sm:$0xff]
    %v3407 = vld [vmem:[%s4 + $0x28] sm:$0xff]
    %v3408 = vld [vmem:[%s4 + $0x30] sm:$0xff]
    %v3409 = vld [vmem:[%s4 + $0x38] sm:$0xff]
    %v3410 = vld [vmem:[%s4 + $0x40] sm:$0xff]
    %v3411 = vld [vmem:[%s4 + $0x48] sm:$0xff]
    %v3412 = vld [vmem:[%s4 + $0x50] sm:$0xff]
    %v3413 = vld [vmem:[%s4 + $0x58] sm:$0xff]
    %v3414 = vld [vmem:[%s4 + $0x60] sm:$0xff]
    %v3415 = vld [vmem:[%s4 + $0x68] sm:$0xff]
    %v3416 = vld [vmem:[%s4 + $0x70] sm:$0xff]
    %v3417 = vld [vmem:[%s4 + $0x78] sm:$0xff]
    %v3418 = vld [vmem:[%s4 + $0x80] sm:$0xff]
    %v3419 = vld [vmem:[%s4 + $0x88] sm:$0xff]
    %v3420 = vld [vmem:[%s4 + $0x90] sm:$0xff]
    %v3421 = vld [vmem:[%s4 + $0x98] sm:$0xff]
    %v3422 = vld [vmem:[%s4 + $0xa0] sm:$0xff]
    %v3423 = vld [vmem:[%s4 + $0xa8] sm:$0xff]
    %v3424 = vld [vmem:[%s4 + $0xb0] sm:$0xff]
    %v3425 = vld [vmem:[%s4 + $0xb8] sm:$0xff]
    %v3426 = vld [vmem:[%s4 + $0xc0] sm:$0xff]
    %v3427 = vld [vmem:[%s4 + $0xc8] sm:$0xff]
    %v3428 = vld [vmem:[%s4 + $0xd0] sm:$0xff]
    %v3429 = vld [vmem:[%s4 + $0xd8] sm:$0xff]
    %v3430 = vld [vmem:[%s4 + $0xe0] sm:$0xff]
    %v3431 = vld [vmem:[%s4 + $0xe8] sm:$0xff]
    %v3432 = vld [vmem:[%s4 + $0xf0] sm:$0xff]
    %v3433 = vld [vmem:[%s4 + $0xf8] sm:$0xff]
    %v3434 = vld [vmem:[%s4 + $0x100] sm:$0xff]
    %v3435 = vld [vmem:[%s4 + $0x108] sm:$0xff]
    %v3436 = vld [vmem:[%s4 + $0x110] sm:$0xff]
    %v3437 = vld [vmem:[%s4 + $0x118] sm:$0xff]
    %v3439 = vsel %vm397, %v3393, 0
    %3441 = vmatprep.subr.mxu0 0.0
    %3442 = vmatpush1.msra.mxu0 0.0
    %3443 = vmatprep.subr.mxu0 0.0
    %3444 = vmatpush1.msra.mxu0 0.0
    %3445 = vmatprep.subr.mxu0 0.0
    %3446 = vmatpush1.msra.mxu0 0.0
    %3447 = vmatprep.subr.mxu0 0.0
    %3448 = vmatpush1.msra.mxu0 0.0
    %3449 = vmatprep.subr.mxu0 %v3436
    %3450 = vmatpush1.msra.mxu0 %v3435
    %3451 = vmatprep.subr.mxu0 %v3433
    %3452 = vmatpush1.msra.mxu0 %v3432
    %3453 = vmatprep.subr.mxu0 %v3430
    %3454 = vmatpush1.msra.mxu0 %v3429
    %3455 = vmatprep.subr.mxu0 %v3427
    %3456 = vmatpush1.msra.mxu0 %v3426
    %3457 = vmatprep.subr.mxu0 %v3424
    %3458 = vmatpush1.msra.mxu0 %v3423
    %3459 = vmatprep.subr.mxu0 %v3421
    %3460 = vmatpush1.msra.mxu0 %v3420
    %3461 = vmatprep.subr.mxu0 %v3418
    %3462 = vmatpush1.msra.mxu0 %v3417
    %3463 = vmatprep.subr.mxu0 %v3415
    %3464 = vmatpush1.msra.mxu0 %v3414
    %3465 = vmatprep.subr.mxu0 %v3412
    %3466 = vmatpush1.msra.mxu0 %v3411
    %3467 = vmatprep.subr.mxu0 %v3409
    %3468 = vmatpush1.msra.mxu0 %v3408
    %3469 = vmatprep.subr.mxu0 %v3406
    %3470 = vmatpush1.msra.mxu0 %v3405
    %3471 = vmatprep.subr.mxu0 %v3403
    %3472 = vmatpush1.msra.mxu0 %v3402
    %3473 = vmatprep.subr.mxu0 0.0
    %3474 = vmatpush2.msra.mxu0 0.0
    %3475 = vmatprep.subr.mxu0 0.0
    %3476 = vmatpush2.msra.mxu0 0.0
    %3477 = vmatprep.subr.mxu0 0.0
    %3478 = vmatpush2.msra.mxu0 0.0
    %3479 = vmatprep.subr.mxu0 0.0
    %3480 = vmatpush2.msra.mxu0 0.0
    %3481 = vmatprep.subr.mxu0 0.0
    %3482 = vmatpush2.msra.mxu0 0.0
    %3483 = vmatprep.subr.mxu0 0.0
    %3484 = vmatpush2.msra.mxu0 0.0
    %3485 = vmatprep.subr.mxu0 0.0
    %3486 = vmatpush2.msra.mxu0 0.0
    %3487 = vmatprep.subr.mxu0 0.0
    %3488 = vmatpush2.msra.mxu0 0.0
    %3489 = vmatprep.subr.mxu0 0.0
    %3490 = vmatpush2.msra.mxu0 0.0
    %3491 = vmatprep.subr.mxu0 0.0
    %3492 = vmatpush2.msra.mxu0 0.0
    %3493 = vmatprep.subr.mxu0 0.0
    %3494 = vmatpush2.msra.mxu0 0.0
    %3495 = vmatprep.subr.mxu0 0.0
    %3496 = vmatpush2.msra.mxu0 0.0
    %3497 = vmatprep.subr.mxu0 0.0
    %3498 = vmatpush2.msra.mxu0 0.0
    %3499 = vmatprep.subr.mxu0 0.0
    %3500 = vmatpush2.msra.mxu0 0.0
    %3501 = vmatprep.subr.mxu0 0.0
    %3502 = vmatpush2.msra.mxu0 0.0
    %3503 = vmatprep.subr.mxu0 0.0
    %3504 = vmatpush2.msra.mxu0 0.0
    %3505 = vmatprep.mubr.f32.mxu0 0.0
    %3506 = vmatmul.mubr.f32.gmra.mxu0 %v3439
    %v3507 = vpop.f32.mrf.mxu0
    %v3508 = vadd.f32 0.0, %v3507
    %v3509 = vpop.f32.mrf.mxu0
    %v3510 = vadd.f32 0.0, %v3509
    %3511 = vdwg.mxu0
    %3512 = vmatprep.subr.mxu0 0.0
    %3513 = vmatpush1.msra.mxu0 0.0
    %3514 = vmatprep.subr.mxu0 0.0
    %3515 = vmatpush1.msra.mxu0 0.0
    %3516 = vmatprep.subr.mxu0 0.0
    %3517 = vmatpush1.msra.mxu0 0.0
    %3518 = vmatprep.subr.mxu0 0.0
    %3519 = vmatpush1.msra.mxu0 0.0
    %3520 = vmatprep.subr.mxu0 0.0
    %3521 = vmatpush1.msra.mxu0 %v3437
    %3522 = vmatprep.subr.mxu0 0.0
    %3523 = vmatpush1.msra.mxu0 %v3434
    %3524 = vmatprep.subr.mxu0 0.0
    %3525 = vmatpush1.msra.mxu0 %v3431
    %3526 = vmatprep.subr.mxu0 0.0
    %3527 = vmatpush1.msra.mxu0 %v3428
    %3528 = vmatprep.subr.mxu0 0.0
    %3529 = vmatpush1.msra.mxu0 %v3425
    %3530 = vmatprep.subr.mxu0 0.0
    %3531 = vmatpush1.msra.mxu0 %v3422
    %3532 = vmatprep.subr.mxu0 0.0
    %3533 = vmatpush1.msra.mxu0 %v3419
    %3534 = vmatprep.subr.mxu0 0.0
    %3535 = vmatpush1.msra.mxu0 %v3416
    %3536 = vmatprep.subr.mxu0 0.0
    %3537 = vmatpush1.msra.mxu0 %v3413
    %3538 = vmatprep.subr.mxu0 0.0
    %3539 = vmatpush1.msra.mxu0 %v3410
    %3540 = vmatprep.subr.mxu0 0.0
    %3541 = vmatpush1.msra.mxu0 %v3407
    %3542 = vmatprep.subr.mxu0 0.0
    %3543 = vmatpush1.msra.mxu0 %v3404
    %3544 = vmatprep.subr.mxu0 0.0
    %3545 = vmatpush2.msra.mxu0 0.0
    %3546 = vmatprep.subr.mxu0 0.0
    %3547 = vmatpush2.msra.mxu0 0.0
    %3548 = vmatprep.subr.mxu0 0.0
    %3549 = vmatpush2.msra.mxu0 0.0
    %3550 = vmatprep.subr.mxu0 0.0
    %3551 = vmatpush2.msra.mxu0 0.0
    %3552 = vmatprep.subr.mxu0 0.0
    %3553 = vmatpush2.msra.mxu0 0.0
    %3554 = vmatprep.subr.mxu0 0.0
    %3555 = vmatpush2.msra.mxu0 0.0
    %3556 = vmatprep.subr.mxu0 0.0
    %3557 = vmatpush2.msra.mxu0 0.0
    %3558 = vmatprep.subr.mxu0 0.0
    %3559 = vmatpush2.msra.mxu0 0.0
    %3560 = vmatprep.subr.mxu0 0.0
    %3561 = vmatpush2.msra.mxu0 0.0
    %3562 = vmatprep.subr.mxu0 0.0
    %3563 = vmatpush2.msra.mxu0 0.0
    %3564 = vmatprep.subr.mxu0 0.0
    %3565 = vmatpush2.msra.mxu0 0.0
    %3566 = vmatprep.subr.mxu0 0.0
    %3567 = vmatpush2.msra.mxu0 0.0
    %3568 = vmatprep.subr.mxu0 0.0
    %3569 = vmatpush2.msra.mxu0 0.0
    %3570 = vmatprep.subr.mxu0 0.0
    %3571 = vmatpush2.msra.mxu0 0.0
    %3572 = vmatprep.subr.mxu0 0.0
    %3573 = vmatpush2.msra.mxu0 0.0
    %3574 = vmatprep.subr.mxu0 0.0
    %3575 = vmatpush2.msra.mxu0 0.0
    %3576 = vmatprep.mubr.f32.mxu0 0.0
    %3577 = vmatmul.mubr.f32.gmra.mxu0 %v3439
    %v3578 = vpop.f32.mrf.mxu0
    %v3579 = vadd.f32 0.0, %v3578
    %v3580 = vpop.f32.mrf.mxu0
    %3581 = vdwg.mxu0
    %v3582 = vadd.f32 %v3399, %v3508
    %v3583 = vadd.f32 %v3400, %v3510
    %v3584 = vadd.f32 %v3401, %v3579
    %v3585 = vxor.u32 %v3582, 2147483648
    %v3586 = vmul.f32 %v3585, 1.442695
    %v3587 = vpow.pop %v3586
    %v3588 = vadd.f32 %v3587, 1.0
    %v3589 = vrcp.pop %v3588
    %v3590 = vmul.f32 1.0, %v3589
    %v3591 = vtanh.pop %v3582
    %v3592 = vmul.f32 %v3590, %v3169
    %3594 = vrot.lane.b32.xlu0 %v3591, 64
    %v3595 = vpop.permute.xlu0 %3594
    %v3597 = vmul.f32 %v3590, %v3595
    %3599 = vrot.lane.b32.xlu0 %v3597, 32
    %v3600 = vpop.permute.xlu0 %3599
    %v3602 = vadd.f32 %v3592, %v3600
    %v3603 = vtanh.pop %v3602
    %3605 = vrot.lane.b32.xlu0 %v3603, 64
    %v3606 = vpop.permute.xlu0 %3605
    %v3608 = vmul.f32 %v3590, %v3606
    %v3609 = vld [vmem:[%s5] sm:$0xff]
    %v3610 = vld [vmem:[%s5 + $0x8] sm:$0xff]
    %v3611 = vld [vmem:[%s5 + $0x10] sm:$0xff]
    %v3612 = vld [vmem:[%s5 + $0x18] sm:$0xff]
    %3614 = vrot.lane.b32.xlu0 %v3608, 32
    %v3615 = vpop.permute.xlu0 %3614
    %v3616 = vsel %vm580, %v3615, 0
    %3618 = vmatprep.subr.mxu0 0.0
    %3619 = vmatpush1.msra.mxu0 0.0
    %3620 = vmatprep.subr.mxu0 0.0
    %3621 = vmatpush1.msra.mxu0 0.0
    %3622 = vmatprep.subr.mxu0 0.0
    %3623 = vmatpush1.msra.mxu0 0.0
    %3624 = vmatprep.subr.mxu0 0.0
    %3625 = vmatpush1.msra.mxu0 0.0
    %3626 = vmatprep.subr.mxu0 0.0
    %3627 = vmatpush1.msra.mxu0 0.0
    %3628 = vmatprep.subr.mxu0 0.0
    %3629 = vmatpush1.msra.mxu0 0.0
    %3630 = vmatprep.subr.mxu0 0.0
    %3631 = vmatpush1.msra.mxu0 0.0
    %3632 = vmatprep.subr.mxu0 0.0
    %3633 = vmatpush1.msra.mxu0 0.0
    %3634 = vmatprep.subr.mxu0 0.0
    %3635 = vmatpush1.msra.mxu0 0.0
    %3636 = vmatprep.subr.mxu0 0.0
    %3637 = vmatpush1.msra.mxu0 0.0
    %3638 = vmatprep.subr.mxu0 0.0
    %3639 = vmatpush1.msra.mxu0 0.0
    %3640 = vmatprep.subr.mxu0 0.0
    %3641 = vmatpush1.msra.mxu0 0.0
    %3642 = vmatprep.subr.mxu0 0.0
    %3643 = vmatpush1.msra.mxu0 %v3612
    %3644 = vmatprep.subr.mxu0 0.0
    %3645 = vmatpush1.msra.mxu0 %v3611
    %3646 = vmatprep.subr.mxu0 0.0
    %3647 = vmatpush1.msra.mxu0 %v3610
    %3648 = vmatprep.subr.mxu0 0.0
    %3649 = vmatpush1.msra.mxu0 %v3609
    %3650 = vmatprep.subr.mxu0 0.0
    %3651 = vmatpush2.msra.mxu0 0.0
    %3652 = vmatprep.subr.mxu0 0.0
    %3653 = vmatpush2.msra.mxu0 0.0
    %3654 = vmatprep.subr.mxu0 0.0
    %3655 = vmatpush2.msra.mxu0 0.0
    %3656 = vmatprep.subr.mxu0 0.0
    %3657 = vmatpush2.msra.mxu0 0.0
    %3658 = vmatprep.subr.mxu0 0.0
    %3659 = vmatpush2.msra.mxu0 0.0
    %3660 = vmatprep.subr.mxu0 0.0
    %3661 = vmatpush2.msra.mxu0 0.0
    %3662 = vmatprep.subr.mxu0 0.0
    %3663 = vmatpush2.msra.mxu0 0.0
    %3664 = vmatprep.subr.mxu0 0.0
    %3665 = vmatpush2.msra.mxu0 0.0
    %3666 = vmatprep.subr.mxu0 0.0
    %3667 = vmatpush2.msra.mxu0 0.0
    %3668 = vmatprep.subr.mxu0 0.0
    %3669 = vmatpush2.msra.mxu0 0.0
    %3670 = vmatprep.subr.mxu0 0.0
    %3671 = vmatpush2.msra.mxu0 0.0
    %3672 = vmatprep.subr.mxu0 0.0
    %3673 = vmatpush2.msra.mxu0 0.0
    %3674 = vmatprep.subr.mxu0 0.0
    %3675 = vmatpush2.msra.mxu0 0.0
    %3676 = vmatprep.subr.mxu0 0.0
    %3677 = vmatpush2.msra.mxu0 0.0
    %3678 = vmatprep.subr.mxu0 0.0
    %3679 = vmatpush2.msra.mxu0 0.0
    %3680 = vmatprep.subr.mxu0 0.0
    %3681 = vmatpush2.msra.mxu0 0.0
    %3682 = vmatprep.mubr.f32.mxu0 0.0
    %3683 = vmatmul.mubr.f32.gmra.mxu0 %v3616
    %v3684 = vpop.f32.mrf.mxu0
    %v3685 = vadd.f32 0.0, %v3684
    %v3686 = vpop.f32.mrf.mxu0
    %3687 = vdwg.mxu0
    %v3688 = vadd.f32 %v3583, %v3685
    %v3689 = vxor.u32 %v3688, 2147483648
    %v3690 = vmul.f32 %v3689, 1.442695
    %v3691 = vpow.pop %v3690
    %v3692 = vadd.f32 %v3691, 1.0
    %v3693 = vrcp.pop %v3692
    %v3694 = vmul.f32 1.0, %v3693
    %v3695 = vtanh.pop %v3688
    %v3696 = vmul.f32 %v3694, %v3273
    %3698 = vrot.lane.b32.xlu0 %v3695, 64
    %v3699 = vpop.permute.xlu0 %3698
    %v3701 = vmul.f32 %v3694, %v3699
    %3703 = vrot.lane.b32.xlu0 %v3701, 32
    %v3704 = vpop.permute.xlu0 %3703
    %v3706 = vadd.f32 %v3696, %v3704
    %v3707 = vtanh.pop %v3706
    %3709 = vrot.lane.b32.xlu0 %v3707, 64
    %v3710 = vpop.permute.xlu0 %3709
    %v3712 = vmul.f32 %v3694, %v3710
    %v3713 = vld [vmem:[%s678] sm:$0xff]
    %v3714 = vld [vmem:[%s678 + $0x8] sm:$0xff]
    %v3715 = vld [vmem:[%s678 + $0x10] sm:$0xff]
    %v3716 = vld [vmem:[%s678 + $0x18] sm:$0xff]
    %3718 = vrot.lane.b32.xlu0 %v3712, 32
    %v3719 = vpop.permute.xlu0 %3718
    %v3720 = vsel %vm580, %v3719, 0
    %3722 = vmatprep.subr.mxu0 0.0
    %3723 = vmatpush1.msra.mxu0 0.0
    %3724 = vmatprep.subr.mxu0 0.0
    %3725 = vmatpush1.msra.mxu0 0.0
    %3726 = vmatprep.subr.mxu0 0.0
    %3727 = vmatpush1.msra.mxu0 0.0
    %3728 = vmatprep.subr.mxu0 0.0
    %3729 = vmatpush1.msra.mxu0 0.0
    %3730 = vmatprep.subr.mxu0 0.0
    %3731 = vmatpush1.msra.mxu0 0.0
    %3732 = vmatprep.subr.mxu0 0.0
    %3733 = vmatpush1.msra.mxu0 0.0
    %3734 = vmatprep.subr.mxu0 0.0
    %3735 = vmatpush1.msra.mxu0 0.0
    %3736 = vmatprep.subr.mxu0 0.0
    %3737 = vmatpush1.msra.mxu0 0.0
    %3738 = vmatprep.subr.mxu0 0.0
    %3739 = vmatpush1.msra.mxu0 0.0
    %3740 = vmatprep.subr.mxu0 0.0
    %3741 = vmatpush1.msra.mxu0 0.0
    %3742 = vmatprep.subr.mxu0 0.0
    %3743 = vmatpush1.msra.mxu0 0.0
    %3744 = vmatprep.subr.mxu0 0.0
    %3745 = vmatpush1.msra.mxu0 0.0
    %3746 = vmatprep.subr.mxu0 0.0
    %3747 = vmatpush1.msra.mxu0 %v3716
    %3748 = vmatprep.subr.mxu0 0.0
    %3749 = vmatpush1.msra.mxu0 %v3715
    %3750 = vmatprep.subr.mxu0 0.0
    %3751 = vmatpush1.msra.mxu0 %v3714
    %3752 = vmatprep.subr.mxu0 0.0
    %3753 = vmatpush1.msra.mxu0 %v3713
    %3754 = vmatprep.subr.mxu0 0.0
    %3755 = vmatpush2.msra.mxu0 0.0
    %3756 = vmatprep.subr.mxu0 0.0
    %3757 = vmatpush2.msra.mxu0 0.0
    %3758 = vmatprep.subr.mxu0 0.0
    %3759 = vmatpush2.msra.mxu0 0.0
    %3760 = vmatprep.subr.mxu0 0.0
    %3761 = vmatpush2.msra.mxu0 0.0
    %3762 = vmatprep.subr.mxu0 0.0
    %3763 = vmatpush2.msra.mxu0 0.0
    %3764 = vmatprep.subr.mxu0 0.0
    %3765 = vmatpush2.msra.mxu0 0.0
    %3766 = vmatprep.subr.mxu0 0.0
    %3767 = vmatpush2.msra.mxu0 0.0
    %3768 = vmatprep.subr.mxu0 0.0
    %3769 = vmatpush2.msra.mxu0 0.0
    %3770 = vmatprep.subr.mxu0 0.0
    %3771 = vmatpush2.msra.mxu0 0.0
    %3772 = vmatprep.subr.mxu0 0.0
    %3773 = vmatpush2.msra.mxu0 0.0
    %3774 = vmatprep.subr.mxu0 0.0
    %3775 = vmatpush2.msra.mxu0 0.0
    %3776 = vmatprep.subr.mxu0 0.0
    %3777 = vmatpush2.msra.mxu0 0.0
    %3778 = vmatprep.subr.mxu0 0.0
    %3779 = vmatpush2.msra.mxu0 0.0
    %3780 = vmatprep.subr.mxu0 0.0
    %3781 = vmatpush2.msra.mxu0 0.0
    %3782 = vmatprep.subr.mxu0 0.0
    %3783 = vmatpush2.msra.mxu0 0.0
    %3784 = vmatprep.subr.mxu0 0.0
    %3785 = vmatpush2.msra.mxu0 0.0
    %3786 = vmatprep.mubr.f32.mxu0 0.0
    %3787 = vmatmul.mubr.f32.gmra.mxu0 %v3720
    %v3788 = vpop.f32.mrf.mxu0
    %v3789 = vadd.f32 0.0, %v3788
    %v3790 = vpop.f32.mrf.mxu0
    %3791 = vdwg.mxu0
    %v3792 = vadd.f32 %v3584, %v3789
    %v3793 = vxor.u32 %v3792, 2147483648
    %v3794 = vmul.f32 %v3793, 1.442695
    %v3795 = vpow.pop %v3794
    %v3796 = vadd.f32 %v3795, 1.0
    %v3797 = vrcp.pop %v3796
    %v3798 = vmul.f32 1.0, %v3797
    %v3799 = vtanh.pop %v3792
    %v3800 = vmul.f32 %v3798, %v3377
    %3802 = vrot.lane.b32.xlu0 %v3799, 64
    %v3803 = vpop.permute.xlu0 %3802
    %v3805 = vmul.f32 %v3798, %v3803
    %3807 = vrot.lane.b32.xlu0 %v3805, 32
    %v3808 = vpop.permute.xlu0 %3807
    %v3810 = vadd.f32 %v3800, %v3808
    %v3811 = vtanh.pop %v3810
    %3813 = vrot.lane.b32.xlu0 %v3811, 64
    %v3814 = vpop.permute.xlu0 %3813
    %v3816 = vmul.f32 %v3798, %v3814
    %3818 = vrot.lane.b32.xlu0 %v3712, 64
    %v3819 = vpop.permute.xlu0 %3818
    %3822 = vrot.lane.b32.xlu0 %v3816, 96
    %v3823 = vpop.permute.xlu0 %3822
    %v3825 = vsel %vm580, %v3615, %v3819
    %v3826 = vsel %vm795, %v3825, %v3823
    %s3827 = scalar_lea.vmem [#allocation3], 56
    %3828 = vst.msk [vmem:[%s3827] sm:$0xff] %vm397, %v3826
    %3829 = vst.msk [vmem:[%s10] sm:$0xff] %vm397, %v3826
    %3831 = vrot.lane.b32.xlu0 %v3602, 96
    %v3832 = vpop.permute.xlu0 %3831
    %3835 = vrot.lane.b32.xlu0 %v3810, 32
    %v3836 = vpop.permute.xlu0 %3835
    %v3838 = vsel %vm580, %v3832, %v3706
    %v3839 = vsel %vm795, %v3838, %v3836
    %3840 = vst.msk [vmem:[%s11] sm:$0xff] %vm397, %v3839
    %v3841 = vld [vmem:[#allocation3] sm:$0xff]
    %v3842 = vld [vmem:[#allocation3 + $0x8] sm:$0xff]
    %v3843 = vld [vmem:[#allocation3 + $0x10] sm:$0xff]
    %v3844 = vld [vmem:[#allocation3 + $0x18] sm:$0xff]
    %v3845 = vld [vmem:[#allocation3 + $0x20] sm:$0xff]
    %v3846 = vld [vmem:[#allocation3 + $0x28] sm:$0xff]
    %v3847 = vld [vmem:[#allocation3 + $0x30] sm:$0xff]
    %v3848 = vld [vmem:[#allocation3 + $0x38] sm:$0xff]
    %v3849 = vld [vmem:[#allocation4] sm:$0xff]
    %v3850 = vld [vmem:[#allocation4 + $0x8] sm:$0xff]
    %v3851 = vld [vmem:[#allocation4 + $0x10] sm:$0xff]
    %v3852 = vld [vmem:[#allocation4 + $0x18] sm:$0xff]
    %v3853 = vld [vmem:[#allocation4 + $0x20] sm:$0xff]
    %v3854 = vld [vmem:[#allocation4 + $0x28] sm:$0xff]
    %v3855 = vld [vmem:[#allocation4 + $0x30] sm:$0xff]
    %v3856 = vld [vmem:[#allocation4 + $0x38] sm:$0xff]
    %v3857 = vld [vmem:[#allocation4 + $0x40] sm:$0xff]
    %v3858 = vld [vmem:[#allocation4 + $0x48] sm:$0xff]
    %v3859 = vld [vmem:[#allocation4 + $0x50] sm:$0xff]
    %v3860 = vld [vmem:[#allocation4 + $0x58] sm:$0xff]
    %v3861 = vld [vmem:[%s8] sm:$0x1]
    %v3863 = vlaneseq
    %v3864 = vshrl.u32 %v3863, 7
    %v3865 = vsub.s32 0, %v3864
    %v3866 = vrot.slane %v3861, %v3865
    %v3869 = vsel %vm397, %v3841, 0
    %v3872 = vsel %vm397, %v3842, 0
    %v3875 = vsel %vm397, %v3843, 0
    %v3878 = vsel %vm397, %v3844, 0
    %v3881 = vsel %vm397, %v3845, 0
    %v3884 = vsel %vm397, %v3846, 0
    %v3887 = vsel %vm397, %v3847, 0
    %v3890 = vsel %vm397, %v3848, 0
    %3892 = vmatprep.subr.mxu0 0.0
    %3893 = vmatpush1.msra.mxu0 0.0
    %3894 = vmatprep.subr.mxu0 0.0
    %3895 = vmatpush1.msra.mxu0 0.0
    %3896 = vmatprep.subr.mxu0 0.0
    %3897 = vmatpush1.msra.mxu0 0.0
    %3898 = vmatprep.subr.mxu0 0.0
    %3899 = vmatpush1.msra.mxu0 0.0
    %3900 = vmatprep.subr.mxu0 0.0
    %3901 = vmatpush1.msra.mxu0 %v3860
    %3902 = vmatprep.subr.mxu0 0.0
    %3903 = vmatpush1.msra.mxu0 %v3859
    %3904 = vmatprep.subr.mxu0 0.0
    %3905 = vmatpush1.msra.mxu0 %v3858
    %3906 = vmatprep.subr.mxu0 0.0
    %3907 = vmatpush1.msra.mxu0 %v3857
    %3908 = vmatprep.subr.mxu0 0.0
    %3909 = vmatpush1.msra.mxu0 %v3856
    %3910 = vmatprep.subr.mxu0 0.0
    %3911 = vmatpush1.msra.mxu0 %v3855
    %3912 = vmatprep.subr.mxu0 0.0
    %3913 = vmatpush1.msra.mxu0 %v3854
    %3914 = vmatprep.subr.mxu0 0.0
    %3915 = vmatpush1.msra.mxu0 %v3853
    %3916 = vmatprep.subr.mxu0 0.0
    %3917 = vmatpush1.msra.mxu0 %v3852
    %3918 = vmatprep.subr.mxu0 0.0
    %3919 = vmatpush1.msra.mxu0 %v3851
    %3920 = vmatprep.subr.mxu0 0.0
    %3921 = vmatpush1.msra.mxu0 %v3850
    %3922 = vmatprep.subr.mxu0 0.0
    %3923 = vmatpush1.msra.mxu0 %v3849
    %3924 = vmatprep.subr.mxu0 0.0
    %3925 = vmatpush2.msra.mxu0 0.0
    %3926 = vmatprep.subr.mxu0 0.0
    %3927 = vmatpush2.msra.mxu0 0.0
    %3928 = vmatprep.subr.mxu0 0.0
    %3929 = vmatpush2.msra.mxu0 0.0
    %3930 = vmatprep.subr.mxu0 0.0
    %3931 = vmatpush2.msra.mxu0 0.0
    %3932 = vmatprep.subr.mxu0 0.0
    %3933 = vmatpush2.msra.mxu0 0.0
    %3934 = vmatprep.subr.mxu0 0.0
    %3935 = vmatpush2.msra.mxu0 0.0
    %3936 = vmatprep.subr.mxu0 0.0
    %3937 = vmatpush2.msra.mxu0 0.0
    %3938 = vmatprep.subr.mxu0 0.0
    %3939 = vmatpush2.msra.mxu0 0.0
    %3940 = vmatprep.subr.mxu0 0.0
    %3941 = vmatpush2.msra.mxu0 0.0
    %3942 = vmatprep.subr.mxu0 0.0
    %3943 = vmatpush2.msra.mxu0 0.0
    %3944 = vmatprep.subr.mxu0 0.0
    %3945 = vmatpush2.msra.mxu0 0.0
    %3946 = vmatprep.subr.mxu0 0.0
    %3947 = vmatpush2.msra.mxu0 0.0
    %3948 = vmatprep.subr.mxu0 0.0
    %3949 = vmatpush2.msra.mxu0 0.0
    %3950 = vmatprep.subr.mxu0 0.0
    %3951 = vmatpush2.msra.mxu0 0.0
    %3952 = vmatprep.subr.mxu0 0.0
    %3953 = vmatpush2.msra.mxu0 0.0
    %3954 = vmatprep.subr.mxu0 0.0
    %3955 = vmatpush2.msra.mxu0 0.0
    %3956 = vmatprep.mubr.f32.mxu0 0.0
    %3957 = vmatmul.mubr.f32.gmra.mxu0 %v3869
    %v3958 = vpop.f32.mrf.mxu0
    %v3959 = vadd.f32 %v3866, %v3958
    %v3960 = vpop.f32.mrf.mxu0
    %3961 = vmatprep.mubr.f32.mxu0 0.0
    %3962 = vmatmul.mubr.f32.gmra.mxu0 %v3872
    %v3963 = vpop.f32.mrf.mxu0
    %v3964 = vadd.f32 %v3866, %v3963
    %v3965 = vpop.f32.mrf.mxu0
    %3966 = vmatprep.mubr.f32.mxu0 0.0
    %3967 = vmatmul.mubr.f32.gmra.mxu0 %v3875
    %v3968 = vpop.f32.mrf.mxu0
    %v3969 = vadd.f32 %v3866, %v3968
    %v3970 = vpop.f32.mrf.mxu0
    %3971 = vmatprep.mubr.f32.mxu0 0.0
    %3972 = vmatmul.mubr.f32.gmra.mxu0 %v3878
    %v3973 = vpop.f32.mrf.mxu0
    %v3974 = vadd.f32 %v3866, %v3973
    %v3975 = vpop.f32.mrf.mxu0
    %3976 = vmatprep.mubr.f32.mxu0 0.0
    %3977 = vmatmul.mubr.f32.gmra.mxu0 %v3881
    %v3978 = vpop.f32.mrf.mxu0
    %v3979 = vadd.f32 %v3866, %v3978
    %v3980 = vpop.f32.mrf.mxu0
    %3981 = vmatprep.mubr.f32.mxu0 0.0
    %3982 = vmatmul.mubr.f32.gmra.mxu0 %v3884
    %v3983 = vpop.f32.mrf.mxu0
    %v3984 = vadd.f32 %v3866, %v3983
    %v3985 = vpop.f32.mrf.mxu0
    %3986 = vmatprep.mubr.f32.mxu0 0.0
    %3987 = vmatmul.mubr.f32.gmra.mxu0 %v3887
    %v3988 = vpop.f32.mrf.mxu0
    %v3989 = vadd.f32 %v3866, %v3988
    %v3990 = vpop.f32.mrf.mxu0
    %3991 = vmatprep.mubr.f32.mxu0 0.0
    %3992 = vmatmul.mubr.f32.gmra.mxu0 %v3890
    %v3993 = vpop.f32.mrf.mxu0
    %v3994 = vadd.f32 %v3866, %v3993
    %v3995 = vpop.f32.mrf.mxu0
    %3996 = vdwg.mxu0
    %3997 = vst [vmem:[%s9] sm:$0xff] %v3959
    %3998 = vst [vmem:[%s9 + $0x8] sm:$0xff] %v3964
    %3999 = vst [vmem:[%s9 + $0x10] sm:$0xff] %v3969
    %4000 = vst [vmem:[%s9 + $0x18] sm:$0xff] %v3974
    %4001 = vst [vmem:[%s9 + $0x20] sm:$0xff] %v3979
    %4002 = vst [vmem:[%s9 + $0x28] sm:$0xff] %v3984
    %4003 = vst [vmem:[%s9 + $0x30] sm:$0xff] %v3989
    %4004 = vst [vmem:[%s9 + $0x38] sm:$0xff] %v3994
    // Predicated region
    $region42: #{lstm_graves_forward.1} parent=1 // pred_check
      _
    $region43: #{lstm_graves_forward.1} parent=1 // pred_check_branch
      %4006 = sbr.rel (0) target = $region45
    $region44: #{lstm_graves_forward.1} parent=1 // pred_region
      _
    $region45: #{lstm_graves_forward.1} parent=1 // pred_fallthru
      _
    // Predicated region
    $region46: #{lstm_graves_forward.1} parent=1 // pred_check
      _
    $region47: #{lstm_graves_forward.1} parent=1 // pred_check_branch
      %4008 = sbr.rel (0) target = $region49
    $region48: #{lstm_graves_forward.1} parent=1 // pred_region
      _
    $region49: #{lstm_graves_forward.1} parent=1 // pred_fallthru
      _
    // Predicated region
    $region50: #{lstm_graves_forward.1} parent=1 // pred_check
      _
    $region51: #{lstm_graves_forward.1} parent=1 // pred_check_branch
      %4010 = sbr.rel (0) target = $region53
    $region52: #{lstm_graves_forward.1} parent=1 // pred_region
      _
    $region53: #{lstm_graves_forward.1} parent=1 // pred_fallthru
      _
    // Predicated region
    $region54: #{lstm_graves_forward.1} parent=1 // pred_check
      _
    $region55: #{lstm_graves_forward.1} parent=1 // pred_check_branch
      %4012 = sbr.rel (0) target = $region57
    $region56: #{lstm_graves_forward.1} parent=1 // pred_region
      _
    $region57: #{lstm_graves_forward.1} parent=1 // pred_fallthru
      _
    // Predicated region
    $region58: #{lstm_graves_forward.1} parent=1 // pred_check
      _
    $region59: #{lstm_graves_forward.1} parent=1 // pred_check_branch
      %4014 = sbr.rel (0) target = $region61
    $region60: #{lstm_graves_forward.1} parent=1 // pred_region
      _
    $region61: #{lstm_graves_forward.1} parent=1 // pred_fallthru
      _
    // Predicated region
    $region62: #{lstm_graves_forward.1} parent=1 // pred_check
      _
    $region63: #{lstm_graves_forward.1} parent=1 // pred_check_branch
      %4016 = sbr.rel (0) target = $region65
    $region64: #{lstm_graves_forward.1} parent=1 // pred_region
      _
    $region65: #{lstm_graves_forward.1} parent=1 // pred_fallthru
      _
    %4017 = vsyncpa [#allocation5], 1

</llo_original>
